<compile_context>
chip_gen: v5e
topology: v5e:2x2
jax: 0.10.0
libtpu: 0.0.40
codegen_flags: <defaults>
</compile_context>

<pallas_src>
import functools

import jax
import jax.numpy as jnp
import numpy as np
from jax import lax
from jax.experimental import pallas as pl
from jax.experimental.pallas import tpu as pltpu


_CONV_SPECS = [(3, 8), (8, 8), (8, 4), (4, 8), (8, 8), (8, 3)]


# ----------------------------------------------------------------------------
# In-kernel building blocks.
# Activations are 2-D f32 values of shape (B*h, lanes):
#   rows  = (image, h)                      -> major / sublane axes
#   lanes = (w-group, channel), ch minor    -> lane axis (dense)
# ----------------------------------------------------------------------------
def _shift_rows(x, s):
    """out[i] = x[i + s] along axis 0, zero fill at the ends (sublane-only op)."""
    if s == 0:
        return x
    pad = jnp.zeros((abs(s),) + x.shape[1:], x.dtype)
    if s > 0:
        return jnp.concatenate([x[s:], pad], axis=0)
    return jnp.concatenate([pad, x[:s]], axis=0)


def _conv3x3_rows(x, bands, bias_row, h_rows):
    """'same' 3x3 conv.

    x:        (B*h_rows, K) physical rows.
    bands:    (3, K, N)  -- per-kh lane-mixing matrices; the kw taps, w-border
              zero padding, pool stride and upsample duplication are already
              folded into them, so only the 3 kh taps remain and those are
              pure row (sublane) shifts.
    bias_row: (1, N).
    Returns (B*h_rows, N) f32.
    """
    rows = x.shape[0]
    row_idx = lax.broadcasted_iota(jnp.int32, (rows, 1), 0)
    h_idx = row_idx & (h_rows - 1)          # h within image (h_rows is a power of 2)
    acc = jnp.zeros((rows, bands.shape[-1]), jnp.float32)
    for kh in range(3):
        tap = _shift_rows(x, kh - 1)
        if kh == 0:                          # reads h-1: invalid at h == 0
            tap = jnp.where(h_idx >= 1, tap, 0.0)
        elif kh == 2:                        # reads h+1: invalid at h == h_rows-1
            tap = jnp.where(h_idx <= h_rows - 2, tap, 0.0)
        acc = acc + jnp.dot(tap, bands[kh], preferred_element_type=jnp.float32)
    return acc + bias_row


def _maxpool2x2(x, c):
    """2x2 / stride-2 max pool.  Rows (h) are pooled and compacted; lanes keep
    their width, with the pooled value left at the even channel-groups.  The
    following conv's band weights read the strided groups (odd groups are
    multiplied by zero), so no lane compaction is needed."""
    rows, lanes = x.shape
    x3 = x.reshape(rows // 2, 2, lanes)
    xh = jnp.maximum(x3[:, 0, :], x3[:, 1, :])                       # pool h
    shifted = jnp.concatenate(
        [xh[:, c:], jnp.zeros((rows // 2, c), x.dtype)], axis=1)
    return jnp.maximum(xh, shifted)                                  # pool w


def _upsample2x_rows(x):
    """Nearest 2x upsample of the row (h) axis only.  The w duplication is
    folded into the next conv's band weights, so lanes are left untouched."""
    rows, lanes = x.shape
    x = jnp.broadcast_to(x.reshape(rows, 1, lanes), (rows, 2, lanes))
    return x.reshape(2 * rows, lanes)


# ----------------------------------------------------------------------------
# Fused forward-pass kernel (one grid step == B_TILE images)
# ----------------------------------------------------------------------------
def _autoencoder_kernel(x_ref,
                        w1, b1, w2, b2, w3, b3, w4, b4, w5, b5, w6, b6,
                        o_ref, *, H):
    x = x_ref[...].astype(jnp.float32)               # (B*H,     W*3)
    # encoder
    y = _conv3x3_rows(x, w1[...], b1[...], H)        # (B*H,     W*8)
    y = _maxpool2x2(y, 8)                            # (B*H/2,   W*8)    stride-2 lanes
    y = _conv3x3_rows(y, w2[...], b2[...], H // 2)   # (B*H/2,  (W/2)*8)
    y = _maxpool2x2(y, 8)                            # (B*H/4,  (W/2)*8) stride-2 lanes
    y = _conv3x3_rows(y, w3[...], b3[...], H // 4)   # (B*H/4,  (W/4)*4)  encoded
    # decoder
    y = _conv3x3_rows(y, w4[...], b4[...], H // 4)   # (B*H/4,  (W/4)*8)
    y = _upsample2x_rows(y)                          # (B*H/2,  (W/4)*8)
    y = _conv3x3_rows(y, w5[...], b5[...], H // 2)   # (B*H/2,  (W/2)*8)
    y = _upsample2x_rows(y)                          # (B*H,    (W/2)*8)
    y = _conv3x3_rows(y, w6[...], b6[...], H)        # (B*H,     W*3)
    o_ref[...] = y.astype(o_ref.dtype)


# ----------------------------------------------------------------------------
# Wrapper-side weight preparation: fold kw taps / w borders / pool stride /
# upsample duplication of each 3x3 conv into 3 "band" matrices.
# ----------------------------------------------------------------------------
def _band_weights(w_hwio, bias, w_log, src_group, n_groups):
    """w_hwio: (3, 3, cin, cout) HWIO conv weight;  bias: (cout,).

    Returns:
      bands    (3, n_groups*cin, w_log*cout): bands[kh][g*cin+ci, w*cout+co]
               = sum over kw with 0 <= w+kw-1 < w_log and src_group[w+kw-1]==g
                 of w_hwio[kh, kw, ci, co]
      bias_row (1, w_log*cout)
    """
    cin, cout = w_hwio.shape[2], w_hwio.shape[3]
    T = np.zeros((3, n_groups, w_log), np.float32)
    for w_out in range(w_log):
        for kw in range(3):
            w_src = w_out + (kw - 1)
            if 0 <= w_src < w_log:
                T[kw, src_group[w_src], w_out] += 1.0
    bands = jnp.einsum("kgw,hkio->hgiwo", jnp.asarray(T), w_hwio)
    bands = bands.reshape(3, n_groups * cin, w_log * cout)
    bias_row = jnp.tile(bias, (w_log,)).reshape(1, w_log * cout)
    return bands, bias_row


def _flatten_params(params, W):
    compact = lambda wl: list(range(wl))             # compact input lanes
    strided = lambda wl: [2 * i for i in range(wl)]  # input left strided by a max pool
    duped = lambda wl: [i // 2 for i in range(wl)]   # input left un-duplicated by an upsample
    cfg = [
        # (logical conv width, src lane-group of each logical column, phys lane groups)
        (W,      compact(W),      W),        # conv1
        (W // 2, strided(W // 2), W),        # conv2 (after pool1)
        (W // 4, strided(W // 4), W // 2),   # conv3 (after pool2)
        (W // 4, compact(W // 4), W // 4),   # conv4
        (W // 2, duped(W // 2),   W // 4),   # conv5 (after upsample1)
        (W,      duped(W),        W // 2),   # conv6 (after upsample2)
    ]
    flat = []
    for (w, b), (wl, sg, ng) in zip(params, cfg):
        bands, brow = _band_weights(w, b, wl, sg, ng)
        flat += [bands, brow]
    return flat


# ----------------------------------------------------------------------------
# Parameters (deterministic, PyTorch-default-like uniform init, HWIO layout)
# ----------------------------------------------------------------------------
def init_params(key):
    params = []
    for cin, cout in _CONV_SPECS:
        key, kw_, kb_ = jax.random.split(key, 3)
        fan_in = cin * 3 * 3
        bound = 1.0 / (fan_in ** 0.5)
        w = jax.random.uniform(kw_, (3, 3, cin, cout), jnp.float32, -bound, bound)
        b = jax.random.uniform(kb_, (cout,), jnp.float32, -bound, bound)
        params.append((w, b))
    return params


# ----------------------------------------------------------------------------
# Public wrapper (NCHW in / NCHW out, matching the nn.Module)
# ----------------------------------------------------------------------------
def _pick_b_tile(n):
    # As many images per step as possible while keeping >= 2 grid steps when
    # n >= 2 (so "parallel" can split the grid across v7x's two TensorCores).
    for cand in (32, 16, 8, 4, 2, 1):
        if cand <= max(n // 2, 1) and n % cand == 0:
            return cand
    return 1


def autoencoder_forward(x_nchw, params, *, b_tile=None):
    N, C, H, W = x_nchw.shape
    assert C == 3 and H % 4 == 0 and W % 4 == 0
    assert H >= 8 and (H & (H - 1)) == 0, "H must be a power of two >= 8"
    if b_tile is None:
        b_tile = _pick_b_tile(N)
    assert N % b_tile == 0

    # Lane-dense I/O slabs: rows = (image, h), lanes = (w, channel).
    x_rows = jnp.transpose(x_nchw, (0, 2, 3, 1)).reshape(N * H, W * 3)
    flat = _flatten_params(params, W)

    def _const_map(ndim):
        return lambda n: (0,) * ndim

    in_specs = [pl.BlockSpec((b_tile * H, W * 3), lambda n: (n, 0))]
    in_specs += [pl.BlockSpec(p.shape, _const_map(p.ndim)) for p in flat]

    out = pl.pallas_call(
        functools.partial(_autoencoder_kernel, H=H),
        out_shape=jax.ShapeDtypeStruct((N * H, W * 3), jnp.float32),
        grid=(N // b_tile,),
        in_specs=in_specs,
        out_specs=pl.BlockSpec((b_tile * H, W * 3), lambda n: (n, 0)),
        compiler_params=pltpu.CompilerParams(
            dimension_semantics=("parallel",)),
    )(x_rows, *flat)

    return jnp.transpose(out.reshape(N, H, W, 3), (0, 3, 1, 2))


# ----------------------------------------------------------------------------
# Pure-JAX reference (correctness check against the Pallas kernel)
# ----------------------------------------------------------------------------
def _reference_forward(x_nchw, params):
    x = jnp.transpose(x_nchw, (0, 2, 3, 1))

    def conv(x, w, b):
        y = jax.lax.conv_general_dilated(
            x, w, window_strides=(1, 1), padding="SAME",
            dimension_numbers=("NHWC", "HWIO", "NHWC"),
            precision=jax.lax.Precision.HIGHEST)
        return y + b

    def pool(x):
        return jax.lax.reduce_window(x, -jnp.inf, jax.lax.max,
                                     (1, 2, 2, 1), (1, 2, 2, 1), "VALID")

    def up(x):
        return jnp.repeat(jnp.repeat(x, 2, axis=1), 2, axis=2)

    (w1, b1), (w2, b2), (w3, b3), (w4, b4), (w5, b5), (w6, b6) = params
    x = pool(conv(x, w1, b1))
    x = pool(conv(x, w2, b2))
    x = conv(x, w3, b3)
    x = conv(x, w4, b4)
    x = up(x)
    x = conv(x, w5, b5)
    x = up(x)
    x = conv(x, w6, b6)
    return jnp.transpose(x, (0, 3, 1, 2))


if __name__ == "__main__":
    key = jax.random.PRNGKey(0)
    key, kx = jax.random.split(key)
    x = jax.random.normal(kx, (8, 3, 16, 16), jnp.float32)   # NCHW, like PyTorch
    params = init_params(key)

    fwd = jax.jit(lambda x: autoencoder_forward(x, params))
    out = fwd(x)
    jax.block_until_ready(out)

    assert out.shape == (8, 3, 16, 16), out.shape
    assert out.dtype == jnp.float32
    assert bool(jnp.all(jnp.isfinite(out)))

    ref = _reference_forward(x, params)
    max_err = float(jnp.max(jnp.abs(out - ref)))
    assert bool(jnp.allclose(out, ref, rtol=1e-3, atol=1e-3)), max_err

    print("KERNEL_OK")
</pallas_src>

<mosaic_0001>
module attributes {stable_mosaic.version = 11 : i64} {
  func.func @_autoencoder_kernel(%arg0: i32, %arg1: memref<64x48xf32, #tpu.memory_space<vmem>>, %arg2: memref<3x48x128xf32, #tpu.memory_space<vmem>>, %arg3: memref<1x128xf32, #tpu.memory_space<vmem>>, %arg4: memref<3x128x64xf32, #tpu.memory_space<vmem>>, %arg5: memref<1x64xf32, #tpu.memory_space<vmem>>, %arg6: memref<3x64x16xf32, #tpu.memory_space<vmem>>, %arg7: memref<1x16xf32, #tpu.memory_space<vmem>>, %arg8: memref<3x16x32xf32, #tpu.memory_space<vmem>>, %arg9: memref<1x32xf32, #tpu.memory_space<vmem>>, %arg10: memref<3x32x64xf32, #tpu.memory_space<vmem>>, %arg11: memref<1x64xf32, #tpu.memory_space<vmem>>, %arg12: memref<3x64x48xf32, #tpu.memory_space<vmem>>, %arg13: memref<1x48xf32, #tpu.memory_space<vmem>>, %arg14: memref<64x48xf32, #tpu.memory_space<vmem>>) attributes {dimension_semantics = [#tpu.dimension_semantics<parallel>], iteration_bounds = array<i64: 2>, scalar_prefetch = 0 : i64, scratch_operands = 0 : i64, tpu.core_type = #tpu.core_type<tc>, window_params = [{transform_indices = @transform_0, window_bounds = array<i64: 64, 48>}, {pipeline_mode = #tpu.pipeline_mode<synchronous>, transform_indices = @transform_1, window_bounds = array<i64: 3, 48, 128>}, {pipeline_mode = #tpu.pipeline_mode<synchronous>, transform_indices = @transform_2, window_bounds = array<i64: 1, 128>}, {pipeline_mode = #tpu.pipeline_mode<synchronous>, transform_indices = @transform_3, window_bounds = array<i64: 3, 128, 64>}, {pipeline_mode = #tpu.pipeline_mode<synchronous>, transform_indices = @transform_4, window_bounds = array<i64: 1, 64>}, {pipeline_mode = #tpu.pipeline_mode<synchronous>, transform_indices = @transform_5, window_bounds = array<i64: 3, 64, 16>}, {pipeline_mode = #tpu.pipeline_mode<synchronous>, transform_indices = @transform_6, window_bounds = array<i64: 1, 16>}, {pipeline_mode = #tpu.pipeline_mode<synchronous>, transform_indices = @transform_7, window_bounds = array<i64: 3, 16, 32>}, {pipeline_mode = #tpu.pipeline_mode<synchronous>, transform_indices = @transform_8, window_bounds = array<i64: 1, 32>}, {pipeline_mode = #tpu.pipeline_mode<synchronous>, transform_indices = @transform_9, window_bounds = array<i64: 3, 32, 64>}, {pipeline_mode = #tpu.pipeline_mode<synchronous>, transform_indices = @transform_10, window_bounds = array<i64: 1, 64>}, {pipeline_mode = #tpu.pipeline_mode<synchronous>, transform_indices = @transform_11, window_bounds = array<i64: 3, 64, 48>}, {pipeline_mode = #tpu.pipeline_mode<synchronous>, transform_indices = @transform_12, window_bounds = array<i64: 1, 48>}, {transform_indices = @transform_13, window_bounds = array<i64: 64, 48>}]} {
    %c0 = arith.constant 0 : index
    %c0_0 = arith.constant 0 : index
    %0 = vector.load %arg1[%c0, %c0_0] : memref<64x48xf32, #tpu.memory_space<vmem>>, vector<64x48xf32>
    %c0_1 = arith.constant 0 : index
    %c0_2 = arith.constant 0 : index
    %c0_3 = arith.constant 0 : index
    %1 = vector.load %arg2[%c0_1, %c0_2, %c0_3] : memref<3x48x128xf32, #tpu.memory_space<vmem>>, vector<3x48x128xf32>
    %c0_4 = arith.constant 0 : index
    %c0_5 = arith.constant 0 : index
    %2 = vector.load %arg3[%c0_4, %c0_5] : memref<1x128xf32, #tpu.memory_space<vmem>>, vector<1x128xf32>
    %3 = tpu.iota {dimensions = array<i32: 0>} : vector<64x1xi32>
    %c15_i32 = arith.constant 15 : i32
    %4 = vector.broadcast %c15_i32 : i32 to vector<64x1xi32>
    %5 = arith.andi %3, %4 : vector<64x1xi32>
    %cst = arith.constant 0.000000e+00 : f32
    %6 = vector.broadcast %cst : f32 to vector<64x128xf32>
    %cst_6 = arith.constant 0.000000e+00 : f32
    %7 = vector.broadcast %cst_6 : f32 to vector<1x48xf32>
    %8 = vector.extract_strided_slice %0 {offsets = [0, 0], sizes = [63, 48], strides = [1, 1]} : vector<64x48xf32> to vector<63x48xf32>
    %9 = tpu.concatenate %7, %8 in 0 : vector<1x48xf32>, vector<63x48xf32> -> vector<64x48xf32>
    %c1_i32 = arith.constant 1 : i32
    %10 = vector.broadcast %c1_i32 : i32 to vector<64x1xi32>
    %11 = arith.cmpi sge, %5, %10 : vector<64x1xi32>
    %cst_7 = arith.constant 0.000000e+00 : f32
    %12 = vector.shape_cast %11 : vector<64x1xi1> to vector<64x1xi1>
    %13 = vector.broadcast %12 : vector<64x1xi1> to vector<64x48xi1>
    %14 = vector.broadcast %cst_7 : f32 to vector<64x48xf32>
    %15 = arith.select %13, %9, %14 : vector<64x48xi1>, vector<64x48xf32>
    %16 = vector.extract_strided_slice %1 {offsets = [0, 0, 0], sizes = [1, 48, 128], strides = [1, 1, 1]} : vector<3x48x128xf32> to vector<1x48x128xf32>
    %17 = vector.shape_cast %16 : vector<1x48x128xf32> to vector<48x128xf32>
    %cst_8 = arith.constant dense<0.000000e+00> : vector<64x128xf32>
    %18 = tpu.matmul %15, %17, %cst_8 {dimension_numbers = #tpu.dot_dimension_numbers<[1], [0], [0], [1], [0, 0, 1, 1], [], []>} : vector<64x48xf32>, vector<48x128xf32>, vector<64x128xf32> -> vector<64x128xf32>
    %19 = arith.addf %6, %18 : vector<64x128xf32>
    %20 = vector.extract_strided_slice %1 {offsets = [1, 0, 0], sizes = [1, 48, 128], strides = [1, 1, 1]} : vector<3x48x128xf32> to vector<1x48x128xf32>
    %21 = vector.shape_cast %20 : vector<1x48x128xf32> to vector<48x128xf32>
    %cst_9 = arith.constant dense<0.000000e+00> : vector<64x128xf32>
    %22 = tpu.matmul %0, %21, %cst_9 {dimension_numbers = #tpu.dot_dimension_numbers<[1], [0], [0], [1], [0, 0, 1, 1], [], []>} : vector<64x48xf32>, vector<48x128xf32>, vector<64x128xf32> -> vector<64x128xf32>
    %23 = arith.addf %19, %22 : vector<64x128xf32>
    %cst_10 = arith.constant 0.000000e+00 : f32
    %24 = vector.broadcast %cst_10 : f32 to vector<1x48xf32>
    %25 = vector.extract_strided_slice %0 {offsets = [1, 0], sizes = [63, 48], strides = [1, 1]} : vector<64x48xf32> to vector<63x48xf32>
    %26 = tpu.concatenate %25, %24 in 0 : vector<63x48xf32>, vector<1x48xf32> -> vector<64x48xf32>
    %c14_i32 = arith.constant 14 : i32
    %27 = vector.broadcast %c14_i32 : i32 to vector<64x1xi32>
    %28 = arith.cmpi sle, %5, %27 : vector<64x1xi32>
    %cst_11 = arith.constant 0.000000e+00 : f32
    %29 = vector.shape_cast %28 : vector<64x1xi1> to vector<64x1xi1>
    %30 = vector.broadcast %29 : vector<64x1xi1> to vector<64x48xi1>
    %31 = vector.broadcast %cst_11 : f32 to vector<64x48xf32>
    %32 = arith.select %30, %26, %31 : vector<64x48xi1>, vector<64x48xf32>
    %33 = vector.extract_strided_slice %1 {offsets = [2, 0, 0], sizes = [1, 48, 128], strides = [1, 1, 1]} : vector<3x48x128xf32> to vector<1x48x128xf32>
    %34 = vector.shape_cast %33 : vector<1x48x128xf32> to vector<48x128xf32>
    %cst_12 = arith.constant dense<0.000000e+00> : vector<64x128xf32>
    %35 = tpu.matmul %32, %34, %cst_12 {dimension_numbers = #tpu.dot_dimension_numbers<[1], [0], [0], [1], [0, 0, 1, 1], [], []>} : vector<64x48xf32>, vector<48x128xf32>, vector<64x128xf32> -> vector<64x128xf32>
    %36 = arith.addf %23, %35 : vector<64x128xf32>
    %37 = vector.broadcast %2 : vector<1x128xf32> to vector<64x128xf32>
    %38 = arith.addf %36, %37 : vector<64x128xf32>
    %39 = vector.shape_cast %38 : vector<64x128xf32> to vector<32x2x128xf32>
    %40 = vector.extract_strided_slice %39 {offsets = [0, 0, 0], sizes = [32, 1, 128], strides = [1, 1, 1]} : vector<32x2x128xf32> to vector<32x1x128xf32>
    %41 = vector.shape_cast %40 : vector<32x1x128xf32> to vector<32x128xf32>
    %42 = vector.extract_strided_slice %39 {offsets = [0, 1, 0], sizes = [32, 1, 128], strides = [1, 1, 1]} : vector<32x2x128xf32> to vector<32x1x128xf32>
    %43 = vector.shape_cast %42 : vector<32x1x128xf32> to vector<32x128xf32>
    %44 = arith.maximumf %41, %43 : vector<32x128xf32>
    %45 = vector.extract_strided_slice %44 {offsets = [0, 8], sizes = [32, 120], strides = [1, 1]} : vector<32x128xf32> to vector<32x120xf32>
    %cst_13 = arith.constant 0.000000e+00 : f32
    %46 = vector.broadcast %cst_13 : f32 to vector<32x8xf32>
    %47 = tpu.concatenate %45, %46 in 1 : vector<32x120xf32>, vector<32x8xf32> -> vector<32x128xf32>
    %48 = arith.maximumf %44, %47 : vector<32x128xf32>
    %c0_14 = arith.constant 0 : index
    %c0_15 = arith.constant 0 : index
    %c0_16 = arith.constant 0 : index
    %49 = vector.load %arg4[%c0_14, %c0_15, %c0_16] : memref<3x128x64xf32, #tpu.memory_space<vmem>>, vector<3x128x64xf32>
    %c0_17 = arith.constant 0 : index
    %c0_18 = arith.constant 0 : index
    %50 = vector.load %arg5[%c0_17, %c0_18] : memref<1x64xf32, #tpu.memory_space<vmem>>, vector<1x64xf32>
    %51 = tpu.iota {dimensions = array<i32: 0>} : vector<32x1xi32>
    %c7_i32 = arith.constant 7 : i32
    %52 = vector.broadcast %c7_i32 : i32 to vector<32x1xi32>
    %53 = arith.andi %51, %52 : vector<32x1xi32>
    %cst_19 = arith.constant 0.000000e+00 : f32
    %54 = vector.broadcast %cst_19 : f32 to vector<32x64xf32>
    %cst_20 = arith.constant 0.000000e+00 : f32
    %55 = vector.broadcast %cst_20 : f32 to vector<1x128xf32>
    %56 = vector.extract_strided_slice %48 {offsets = [0, 0], sizes = [31, 128], strides = [1, 1]} : vector<32x128xf32> to vector<31x128xf32>
    %57 = tpu.concatenate %55, %56 in 0 : vector<1x128xf32>, vector<31x128xf32> -> vector<32x128xf32>
    %c1_i32_21 = arith.constant 1 : i32
    %58 = vector.broadcast %c1_i32_21 : i32 to vector<32x1xi32>
    %59 = arith.cmpi sge, %53, %58 : vector<32x1xi32>
    %cst_22 = arith.constant 0.000000e+00 : f32
    %60 = vector.shape_cast %59 : vector<32x1xi1> to vector<32x1xi1>
    %61 = vector.broadcast %60 : vector<32x1xi1> to vector<32x128xi1>
    %62 = vector.broadcast %cst_22 : f32 to vector<32x128xf32>
    %63 = arith.select %61, %57, %62 : vector<32x128xi1>, vector<32x128xf32>
    %64 = vector.extract_strided_slice %49 {offsets = [0, 0, 0], sizes = [1, 128, 64], strides = [1, 1, 1]} : vector<3x128x64xf32> to vector<1x128x64xf32>
    %65 = vector.shape_cast %64 : vector<1x128x64xf32> to vector<128x64xf32>
    %cst_23 = arith.constant dense<0.000000e+00> : vector<32x64xf32>
    %66 = tpu.matmul %63, %65, %cst_23 {dimension_numbers = #tpu.dot_dimension_numbers<[1], [0], [0], [1], [0, 0, 1, 1], [], []>} : vector<32x128xf32>, vector<128x64xf32>, vector<32x64xf32> -> vector<32x64xf32>
    %67 = arith.addf %54, %66 : vector<32x64xf32>
    %68 = vector.extract_strided_slice %49 {offsets = [1, 0, 0], sizes = [1, 128, 64], strides = [1, 1, 1]} : vector<3x128x64xf32> to vector<1x128x64xf32>
    %69 = vector.shape_cast %68 : vector<1x128x64xf32> to vector<128x64xf32>
    %cst_24 = arith.constant dense<0.000000e+00> : vector<32x64xf32>
    %70 = tpu.matmul %48, %69, %cst_24 {dimension_numbers = #tpu.dot_dimension_numbers<[1], [0], [0], [1], [0, 0, 1, 1], [], []>} : vector<32x128xf32>, vector<128x64xf32>, vector<32x64xf32> -> vector<32x64xf32>
    %71 = arith.addf %67, %70 : vector<32x64xf32>
    %cst_25 = arith.constant 0.000000e+00 : f32
    %72 = vector.broadcast %cst_25 : f32 to vector<1x128xf32>
    %73 = vector.extract_strided_slice %48 {offsets = [1, 0], sizes = [31, 128], strides = [1, 1]} : vector<32x128xf32> to vector<31x128xf32>
    %74 = tpu.concatenate %73, %72 in 0 : vector<31x128xf32>, vector<1x128xf32> -> vector<32x128xf32>
    %c6_i32 = arith.constant 6 : i32
    %75 = vector.broadcast %c6_i32 : i32 to vector<32x1xi32>
    %76 = arith.cmpi sle, %53, %75 : vector<32x1xi32>
    %cst_26 = arith.constant 0.000000e+00 : f32
    %77 = vector.shape_cast %76 : vector<32x1xi1> to vector<32x1xi1>
    %78 = vector.broadcast %77 : vector<32x1xi1> to vector<32x128xi1>
    %79 = vector.broadcast %cst_26 : f32 to vector<32x128xf32>
    %80 = arith.select %78, %74, %79 : vector<32x128xi1>, vector<32x128xf32>
    %81 = vector.extract_strided_slice %49 {offsets = [2, 0, 0], sizes = [1, 128, 64], strides = [1, 1, 1]} : vector<3x128x64xf32> to vector<1x128x64xf32>
    %82 = vector.shape_cast %81 : vector<1x128x64xf32> to vector<128x64xf32>
    %cst_27 = arith.constant dense<0.000000e+00> : vector<32x64xf32>
    %83 = tpu.matmul %80, %82, %cst_27 {dimension_numbers = #tpu.dot_dimension_numbers<[1], [0], [0], [1], [0, 0, 1, 1], [], []>} : vector<32x128xf32>, vector<128x64xf32>, vector<32x64xf32> -> vector<32x64xf32>
    %84 = arith.addf %71, %83 : vector<32x64xf32>
    %85 = vector.broadcast %50 : vector<1x64xf32> to vector<32x64xf32>
    %86 = arith.addf %84, %85 : vector<32x64xf32>
    %87 = vector.shape_cast %86 : vector<32x64xf32> to vector<16x2x64xf32>
    %88 = vector.extract_strided_slice %87 {offsets = [0, 0, 0], sizes = [16, 1, 64], strides = [1, 1, 1]} : vector<16x2x64xf32> to vector<16x1x64xf32>
    %89 = vector.shape_cast %88 : vector<16x1x64xf32> to vector<16x64xf32>
    %90 = vector.extract_strided_slice %87 {offsets = [0, 1, 0], sizes = [16, 1, 64], strides = [1, 1, 1]} : vector<16x2x64xf32> to vector<16x1x64xf32>
    %91 = vector.shape_cast %90 : vector<16x1x64xf32> to vector<16x64xf32>
    %92 = arith.maximumf %89, %91 : vector<16x64xf32>
    %93 = vector.extract_strided_slice %92 {offsets = [0, 8], sizes = [16, 56], strides = [1, 1]} : vector<16x64xf32> to vector<16x56xf32>
    %cst_28 = arith.constant 0.000000e+00 : f32
    %94 = vector.broadcast %cst_28 : f32 to vector<16x8xf32>
    %95 = tpu.concatenate %93, %94 in 1 : vector<16x56xf32>, vector<16x8xf32> -> vector<16x64xf32>
    %96 = arith.maximumf %92, %95 : vector<16x64xf32>
    %c0_29 = arith.constant 0 : index
    %c0_30 = arith.constant 0 : index
    %c0_31 = arith.constant 0 : index
    %97 = vector.load %arg6[%c0_29, %c0_30, %c0_31] : memref<3x64x16xf32, #tpu.memory_space<vmem>>, vector<3x64x16xf32>
    %c0_32 = arith.constant 0 : index
    %c0_33 = arith.constant 0 : index
    %98 = vector.load %arg7[%c0_32, %c0_33] : memref<1x16xf32, #tpu.memory_space<vmem>>, vector<1x16xf32>
    %99 = tpu.iota {dimensions = array<i32: 0>} : vector<16x1xi32>
    %c3_i32 = arith.constant 3 : i32
    %100 = vector.broadcast %c3_i32 : i32 to vector<16x1xi32>
    %101 = arith.andi %99, %100 : vector<16x1xi32>
    %cst_34 = arith.constant 0.000000e+00 : f32
    %102 = vector.broadcast %cst_34 : f32 to vector<16x16xf32>
    %cst_35 = arith.constant 0.000000e+00 : f32
    %103 = vector.broadcast %cst_35 : f32 to vector<1x64xf32>
    %104 = vector.extract_strided_slice %96 {offsets = [0, 0], sizes = [15, 64], strides = [1, 1]} : vector<16x64xf32> to vector<15x64xf32>
    %105 = tpu.concatenate %103, %104 in 0 : vector<1x64xf32>, vector<15x64xf32> -> vector<16x64xf32>
    %c1_i32_36 = arith.constant 1 : i32
    %106 = vector.broadcast %c1_i32_36 : i32 to vector<16x1xi32>
    %107 = arith.cmpi sge, %101, %106 : vector<16x1xi32>
    %cst_37 = arith.constant 0.000000e+00 : f32
    %108 = vector.shape_cast %107 : vector<16x1xi1> to vector<16x1xi1>
    %109 = vector.broadcast %108 : vector<16x1xi1> to vector<16x64xi1>
    %110 = vector.broadcast %cst_37 : f32 to vector<16x64xf32>
    %111 = arith.select %109, %105, %110 : vector<16x64xi1>, vector<16x64xf32>
    %112 = vector.extract_strided_slice %97 {offsets = [0, 0, 0], sizes = [1, 64, 16], strides = [1, 1, 1]} : vector<3x64x16xf32> to vector<1x64x16xf32>
    %113 = vector.shape_cast %112 : vector<1x64x16xf32> to vector<64x16xf32>
    %cst_38 = arith.constant dense<0.000000e+00> : vector<16x16xf32>
    %114 = tpu.matmul %111, %113, %cst_38 {dimension_numbers = #tpu.dot_dimension_numbers<[1], [0], [0], [1], [0, 0, 1, 1], [], []>} : vector<16x64xf32>, vector<64x16xf32>, vector<16x16xf32> -> vector<16x16xf32>
    %115 = arith.addf %102, %114 : vector<16x16xf32>
    %116 = vector.extract_strided_slice %97 {offsets = [1, 0, 0], sizes = [1, 64, 16], strides = [1, 1, 1]} : vector<3x64x16xf32> to vector<1x64x16xf32>
    %117 = vector.shape_cast %116 : vector<1x64x16xf32> to vector<64x16xf32>
    %cst_39 = arith.constant dense<0.000000e+00> : vector<16x16xf32>
    %118 = tpu.matmul %96, %117, %cst_39 {dimension_numbers = #tpu.dot_dimension_numbers<[1], [0], [0], [1], [0, 0, 1, 1], [], []>} : vector<16x64xf32>, vector<64x16xf32>, vector<16x16xf32> -> vector<16x16xf32>
    %119 = arith.addf %115, %118 : vector<16x16xf32>
    %cst_40 = arith.constant 0.000000e+00 : f32
    %120 = vector.broadcast %cst_40 : f32 to vector<1x64xf32>
    %121 = vector.extract_strided_slice %96 {offsets = [1, 0], sizes = [15, 64], strides = [1, 1]} : vector<16x64xf32> to vector<15x64xf32>
    %122 = tpu.concatenate %121, %120 in 0 : vector<15x64xf32>, vector<1x64xf32> -> vector<16x64xf32>
    %c2_i32 = arith.constant 2 : i32
    %123 = vector.broadcast %c2_i32 : i32 to vector<16x1xi32>
    %124 = arith.cmpi sle, %101, %123 : vector<16x1xi32>
    %cst_41 = arith.constant 0.000000e+00 : f32
    %125 = vector.shape_cast %124 : vector<16x1xi1> to vector<16x1xi1>
    %126 = vector.broadcast %125 : vector<16x1xi1> to vector<16x64xi1>
    %127 = vector.broadcast %cst_41 : f32 to vector<16x64xf32>
    %128 = arith.select %126, %122, %127 : vector<16x64xi1>, vector<16x64xf32>
    %129 = vector.extract_strided_slice %97 {offsets = [2, 0, 0], sizes = [1, 64, 16], strides = [1, 1, 1]} : vector<3x64x16xf32> to vector<1x64x16xf32>
    %130 = vector.shape_cast %129 : vector<1x64x16xf32> to vector<64x16xf32>
    %cst_42 = arith.constant dense<0.000000e+00> : vector<16x16xf32>
    %131 = tpu.matmul %128, %130, %cst_42 {dimension_numbers = #tpu.dot_dimension_numbers<[1], [0], [0], [1], [0, 0, 1, 1], [], []>} : vector<16x64xf32>, vector<64x16xf32>, vector<16x16xf32> -> vector<16x16xf32>
    %132 = arith.addf %119, %131 : vector<16x16xf32>
    %133 = vector.broadcast %98 : vector<1x16xf32> to vector<16x16xf32>
    %134 = arith.addf %132, %133 : vector<16x16xf32>
    %c0_43 = arith.constant 0 : index
    %c0_44 = arith.constant 0 : index
    %c0_45 = arith.constant 0 : index
    %135 = vector.load %arg8[%c0_43, %c0_44, %c0_45] : memref<3x16x32xf32, #tpu.memory_space<vmem>>, vector<3x16x32xf32>
    %c0_46 = arith.constant 0 : index
    %c0_47 = arith.constant 0 : index
    %136 = vector.load %arg9[%c0_46, %c0_47] : memref<1x32xf32, #tpu.memory_space<vmem>>, vector<1x32xf32>
    %137 = tpu.iota {dimensions = array<i32: 0>} : vector<16x1xi32>
    %c3_i32_48 = arith.constant 3 : i32
    %138 = vector.broadcast %c3_i32_48 : i32 to vector<16x1xi32>
    %139 = arith.andi %137, %138 : vector<16x1xi32>
    %cst_49 = arith.constant 0.000000e+00 : f32
    %140 = vector.broadcast %cst_49 : f32 to vector<16x32xf32>
    %cst_50 = arith.constant 0.000000e+00 : f32
    %141 = vector.broadcast %cst_50 : f32 to vector<1x16xf32>
    %142 = vector.extract_strided_slice %134 {offsets = [0, 0], sizes = [15, 16], strides = [1, 1]} : vector<16x16xf32> to vector<15x16xf32>
    %143 = tpu.concatenate %141, %142 in 0 : vector<1x16xf32>, vector<15x16xf32> -> vector<16x16xf32>
    %c1_i32_51 = arith.constant 1 : i32
    %144 = vector.broadcast %c1_i32_51 : i32 to vector<16x1xi32>
    %145 = arith.cmpi sge, %139, %144 : vector<16x1xi32>
    %cst_52 = arith.constant 0.000000e+00 : f32
    %146 = vector.shape_cast %145 : vector<16x1xi1> to vector<16x1xi1>
    %147 = vector.broadcast %146 : vector<16x1xi1> to vector<16x16xi1>
    %148 = vector.broadcast %cst_52 : f32 to vector<16x16xf32>
    %149 = arith.select %147, %143, %148 : vector<16x16xi1>, vector<16x16xf32>
    %150 = vector.extract_strided_slice %135 {offsets = [0, 0, 0], sizes = [1, 16, 32], strides = [1, 1, 1]} : vector<3x16x32xf32> to vector<1x16x32xf32>
    %151 = vector.shape_cast %150 : vector<1x16x32xf32> to vector<16x32xf32>
    %cst_53 = arith.constant dense<0.000000e+00> : vector<16x32xf32>
    %152 = tpu.matmul %149, %151, %cst_53 {dimension_numbers = #tpu.dot_dimension_numbers<[1], [0], [0], [1], [0, 0, 1, 1], [], []>} : vector<16x16xf32>, vector<16x32xf32>, vector<16x32xf32> -> vector<16x32xf32>
    %153 = arith.addf %140, %152 : vector<16x32xf32>
    %154 = vector.extract_strided_slice %135 {offsets = [1, 0, 0], sizes = [1, 16, 32], strides = [1, 1, 1]} : vector<3x16x32xf32> to vector<1x16x32xf32>
    %155 = vector.shape_cast %154 : vector<1x16x32xf32> to vector<16x32xf32>
    %cst_54 = arith.constant dense<0.000000e+00> : vector<16x32xf32>
    %156 = tpu.matmul %134, %155, %cst_54 {dimension_numbers = #tpu.dot_dimension_numbers<[1], [0], [0], [1], [0, 0, 1, 1], [], []>} : vector<16x16xf32>, vector<16x32xf32>, vector<16x32xf32> -> vector<16x32xf32>
    %157 = arith.addf %153, %156 : vector<16x32xf32>
    %cst_55 = arith.constant 0.000000e+00 : f32
    %158 = vector.broadcast %cst_55 : f32 to vector<1x16xf32>
    %159 = vector.extract_strided_slice %134 {offsets = [1, 0], sizes = [15, 16], strides = [1, 1]} : vector<16x16xf32> to vector<15x16xf32>
    %160 = tpu.concatenate %159, %158 in 0 : vector<15x16xf32>, vector<1x16xf32> -> vector<16x16xf32>
    %c2_i32_56 = arith.constant 2 : i32
    %161 = vector.broadcast %c2_i32_56 : i32 to vector<16x1xi32>
    %162 = arith.cmpi sle, %139, %161 : vector<16x1xi32>
    %cst_57 = arith.constant 0.000000e+00 : f32
    %163 = vector.shape_cast %162 : vector<16x1xi1> to vector<16x1xi1>
    %164 = vector.broadcast %163 : vector<16x1xi1> to vector<16x16xi1>
    %165 = vector.broadcast %cst_57 : f32 to vector<16x16xf32>
    %166 = arith.select %164, %160, %165 : vector<16x16xi1>, vector<16x16xf32>
    %167 = vector.extract_strided_slice %135 {offsets = [2, 0, 0], sizes = [1, 16, 32], strides = [1, 1, 1]} : vector<3x16x32xf32> to vector<1x16x32xf32>
    %168 = vector.shape_cast %167 : vector<1x16x32xf32> to vector<16x32xf32>
    %cst_58 = arith.constant dense<0.000000e+00> : vector<16x32xf32>
    %169 = tpu.matmul %166, %168, %cst_58 {dimension_numbers = #tpu.dot_dimension_numbers<[1], [0], [0], [1], [0, 0, 1, 1], [], []>} : vector<16x16xf32>, vector<16x32xf32>, vector<16x32xf32> -> vector<16x32xf32>
    %170 = arith.addf %157, %169 : vector<16x32xf32>
    %171 = vector.broadcast %136 : vector<1x32xf32> to vector<16x32xf32>
    %172 = arith.addf %170, %171 : vector<16x32xf32>
    %173 = vector.shape_cast %172 : vector<16x32xf32> to vector<16x1x32xf32>
    %174 = vector.shape_cast %173 : vector<16x1x32xf32> to vector<16x1x32xf32>
    %175 = vector.broadcast %174 : vector<16x1x32xf32> to vector<16x2x32xf32>
    %176 = vector.shape_cast %175 : vector<16x2x32xf32> to vector<32x32xf32>
    %c0_59 = arith.constant 0 : index
    %c0_60 = arith.constant 0 : index
    %c0_61 = arith.constant 0 : index
    %177 = vector.load %arg10[%c0_59, %c0_60, %c0_61] : memref<3x32x64xf32, #tpu.memory_space<vmem>>, vector<3x32x64xf32>
    %c0_62 = arith.constant 0 : index
    %c0_63 = arith.constant 0 : index
    %178 = vector.load %arg11[%c0_62, %c0_63] : memref<1x64xf32, #tpu.memory_space<vmem>>, vector<1x64xf32>
    %179 = tpu.iota {dimensions = array<i32: 0>} : vector<32x1xi32>
    %c7_i32_64 = arith.constant 7 : i32
    %180 = vector.broadcast %c7_i32_64 : i32 to vector<32x1xi32>
    %181 = arith.andi %179, %180 : vector<32x1xi32>
    %cst_65 = arith.constant 0.000000e+00 : f32
    %182 = vector.broadcast %cst_65 : f32 to vector<32x64xf32>
    %cst_66 = arith.constant 0.000000e+00 : f32
    %183 = vector.broadcast %cst_66 : f32 to vector<1x32xf32>
    %184 = vector.extract_strided_slice %176 {offsets = [0, 0], sizes = [31, 32], strides = [1, 1]} : vector<32x32xf32> to vector<31x32xf32>
    %185 = tpu.concatenate %183, %184 in 0 : vector<1x32xf32>, vector<31x32xf32> -> vector<32x32xf32>
    %c1_i32_67 = arith.constant 1 : i32
    %186 = vector.broadcast %c1_i32_67 : i32 to vector<32x1xi32>
    %187 = arith.cmpi sge, %181, %186 : vector<32x1xi32>
    %cst_68 = arith.constant 0.000000e+00 : f32
    %188 = vector.shape_cast %187 : vector<32x1xi1> to vector<32x1xi1>
    %189 = vector.broadcast %188 : vector<32x1xi1> to vector<32x32xi1>
    %190 = vector.broadcast %cst_68 : f32 to vector<32x32xf32>
    %191 = arith.select %189, %185, %190 : vector<32x32xi1>, vector<32x32xf32>
    %192 = vector.extract_strided_slice %177 {offsets = [0, 0, 0], sizes = [1, 32, 64], strides = [1, 1, 1]} : vector<3x32x64xf32> to vector<1x32x64xf32>
    %193 = vector.shape_cast %192 : vector<1x32x64xf32> to vector<32x64xf32>
    %cst_69 = arith.constant dense<0.000000e+00> : vector<32x64xf32>
    %194 = tpu.matmul %191, %193, %cst_69 {dimension_numbers = #tpu.dot_dimension_numbers<[1], [0], [0], [1], [0, 0, 1, 1], [], []>} : vector<32x32xf32>, vector<32x64xf32>, vector<32x64xf32> -> vector<32x64xf32>
    %195 = arith.addf %182, %194 : vector<32x64xf32>
    %196 = vector.extract_strided_slice %177 {offsets = [1, 0, 0], sizes = [1, 32, 64], strides = [1, 1, 1]} : vector<3x32x64xf32> to vector<1x32x64xf32>
    %197 = vector.shape_cast %196 : vector<1x32x64xf32> to vector<32x64xf32>
    %cst_70 = arith.constant dense<0.000000e+00> : vector<32x64xf32>
    %198 = tpu.matmul %176, %197, %cst_70 {dimension_numbers = #tpu.dot_dimension_numbers<[1], [0], [0], [1], [0, 0, 1, 1], [], []>} : vector<32x32xf32>, vector<32x64xf32>, vector<32x64xf32> -> vector<32x64xf32>
    %199 = arith.addf %195, %198 : vector<32x64xf32>
    %cst_71 = arith.constant 0.000000e+00 : f32
    %200 = vector.broadcast %cst_71 : f32 to vector<1x32xf32>
    %201 = vector.extract_strided_slice %176 {offsets = [1, 0], sizes = [31, 32], strides = [1, 1]} : vector<32x32xf32> to vector<31x32xf32>
    %202 = tpu.concatenate %201, %200 in 0 : vector<31x32xf32>, vector<1x32xf32> -> vector<32x32xf32>
    %c6_i32_72 = arith.constant 6 : i32
    %203 = vector.broadcast %c6_i32_72 : i32 to vector<32x1xi32>
    %204 = arith.cmpi sle, %181, %203 : vector<32x1xi32>
    %cst_73 = arith.constant 0.000000e+00 : f32
    %205 = vector.shape_cast %204 : vector<32x1xi1> to vector<32x1xi1>
    %206 = vector.broadcast %205 : vector<32x1xi1> to vector<32x32xi1>
    %207 = vector.broadcast %cst_73 : f32 to vector<32x32xf32>
    %208 = arith.select %206, %202, %207 : vector<32x32xi1>, vector<32x32xf32>
    %209 = vector.extract_strided_slice %177 {offsets = [2, 0, 0], sizes = [1, 32, 64], strides = [1, 1, 1]} : vector<3x32x64xf32> to vector<1x32x64xf32>
    %210 = vector.shape_cast %209 : vector<1x32x64xf32> to vector<32x64xf32>
    %cst_74 = arith.constant dense<0.000000e+00> : vector<32x64xf32>
    %211 = tpu.matmul %208, %210, %cst_74 {dimension_numbers = #tpu.dot_dimension_numbers<[1], [0], [0], [1], [0, 0, 1, 1], [], []>} : vector<32x32xf32>, vector<32x64xf32>, vector<32x64xf32> -> vector<32x64xf32>
    %212 = arith.addf %199, %211 : vector<32x64xf32>
    %213 = vector.broadcast %178 : vector<1x64xf32> to vector<32x64xf32>
    %214 = arith.addf %212, %213 : vector<32x64xf32>
    %215 = vector.shape_cast %214 : vector<32x64xf32> to vector<32x1x64xf32>
    %216 = vector.shape_cast %215 : vector<32x1x64xf32> to vector<32x1x64xf32>
    %217 = vector.broadcast %216 : vector<32x1x64xf32> to vector<32x2x64xf32>
    %218 = vector.shape_cast %217 : vector<32x2x64xf32> to vector<64x64xf32>
    %c0_75 = arith.constant 0 : index
    %c0_76 = arith.constant 0 : index
    %c0_77 = arith.constant 0 : index
    %219 = vector.load %arg12[%c0_75, %c0_76, %c0_77] : memref<3x64x48xf32, #tpu.memory_space<vmem>>, vector<3x64x48xf32>
    %c0_78 = arith.constant 0 : index
    %c0_79 = arith.constant 0 : index
    %220 = vector.load %arg13[%c0_78, %c0_79] : memref<1x48xf32, #tpu.memory_space<vmem>>, vector<1x48xf32>
    %221 = tpu.iota {dimensions = array<i32: 0>} : vector<64x1xi32>
    %c15_i32_80 = arith.constant 15 : i32
    %222 = vector.broadcast %c15_i32_80 : i32 to vector<64x1xi32>
    %223 = arith.andi %221, %222 : vector<64x1xi32>
    %cst_81 = arith.constant 0.000000e+00 : f32
    %224 = vector.broadcast %cst_81 : f32 to vector<64x48xf32>
    %cst_82 = arith.constant 0.000000e+00 : f32
    %225 = vector.broadcast %cst_82 : f32 to vector<1x64xf32>
    %226 = vector.extract_strided_slice %218 {offsets = [0, 0], sizes = [63, 64], strides = [1, 1]} : vector<64x64xf32> to vector<63x64xf32>
    %227 = tpu.concatenate %225, %226 in 0 : vector<1x64xf32>, vector<63x64xf32> -> vector<64x64xf32>
    %c1_i32_83 = arith.constant 1 : i32
    %228 = vector.broadcast %c1_i32_83 : i32 to vector<64x1xi32>
    %229 = arith.cmpi sge, %223, %228 : vector<64x1xi32>
    %cst_84 = arith.constant 0.000000e+00 : f32
    %230 = vector.shape_cast %229 : vector<64x1xi1> to vector<64x1xi1>
    %231 = vector.broadcast %230 : vector<64x1xi1> to vector<64x64xi1>
    %232 = vector.broadcast %cst_84 : f32 to vector<64x64xf32>
    %233 = arith.select %231, %227, %232 : vector<64x64xi1>, vector<64x64xf32>
    %234 = vector.extract_strided_slice %219 {offsets = [0, 0, 0], sizes = [1, 64, 48], strides = [1, 1, 1]} : vector<3x64x48xf32> to vector<1x64x48xf32>
    %235 = vector.shape_cast %234 : vector<1x64x48xf32> to vector<64x48xf32>
    %cst_85 = arith.constant dense<0.000000e+00> : vector<64x48xf32>
    %236 = tpu.matmul %233, %235, %cst_85 {dimension_numbers = #tpu.dot_dimension_numbers<[1], [0], [0], [1], [0, 0, 1, 1], [], []>} : vector<64x64xf32>, vector<64x48xf32>, vector<64x48xf32> -> vector<64x48xf32>
    %237 = arith.addf %224, %236 : vector<64x48xf32>
    %238 = vector.extract_strided_slice %219 {offsets = [1, 0, 0], sizes = [1, 64, 48], strides = [1, 1, 1]} : vector<3x64x48xf32> to vector<1x64x48xf32>
    %239 = vector.shape_cast %238 : vector<1x64x48xf32> to vector<64x48xf32>
    %cst_86 = arith.constant dense<0.000000e+00> : vector<64x48xf32>
    %240 = tpu.matmul %218, %239, %cst_86 {dimension_numbers = #tpu.dot_dimension_numbers<[1], [0], [0], [1], [0, 0, 1, 1], [], []>} : vector<64x64xf32>, vector<64x48xf32>, vector<64x48xf32> -> vector<64x48xf32>
    %241 = arith.addf %237, %240 : vector<64x48xf32>
    %cst_87 = arith.constant 0.000000e+00 : f32
    %242 = vector.broadcast %cst_87 : f32 to vector<1x64xf32>
    %243 = vector.extract_strided_slice %218 {offsets = [1, 0], sizes = [63, 64], strides = [1, 1]} : vector<64x64xf32> to vector<63x64xf32>
    %244 = tpu.concatenate %243, %242 in 0 : vector<63x64xf32>, vector<1x64xf32> -> vector<64x64xf32>
    %c14_i32_88 = arith.constant 14 : i32
    %245 = vector.broadcast %c14_i32_88 : i32 to vector<64x1xi32>
    %246 = arith.cmpi sle, %223, %245 : vector<64x1xi32>
    %cst_89 = arith.constant 0.000000e+00 : f32
    %247 = vector.shape_cast %246 : vector<64x1xi1> to vector<64x1xi1>
    %248 = vector.broadcast %247 : vector<64x1xi1> to vector<64x64xi1>
    %249 = vector.broadcast %cst_89 : f32 to vector<64x64xf32>
    %250 = arith.select %248, %244, %249 : vector<64x64xi1>, vector<64x64xf32>
    %251 = vector.extract_strided_slice %219 {offsets = [2, 0, 0], sizes = [1, 64, 48], strides = [1, 1, 1]} : vector<3x64x48xf32> to vector<1x64x48xf32>
    %252 = vector.shape_cast %251 : vector<1x64x48xf32> to vector<64x48xf32>
    %cst_90 = arith.constant dense<0.000000e+00> : vector<64x48xf32>
    %253 = tpu.matmul %250, %252, %cst_90 {dimension_numbers = #tpu.dot_dimension_numbers<[1], [0], [0], [1], [0, 0, 1, 1], [], []>} : vector<64x64xf32>, vector<64x48xf32>, vector<64x48xf32> -> vector<64x48xf32>
    %254 = arith.addf %241, %253 : vector<64x48xf32>
    %255 = vector.broadcast %220 : vector<1x48xf32> to vector<64x48xf32>
    %256 = arith.addf %254, %255 : vector<64x48xf32>
    %c0_91 = arith.constant 0 : index
    %c0_92 = arith.constant 0 : index
    %257 = vector.load %arg14[%c0_91, %c0_92] : memref<64x48xf32, #tpu.memory_space<vmem>>, vector<64x48xf32>
    tpu.vector_store %arg14[%c0_91, %c0_92], %256 {strides = array<i32>} : memref<64x48xf32, #tpu.memory_space<vmem>>, vector<64x48xf32>,
    return
  }
  func.func @transform_0(%arg0: i32) -> (i32, i32) {
    %c0_i32 = arith.constant 0 : i32
    %c0_i32_0 = arith.constant 0 : i32
    return %arg0, %c0_i32 : i32, i32
  }
  func.func @transform_1(%arg0: i32) -> (i32, i32, i32) {
    %c0_i32 = arith.constant 0 : i32
    %c0_i32_0 = arith.constant 0 : i32
    %c0_i32_1 = arith.constant 0 : i32
    %c0_i32_2 = arith.constant 0 : i32
    return %c0_i32, %c0_i32_0, %c0_i32_1 : i32, i32, i32
  }
  func.func @transform_2(%arg0: i32) -> (i32, i32) {
    %c0_i32 = arith.constant 0 : i32
    %c0_i32_0 = arith.constant 0 : i32
    %c0_i32_1 = arith.constant 0 : i32
    return %c0_i32, %c0_i32_0 : i32, i32
  }
  func.func @transform_3(%arg0: i32) -> (i32, i32, i32) {
    %c0_i32 = arith.constant 0 : i32
    %c0_i32_0 = arith.constant 0 : i32
    %c0_i32_1 = arith.constant 0 : i32
    %c0_i32_2 = arith.constant 0 : i32
    return %c0_i32, %c0_i32_0, %c0_i32_1 : i32, i32, i32
  }
  func.func @transform_4(%arg0: i32) -> (i32, i32) {
    %c0_i32 = arith.constant 0 : i32
    %c0_i32_0 = arith.constant 0 : i32
    %c0_i32_1 = arith.constant 0 : i32
    return %c0_i32, %c0_i32_0 : i32, i32
  }
  func.func @transform_5(%arg0: i32) -> (i32, i32, i32) {
    %c0_i32 = arith.constant 0 : i32
    %c0_i32_0 = arith.constant 0 : i32
    %c0_i32_1 = arith.constant 0 : i32
    %c0_i32_2 = arith.constant 0 : i32
    return %c0_i32, %c0_i32_0, %c0_i32_1 : i32, i32, i32
  }
  func.func @transform_6(%arg0: i32) -> (i32, i32) {
    %c0_i32 = arith.constant 0 : i32
    %c0_i32_0 = arith.constant 0 : i32
    %c0_i32_1 = arith.constant 0 : i32
    return %c0_i32, %c0_i32_0 : i32, i32
  }
  func.func @transform_7(%arg0: i32) -> (i32, i32, i32) {
    %c0_i32 = arith.constant 0 : i32
    %c0_i32_0 = arith.constant 0 : i32
    %c0_i32_1 = arith.constant 0 : i32
    %c0_i32_2 = arith.constant 0 : i32
    return %c0_i32, %c0_i32_0, %c0_i32_1 : i32, i32, i32
  }
  func.func @transform_8(%arg0: i32) -> (i32, i32) {
    %c0_i32 = arith.constant 0 : i32
    %c0_i32_0 = arith.constant 0 : i32
    %c0_i32_1 = arith.constant 0 : i32
    return %c0_i32, %c0_i32_0 : i32, i32
  }
  func.func @transform_9(%arg0: i32) -> (i32, i32, i32) {
    %c0_i32 = arith.constant 0 : i32
    %c0_i32_0 = arith.constant 0 : i32
    %c0_i32_1 = arith.constant 0 : i32
    %c0_i32_2 = arith.constant 0 : i32
    return %c0_i32, %c0_i32_0, %c0_i32_1 : i32, i32, i32
  }
  func.func @transform_10(%arg0: i32) -> (i32, i32) {
    %c0_i32 = arith.constant 0 : i32
    %c0_i32_0 = arith.constant 0 : i32
    %c0_i32_1 = arith.constant 0 : i32
    return %c0_i32, %c0_i32_0 : i32, i32
  }
  func.func @transform_11(%arg0: i32) -> (i32, i32, i32) {
    %c0_i32 = arith.constant 0 : i32
    %c0_i32_0 = arith.constant 0 : i32
    %c0_i32_1 = arith.constant 0 : i32
    %c0_i32_2 = arith.constant 0 : i32
    return %c0_i32, %c0_i32_0, %c0_i32_1 : i32, i32, i32
  }
  func.func @transform_12(%arg0: i32) -> (i32, i32) {
    %c0_i32 = arith.constant 0 : i32
    %c0_i32_0 = arith.constant 0 : i32
    %c0_i32_1 = arith.constant 0 : i32
    return %c0_i32, %c0_i32_0 : i32, i32
  }
  func.func @transform_13(%arg0: i32) -> (i32, i32) {
    %c0_i32 = arith.constant 0 : i32
    %c0_i32_0 = arith.constant 0 : i32
    return %arg0, %c0_i32 : i32, i32
  }
}

</mosaic_0001>

<llo_original>
// kernel: tile.35
$region0: #{tile.35}
  %s0 = inlined_call_operand.vmem [shape: f32[4,4], index: 0, kind: input, shape index: {}]
  %s1 = inlined_call_operand.vmem [shape: f32[1,16], index: 1, kind: output, shape index: {}]
  $region1: #{tile.35} parent=0
    #allocation0 [shape = 'u8[4096]{0}', space=vmem, size = 0x1000, scoped, tag = 'scoped mem for output reshape']
    #allocation1 [shape = 'u8[4096]{0}', space=vmem, size = 0x1000, scoped, tag = 'scoped mem for input reshape']
    %s3 = ssub.s32 16, 1
    %v4 = vld [vmem:[%s0] sm:%s3]
    %5 = vst [vmem:[#allocation1] sm:%s3] %v4
    %v6 = vld [vmem:[#allocation1] sm:$0x1]
    %vm7 = vcmask 31744
    %8 = vst.msk [vmem:[#allocation0] sm:$0x1] %vm7, %v6
    %s9 = scalar_lea.vmem [#allocation1], 3
    %v10 = vld [vmem:[%s9] sm:$0x1]
    %11 = vrot.lane.b32.xlu0 %v10, 12
    %v12 = vpop.permute.xlu0 %11
    %vm13 = vcmask 130144
    %14 = vst.msk [vmem:[#allocation0] sm:$0x1] %vm13, %v12
    %s15 = scalar_lea.vmem [#allocation1], 2
    %v16 = vld [vmem:[%s15] sm:$0x1]
    %17 = vrot.lane.b32.xlu0 %v16, 8
    %v18 = vpop.permute.xlu0 %17
    %vm19 = vcmask 97344
    %20 = vst.msk [vmem:[#allocation0] sm:$0x1] %vm19, %v18
    %s21 = scalar_lea.vmem [#allocation1], 1
    %v22 = vld [vmem:[%s21] sm:$0x1]
    %23 = vrot.lane.b32.xlu0 %v22, 4
    %v24 = vpop.permute.xlu0 %23
    %vm25 = vcmask 64544
    %26 = vst.msk [vmem:[#allocation0] sm:$0x1] %vm25, %v24
    %s28 = ssub.s32 2, 1
    %v29 = vld [vmem:[#allocation0] sm:%s28]
    %s31 = ssub.s32 2, 1
    %32 = vst [vmem:[%s1] sm:%s31] %v29

// kernel: tile.39
$region0: #{tile.39}
  %s0 = inlined_call_operand.vmem [shape: f32[4,8], index: 0, kind: input, shape index: {}]
  %s1 = inlined_call_operand.vmem [shape: f32[1,32], index: 1, kind: output, shape index: {}]
  $region1: #{tile.39} parent=0
    #allocation0 [shape = 'u8[4096]{0}', space=vmem, size = 0x1000, scoped, tag = 'scoped mem for output reshape']
    #allocation1 [shape = 'u8[4096]{0}', space=vmem, size = 0x1000, scoped, tag = 'scoped mem for input reshape']
    %s3 = ssub.s32 16, 1
    %v4 = vld [vmem:[%s0] sm:%s3]
    %5 = vst [vmem:[#allocation1] sm:%s3] %v4
    %v6 = vld [vmem:[#allocation1] sm:$0x1]
    %vm7 = vcmask 64512
    %8 = vst.msk [vmem:[#allocation0] sm:$0x1] %vm7, %v6
    %s9 = scalar_lea.vmem [#allocation1], 3
    %v10 = vld [vmem:[%s9] sm:$0x1]
    %11 = vrot.lane.b32.xlu0 %v10, 24
    %v12 = vpop.permute.xlu0 %11
    %vm13 = vcmask 261312
    %14 = vst.msk [vmem:[#allocation0] sm:$0x1] %vm13, %v12
    %s15 = scalar_lea.vmem [#allocation1], 2
    %v16 = vld [vmem:[%s15] sm:$0x1]
    %17 = vrot.lane.b32.xlu0 %v16, 16
    %v18 = vpop.permute.xlu0 %17
    %vm19 = vcmask 195712
    %20 = vst.msk [vmem:[#allocation0] sm:$0x1] %vm19, %v18
    %s21 = scalar_lea.vmem [#allocation1], 1
    %v22 = vld [vmem:[%s21] sm:$0x1]
    %23 = vrot.lane.b32.xlu0 %v22, 8
    %v24 = vpop.permute.xlu0 %23
    %vm25 = vcmask 130112
    %26 = vst.msk [vmem:[#allocation0] sm:$0x1] %vm25, %v24
    %s28 = ssub.s32 2, 1
    %v29 = vld [vmem:[#allocation0] sm:%s28]
    %s31 = ssub.s32 2, 1
    %32 = vst [vmem:[%s1] sm:%s31] %v29

// kernel: tile.34
$region0: #{tile.34}
  #allocation0 [shape = 's32[1]{0}', space=sflag, size = 0x4, scoped, tag = 'scoped memory for tile.34']
  %s0 = inlined_call_operand.vmem [shape: f32[4], index: 0, kind: input, shape index: {}]
  %s1 = inlined_call_operand.vmem [shape: f32[4,4], index: 1, kind: output, shape index: {}]
  // Predicated region
  $region2: #{tile.34} parent=0 // pred_check
    _
  $region3: #{tile.34} parent=0 // pred_check_branch
    %3 = sbr.rel (0) target = $region5
  $region4: #{tile.34} parent=0 // pred_region
    _
  $region5: #{tile.34} parent=0 // pred_fallthru
    _
  %v4 = vld [vmem:[%s0] ss:$0 sm:$0xff]
  %5 = vst [vmem:[%s1] sm:$0xf] %v4

// kernel: tile.38
$region0: #{tile.38}
  #allocation0 [shape = 's32[1]{0}', space=sflag, size = 0x4, scoped, tag = 'scoped memory for tile.38']
  %s0 = inlined_call_operand.vmem [shape: f32[8], index: 0, kind: input, shape index: {}]
  %s1 = inlined_call_operand.vmem [shape: f32[4,8], index: 1, kind: output, shape index: {}]
  // Predicated region
  $region2: #{tile.38} parent=0 // pred_check
    _
  $region3: #{tile.38} parent=0 // pred_check_branch
    %3 = sbr.rel (0) target = $region5
  $region4: #{tile.38} parent=0 // pred_region
    _
  $region5: #{tile.38} parent=0 // pred_fallthru
    _
  %v4 = vld [vmem:[%s0] ss:$0 sm:$0xff]
  %5 = vst [vmem:[%s1] sm:$0xf] %v4

// kernel: tile.30
$region0: #{tile.30}
  #allocation0 [shape = 's32[1]{0}', space=sflag, size = 0x4, scoped, tag = 'scoped memory for tile.30']
  %s0 = inlined_call_operand.vmem [shape: f32[8], index: 0, kind: input, shape index: {}]
  %s1 = inlined_call_operand.vmem [shape: f32[8,8], index: 1, kind: output, shape index: {}]
  // Predicated region
  $region2: #{tile.30} parent=0 // pred_check
    _
  $region3: #{tile.30} parent=0 // pred_check_branch
    %3 = sbr.rel (0) target = $region5
  $region4: #{tile.30} parent=0 // pred_region
    _
  $region5: #{tile.30} parent=0 // pred_fallthru
    _
  %v4 = vld [vmem:[%s0] ss:$0 sm:$0xff]
  %5 = vst [vmem:[%s1] sm:$0xff] %v4

// kernel: tile.31
$region0: #{tile.31}
  %s0 = inlined_call_operand.vmem [shape: f32[8,8], index: 0, kind: input, shape index: {}]
  %s1 = inlined_call_operand.vmem [shape: f32[1,64], index: 1, kind: output, shape index: {}]
  $region1: #{tile.31} parent=0
    #allocation0 [shape = 'u8[4096]{0}', space=vmem, size = 0x1000, scoped, tag = 'scoped mem for output reshape']
    %v2 = vld [vmem:[%s0] sm:$0x1]
    %vm3 = vcmask 64512
    %4 = vst.msk [vmem:[#allocation0] sm:$0x1] %vm3, %v2
    %s5 = scalar_lea.vmem %s0, 7
    %v6 = vld [vmem:[%s5] sm:$0x1]
    %7 = vrot.lane.b32.xlu0 %v6, 56
    %v8 = vpop.permute.xlu0 %7
    %vm9 = vcmask 523712
    %10 = vst.msk [vmem:[#allocation0] sm:$0x1] %vm9, %v8
    %s11 = scalar_lea.vmem %s0, 6
    %v12 = vld [vmem:[%s11] sm:$0x1]
    %13 = vrot.lane.b32.xlu0 %v12, 48
    %v14 = vpop.permute.xlu0 %13
    %vm15 = vcmask 458112
    %16 = vst.msk [vmem:[#allocation0] sm:$0x1] %vm15, %v14
    %s17 = scalar_lea.vmem %s0, 5
    %v18 = vld [vmem:[%s17] sm:$0x1]
    %19 = vrot.lane.b32.xlu0 %v18, 40
    %v20 = vpop.permute.xlu0 %19
    %vm21 = vcmask 392512
    %22 = vst.msk [vmem:[#allocation0] sm:$0x1] %vm21, %v20
    %s23 = scalar_lea.vmem %s0, 4
    %v24 = vld [vmem:[%s23] sm:$0x1]
    %25 = vrot.lane.b32.xlu0 %v24, 32
    %v26 = vpop.permute.xlu0 %25
    %vm27 = vcmask 326912
    %28 = vst.msk [vmem:[#allocation0] sm:$0x1] %vm27, %v26
    %s29 = scalar_lea.vmem %s0, 3
    %v30 = vld [vmem:[%s29] sm:$0x1]
    %31 = vrot.lane.b32.xlu0 %v30, 24
    %v32 = vpop.permute.xlu0 %31
    %vm33 = vcmask 261312
    %34 = vst.msk [vmem:[#allocation0] sm:$0x1] %vm33, %v32
    %s35 = scalar_lea.vmem %s0, 2
    %v36 = vld [vmem:[%s35] sm:$0x1]
    %37 = vrot.lane.b32.xlu0 %v36, 16
    %v38 = vpop.permute.xlu0 %37
    %vm39 = vcmask 195712
    %40 = vst.msk [vmem:[#allocation0] sm:$0x1] %vm39, %v38
    %s41 = scalar_lea.vmem %s0, 1
    %v42 = vld [vmem:[%s41] sm:$0x1]
    %43 = vrot.lane.b32.xlu0 %v42, 8
    %v44 = vpop.permute.xlu0 %43
    %vm45 = vcmask 130112
    %46 = vst.msk [vmem:[#allocation0] sm:$0x1] %vm45, %v44
    %s48 = ssub.s32 2, 1
    %v49 = vld [vmem:[#allocation0] sm:%s48]
    %s51 = ssub.s32 2, 1
    %52 = vst [vmem:[%s1] sm:%s51] %v49

// kernel: tile.26
$region0: #{tile.26}
  #allocation0 [shape = 's32[1]{0}', space=sflag, size = 0x4, scoped, tag = 'scoped memory for tile.26']
  %s0 = inlined_call_operand.vmem [shape: f32[8], index: 0, kind: input, shape index: {}]
  %s1 = inlined_call_operand.vmem [shape: f32[16,8], index: 1, kind: output, shape index: {}]
  // Predicated region
  $region2: #{tile.26} parent=0 // pred_check
    _
  $region3: #{tile.26} parent=0 // pred_check_branch
    %3 = sbr.rel (0) target = $region5
  $region4: #{tile.26} parent=0 // pred_region
    _
  $region5: #{tile.26} parent=0 // pred_fallthru
    _
  %v4 = vld [vmem:[%s0] ss:$0 sm:$0xff]
  %5 = vst [vmem:[%s1] sm:$0xff] %v4
  %s6 = scalar_lea.vmem %s1, 8
  %7 = vst [vmem:[%s6] sm:$0xff] %v4

// kernel: tile.27
$region0: #{tile.27}
  %s0 = inlined_call_operand.vmem [shape: f32[16,8], index: 0, kind: input, shape index: {}]
  %s1 = inlined_call_operand.vmem [shape: f32[1,128], index: 1, kind: output, shape index: {}]
  $region1: #{tile.27} parent=0
    #allocation0 [shape = 'u8[4096]{0}', space=vmem, size = 0x1000, scoped, tag = 'scoped mem for output reshape']
    %v2 = vld [vmem:[%s0] sm:$0x1]
    %vm3 = vcmask 64512
    %4 = vst.msk [vmem:[#allocation0] sm:$0x1] %vm3, %v2
    %s5 = scalar_lea.vmem %s0, 15
    %v6 = vld [vmem:[%s5] sm:$0x1]
    %7 = vrot.lane.b32.xlu0 %v6, 120
    %v8 = vpop.permute.xlu0 %7
    %vm9 = vcmask 1048512
    %10 = vst.msk [vmem:[#allocation0] sm:$0x1] %vm9, %v8
    %s11 = scalar_lea.vmem %s0, 14
    %v12 = vld [vmem:[%s11] sm:$0x1]
    %13 = vrot.lane.b32.xlu0 %v12, 112
    %v14 = vpop.permute.xlu0 %13
    %vm15 = vcmask 982912
    %16 = vst.msk [vmem:[#allocation0] sm:$0x1] %vm15, %v14
    %s17 = scalar_lea.vmem %s0, 13
    %v18 = vld [vmem:[%s17] sm:$0x1]
    %19 = vrot.lane.b32.xlu0 %v18, 104
    %v20 = vpop.permute.xlu0 %19
    %vm21 = vcmask 917312
    %22 = vst.msk [vmem:[#allocation0] sm:$0x1] %vm21, %v20
    %s23 = scalar_lea.vmem %s0, 12
    %v24 = vld [vmem:[%s23] sm:$0x1]
    %25 = vrot.lane.b32.xlu0 %v24, 96
    %v26 = vpop.permute.xlu0 %25
    %vm27 = vcmask 851712
    %28 = vst.msk [vmem:[#allocation0] sm:$0x1] %vm27, %v26
    %s29 = scalar_lea.vmem %s0, 11
    %v30 = vld [vmem:[%s29] sm:$0x1]
    %31 = vrot.lane.b32.xlu0 %v30, 88
    %v32 = vpop.permute.xlu0 %31
    %vm33 = vcmask 786112
    %34 = vst.msk [vmem:[#allocation0] sm:$0x1] %vm33, %v32
    %s35 = scalar_lea.vmem %s0, 10
    %v36 = vld [vmem:[%s35] sm:$0x1]
    %37 = vrot.lane.b32.xlu0 %v36, 80
    %v38 = vpop.permute.xlu0 %37
    %vm39 = vcmask 720512
    %40 = vst.msk [vmem:[#allocation0] sm:$0x1] %vm39, %v38
    %s41 = scalar_lea.vmem %s0, 9
    %v42 = vld [vmem:[%s41] sm:$0x1]
    %43 = vrot.lane.b32.xlu0 %v42, 72
    %v44 = vpop.permute.xlu0 %43
    %vm45 = vcmask 654912
    %46 = vst.msk [vmem:[#allocation0] sm:$0x1] %vm45, %v44
    %s47 = scalar_lea.vmem %s0, 8
    %v48 = vld [vmem:[%s47] sm:$0x1]
    %49 = vrot.lane.b32.xlu0 %v48, 64
    %v50 = vpop.permute.xlu0 %49
    %vm51 = vcmask 589312
    %52 = vst.msk [vmem:[#allocation0] sm:$0x1] %vm51, %v50
    %s53 = scalar_lea.vmem %s0, 7
    %v54 = vld [vmem:[%s53] sm:$0x1]
    %55 = vrot.lane.b32.xlu0 %v54, 56
    %v56 = vpop.permute.xlu0 %55
    %vm57 = vcmask 523712
    %58 = vst.msk [vmem:[#allocation0] sm:$0x1] %vm57, %v56
    %s59 = scalar_lea.vmem %s0, 6
    %v60 = vld [vmem:[%s59] sm:$0x1]
    %61 = vrot.lane.b32.xlu0 %v60, 48
    %v62 = vpop.permute.xlu0 %61
    %vm63 = vcmask 458112
    %64 = vst.msk [vmem:[#allocation0] sm:$0x1] %vm63, %v62
    %s65 = scalar_lea.vmem %s0, 5
    %v66 = vld [vmem:[%s65] sm:$0x1]
    %67 = vrot.lane.b32.xlu0 %v66, 40
    %v68 = vpop.permute.xlu0 %67
    %vm69 = vcmask 392512
    %70 = vst.msk [vmem:[#allocation0] sm:$0x1] %vm69, %v68
    %s71 = scalar_lea.vmem %s0, 4
    %v72 = vld [vmem:[%s71] sm:$0x1]
    %73 = vrot.lane.b32.xlu0 %v72, 32
    %v74 = vpop.permute.xlu0 %73
    %vm75 = vcmask 326912
    %76 = vst.msk [vmem:[#allocation0] sm:$0x1] %vm75, %v74
    %s77 = scalar_lea.vmem %s0, 3
    %v78 = vld [vmem:[%s77] sm:$0x1]
    %79 = vrot.lane.b32.xlu0 %v78, 24
    %v80 = vpop.permute.xlu0 %79
    %vm81 = vcmask 261312
    %82 = vst.msk [vmem:[#allocation0] sm:$0x1] %vm81, %v80
    %s83 = scalar_lea.vmem %s0, 2
    %v84 = vld [vmem:[%s83] sm:$0x1]
    %85 = vrot.lane.b32.xlu0 %v84, 16
    %v86 = vpop.permute.xlu0 %85
    %vm87 = vcmask 195712
    %88 = vst.msk [vmem:[#allocation0] sm:$0x1] %vm87, %v86
    %s89 = scalar_lea.vmem %s0, 1
    %v90 = vld [vmem:[%s89] sm:$0x1]
    %91 = vrot.lane.b32.xlu0 %v90, 8
    %v92 = vpop.permute.xlu0 %91
    %vm93 = vcmask 130112
    %94 = vst.msk [vmem:[#allocation0] sm:$0x1] %vm93, %v92
    %s96 = ssub.s32 2, 1
    %v97 = vld [vmem:[#allocation0] sm:%s96]
    %s99 = ssub.s32 2, 1
    %100 = vst [vmem:[%s1] sm:%s99] %v97

// kernel: tile.46
$region0: #{tile.46}
  #allocation0 [shape = 's32[1]{0}', space=sflag, size = 0x4, scoped, tag = 'scoped memory for tile.46']
  %s0 = inlined_call_operand.vmem [shape: f32[3], index: 0, kind: input, shape index: {}]
  %s1 = inlined_call_operand.vmem [shape: f32[16,3], index: 1, kind: output, shape index: {}]
  // Predicated region
  $region2: #{tile.46} parent=0 // pred_check
    _
  $region3: #{tile.46} parent=0 // pred_check_branch
    %3 = sbr.rel (0) target = $region5
  $region4: #{tile.46} parent=0 // pred_region
    _
  $region5: #{tile.46} parent=0 // pred_fallthru
    _
  %v4 = vld [vmem:[%s0] ss:$0 sm:$0xff]
  %5 = vst [vmem:[%s1] sm:$0xff] %v4
  %s6 = scalar_lea.vmem %s1, 8
  %7 = vst [vmem:[%s6] sm:$0xff] %v4

// kernel: tile.47
$region0: #{tile.47}
  %s0 = inlined_call_operand.vmem [shape: f32[16,3], index: 0, kind: input, shape index: {}]
  %s1 = inlined_call_operand.vmem [shape: f32[1,48], index: 1, kind: output, shape index: {}]
  $region1: #{tile.47} parent=0
    #allocation0 [shape = 'u8[4096]{0}', space=vmem, size = 0x1000, scoped, tag = 'scoped mem for output reshape']
    %v2 = vld [vmem:[%s0] sm:$0x1]
    %vm3 = vcmask 23552
    %4 = vst.msk [vmem:[#allocation0] sm:$0x1] %vm3, %v2
    %s5 = scalar_lea.vmem %s0, 15
    %v6 = vld [vmem:[%s5] sm:$0x1]
    %7 = vrot.lane.b32.xlu0 %v6, 45
    %v8 = vpop.permute.xlu0 %7
    %vm9 = vcmask 392552
    %10 = vst.msk [vmem:[#allocation0] sm:$0x1] %vm9, %v8
    %s11 = scalar_lea.vmem %s0, 14
    %v12 = vld [vmem:[%s11] sm:$0x1]
    %13 = vrot.lane.b32.xlu0 %v12, 42
    %v14 = vpop.permute.xlu0 %13
    %vm15 = vcmask 367952
    %16 = vst.msk [vmem:[#allocation0] sm:$0x1] %vm15, %v14
    %s17 = scalar_lea.vmem %s0, 13
    %v18 = vld [vmem:[%s17] sm:$0x1]
    %19 = vrot.lane.b32.xlu0 %v18, 39
    %v20 = vpop.permute.xlu0 %19
    %vm21 = vcmask 343352
    %22 = vst.msk [vmem:[#allocation0] sm:$0x1] %vm21, %v20
    %s23 = scalar_lea.vmem %s0, 12
    %v24 = vld [vmem:[%s23] sm:$0x1]
    %25 = vrot.lane.b32.xlu0 %v24, 36
    %v26 = vpop.permute.xlu0 %25
    %vm27 = vcmask 318752
    %28 = vst.msk [vmem:[#allocation0] sm:$0x1] %vm27, %v26
    %s29 = scalar_lea.vmem %s0, 11
    %v30 = vld [vmem:[%s29] sm:$0x1]
    %31 = vrot.lane.b32.xlu0 %v30, 33
    %v32 = vpop.permute.xlu0 %31
    %vm33 = vcmask 294152
    %34 = vst.msk [vmem:[#allocation0] sm:$0x1] %vm33, %v32
    %s35 = scalar_lea.vmem %s0, 10
    %v36 = vld [vmem:[%s35] sm:$0x1]
    %37 = vrot.lane.b32.xlu0 %v36, 30
    %v38 = vpop.permute.xlu0 %37
    %vm39 = vcmask 269552
    %40 = vst.msk [vmem:[#allocation0] sm:$0x1] %vm39, %v38
    %s41 = scalar_lea.vmem %s0, 9
    %v42 = vld [vmem:[%s41] sm:$0x1]
    %43 = vrot.lane.b32.xlu0 %v42, 27
    %v44 = vpop.permute.xlu0 %43
    %vm45 = vcmask 244952
    %46 = vst.msk [vmem:[#allocation0] sm:$0x1] %vm45, %v44
    %s47 = scalar_lea.vmem %s0, 8
    %v48 = vld [vmem:[%s47] sm:$0x1]
    %49 = vrot.lane.b32.xlu0 %v48, 24
    %v50 = vpop.permute.xlu0 %49
    %vm51 = vcmask 220352
    %52 = vst.msk [vmem:[#allocation0] sm:$0x1] %vm51, %v50
    %s53 = scalar_lea.vmem %s0, 7
    %v54 = vld [vmem:[%s53] sm:$0x1]
    %55 = vrot.lane.b32.xlu0 %v54, 21
    %v56 = vpop.permute.xlu0 %55
    %vm57 = vcmask 195752
    %58 = vst.msk [vmem:[#allocation0] sm:$0x1] %vm57, %v56
    %s59 = scalar_lea.vmem %s0, 6
    %v60 = vld [vmem:[%s59] sm:$0x1]
    %61 = vrot.lane.b32.xlu0 %v60, 18
    %v62 = vpop.permute.xlu0 %61
    %vm63 = vcmask 171152
    %64 = vst.msk [vmem:[#allocation0] sm:$0x1] %vm63, %v62
    %s65 = scalar_lea.vmem %s0, 5
    %v66 = vld [vmem:[%s65] sm:$0x1]
    %67 = vrot.lane.b32.xlu0 %v66, 15
    %v68 = vpop.permute.xlu0 %67
    %vm69 = vcmask 146552
    %70 = vst.msk [vmem:[#allocation0] sm:$0x1] %vm69, %v68
    %s71 = scalar_lea.vmem %s0, 4
    %v72 = vld [vmem:[%s71] sm:$0x1]
    %73 = vrot.lane.b32.xlu0 %v72, 12
    %v74 = vpop.permute.xlu0 %73
    %vm75 = vcmask 121952
    %76 = vst.msk [vmem:[#allocation0] sm:$0x1] %vm75, %v74
    %s77 = scalar_lea.vmem %s0, 3
    %v78 = vld [vmem:[%s77] sm:$0x1]
    %79 = vrot.lane.b32.xlu0 %v78, 9
    %v80 = vpop.permute.xlu0 %79
    %vm81 = vcmask 97352
    %82 = vst.msk [vmem:[#allocation0] sm:$0x1] %vm81, %v80
    %s83 = scalar_lea.vmem %s0, 2
    %v84 = vld [vmem:[%s83] sm:$0x1]
    %85 = vrot.lane.b32.xlu0 %v84, 6
    %v86 = vpop.permute.xlu0 %85
    %vm87 = vcmask 72752
    %88 = vst.msk [vmem:[#allocation0] sm:$0x1] %vm87, %v86
    %s89 = scalar_lea.vmem %s0, 1
    %v90 = vld [vmem:[%s89] sm:$0x1]
    %91 = vrot.lane.b32.xlu0 %v90, 3
    %v92 = vpop.permute.xlu0 %91
    %vm93 = vcmask 48152
    %94 = vst.msk [vmem:[#allocation0] sm:$0x1] %vm93, %v92
    %s96 = ssub.s32 2, 1
    %v97 = vld [vmem:[#allocation0] sm:%s96]
    %s99 = ssub.s32 2, 1
    %100 = vst [vmem:[%s1] sm:%s99] %v97

// kernel: _lambda_.1
$region0: #{_lambda_.1}
  #allocation0 [shape = 'u32[]', space=smem, size = 0x4, offset = 0x4, fixed_abs, tag = 'smem constant byte address 0x4 - core index']
  #allocation1 [shape = 'u32[72,128]{1,0:T(1,128)}', space=vmem, size = 0x9000, scoped, tag = 'internal scratch']
  %s0 = inlined_call_operand.vmem [shape: f32[128,48], index: 0, kind: input, shape index: {}]
  %s1 = inlined_call_operand.vmem [shape: f32[3,48,128], index: 1, kind: input, shape index: {}]
  %s2 = inlined_call_operand.vmem [shape: f32[1,128], index: 2, kind: input, shape index: {}]
  %s3 = inlined_call_operand.vmem [shape: f32[3,128,64], index: 3, kind: input, shape index: {}]
  %s4 = inlined_call_operand.vmem [shape: f32[1,64], index: 4, kind: input, shape index: {}]
  %s5 = inlined_call_operand.vmem [shape: f32[3,64,16], index: 5, kind: input, shape index: {}]
  %s6 = inlined_call_operand.vmem [shape: f32[1,16], index: 6, kind: input, shape index: {}]
  %s7 = inlined_call_operand.vmem [shape: f32[3,16,32], index: 7, kind: input, shape index: {}]
  %s8 = inlined_call_operand.vmem [shape: f32[1,32], index: 8, kind: input, shape index: {}]
  %s9 = inlined_call_operand.vmem [shape: f32[3,32,64], index: 9, kind: input, shape index: {}]
  %s10 = inlined_call_operand.vmem [shape: f32[1,64], index: 10, kind: input, shape index: {}]
  %s11 = inlined_call_operand.vmem [shape: f32[3,64,48], index: 11, kind: input, shape index: {}]
  %s12 = inlined_call_operand.vmem [shape: f32[1,48], index: 12, kind: input, shape index: {}]
  %s13 = inlined_call_operand.vmem [shape: f32[128,48], index: 13, kind: output, shape index: {}]
  %s14 = sld [smem:[#allocation0]]
  $region85: #{_lambda_.1} parent=0
    _
  %s16 = ssub.s32 1, %s14
  %s17 = scalar_select 0, %s16, %s14
  loop: start=0, step=1, limit=4
  $region2: #{_lambda_.1} parent=0 // loop_pre_header
    _
  $region3: #{_lambda_.1} parent=0 // loop_header
    %s19 = sphi 0, %s23
    %p20 = scmp.ge.s32.totalorder %s19, 4
    %s29 = sphi 0, %s31
    %s32 = sphi 0, %s29
    %s33 = sphi 0, %s32
    %s49 = sphi 0, %s33
    %s53 = sphi 0, %s53
    %s55 = sphi 0, %s53
    %s56 = sphi 0, %s55
    %s70 = sphi 0, %s56
    %s74 = sphi 0, %s74
    %s76 = sphi 0, %s74
    %s77 = sphi 0, %s76
    %s91 = sphi 0, %s77
    %s95 = sphi 0, %s95
    %s97 = sphi 0, %s95
    %s98 = sphi 0, %s97
    %s112 = sphi 0, %s98
    %s116 = sphi 0, %s116
    %s118 = sphi 0, %s116
    %s119 = sphi 0, %s118
    %s133 = sphi 0, %s119
    %s137 = sphi 0, %s137
    %s139 = sphi 0, %s137
    %s140 = sphi 0, %s139
    %s154 = sphi 0, %s140
    %s158 = sphi 0, %s158
    %s160 = sphi 0, %s158
    %s161 = sphi 0, %s160
    %s175 = sphi 0, %s161
    %s179 = sphi 0, %s179
    %s181 = sphi 0, %s179
    %s182 = sphi 0, %s181
    %s196 = sphi 0, %s182
    %s200 = sphi 0, %s200
    %s202 = sphi 0, %s200
    %s203 = sphi 0, %s202
    %s217 = sphi 0, %s203
    %s221 = sphi 0, %s221
    %s223 = sphi 0, %s221
    %s224 = sphi 0, %s223
    %s238 = sphi 0, %s224
    %s242 = sphi 0, %s242
    %s244 = sphi 0, %s242
    %s245 = sphi 0, %s244
    %s259 = sphi 0, %s245
    %s263 = sphi 0, %s263
    %s265 = sphi 0, %s263
    %s266 = sphi 0, %s265
    %s280 = sphi 0, %s266
    %s284 = sphi 0, %s284
    %s286 = sphi 0, %s284
    %s287 = sphi 0, %s286
    %s301 = sphi 0, %s287
    %s307 = sphi 0, %s309
    %s310 = sphi 0, %s307
    %s311 = sphi 0, %s310
    %s327 = sphi 0, %s311
  $region4: #{_lambda_.1} parent=0 // loop_header_branch
    %22 = sbr.rel (%p20) target = $region8
  $region5: #{_lambda_.1} parent=0 // loop_body
    %s24 = ssub.s32 %s19, 1
    %s25 = ssub.s32 %s19, 2
    %s26 = sadd.s32 %s19, 1
    %s27 = ssub.s32 %s19, %s26
    %p28 = scmp.eq.s32.totalorder %s27, 0
    %s30 = sadd.s32 %s29, 1
    %s31 = scalar_select %p28, %s29, %s30
    %p34 = pneg %p28
    %p35 = scmp.eq.s32.totalorder %s19, 1
    %p36 = por %p34, %p35
    %p37 = scmp.ne.s32.totalorder %s29, %s32
    %p38 = scmp.eq.s32.totalorder %s19, 0
    %p39 = por %p37, %p38
    %p40 = scmp.ne.s32.totalorder %s29, %s32
    %p41 = scmp.eq.s32.totalorder %s24, 1
    %p42 = por %p40, %p41
    %p43 = scmp.ne.s32.totalorder %s32, %s33
    %p44 = scmp.eq.s32.totalorder %s24, 0
    %p45 = por %p43, %p44
    %p46 = scmp.ne.s32.totalorder %s32, %s33
    %p47 = scmp.eq.s32.totalorder %s25, 1
    %p48 = por %p46, %p47
    %p50 = scmp.ne.s32.totalorder %s33, %s49
    %p51 = scmp.eq.s32.totalorder %s25, 0
    %p52 = por %p50, %p51
    %s54 = sadd.s32 %s53, 1
    %p57 = scmp.eq.s32.totalorder %s19, 1
    %p58 = scmp.ne.s32.totalorder %s53, %s55
    %p59 = scmp.eq.s32.totalorder %s19, 0
    %p60 = por %p58, %p59
    %p61 = scmp.ne.s32.totalorder %s53, %s55
    %p62 = scmp.eq.s32.totalorder %s24, 1
    %p63 = por %p61, %p62
    %p64 = scmp.ne.s32.totalorder %s55, %s56
    %p65 = scmp.eq.s32.totalorder %s24, 0
    %p66 = por %p64, %p65
    %p67 = scmp.ne.s32.totalorder %s55, %s56
    %p68 = scmp.eq.s32.totalorder %s25, 1
    %p69 = por %p67, %p68
    %p71 = scmp.ne.s32.totalorder %s56, %s70
    %p72 = scmp.eq.s32.totalorder %s25, 0
    %p73 = por %p71, %p72
    %s75 = sadd.s32 %s74, 1
    %p78 = scmp.eq.s32.totalorder %s19, 1
    %p79 = scmp.ne.s32.totalorder %s74, %s76
    %p80 = scmp.eq.s32.totalorder %s19, 0
    %p81 = por %p79, %p80
    %p82 = scmp.ne.s32.totalorder %s74, %s76
    %p83 = scmp.eq.s32.totalorder %s24, 1
    %p84 = por %p82, %p83
    %p85 = scmp.ne.s32.totalorder %s76, %s77
    %p86 = scmp.eq.s32.totalorder %s24, 0
    %p87 = por %p85, %p86
    %p88 = scmp.ne.s32.totalorder %s76, %s77
    %p89 = scmp.eq.s32.totalorder %s25, 1
    %p90 = por %p88, %p89
    %p92 = scmp.ne.s32.totalorder %s77, %s91
    %p93 = scmp.eq.s32.totalorder %s25, 0
    %p94 = por %p92, %p93
    %s96 = sadd.s32 %s95, 1
    %p99 = scmp.eq.s32.totalorder %s19, 1
    %p100 = scmp.ne.s32.totalorder %s95, %s97
    %p101 = scmp.eq.s32.totalorder %s19, 0
    %p102 = por %p100, %p101
    %p103 = scmp.ne.s32.totalorder %s95, %s97
    %p104 = scmp.eq.s32.totalorder %s24, 1
    %p105 = por %p103, %p104
    %p106 = scmp.ne.s32.totalorder %s97, %s98
    %p107 = scmp.eq.s32.totalorder %s24, 0
    %p108 = por %p106, %p107
    %p109 = scmp.ne.s32.totalorder %s97, %s98
    %p110 = scmp.eq.s32.totalorder %s25, 1
    %p111 = por %p109, %p110
    %p113 = scmp.ne.s32.totalorder %s98, %s112
    %p114 = scmp.eq.s32.totalorder %s25, 0
    %p115 = por %p113, %p114
    %s117 = sadd.s32 %s116, 1
    %p120 = scmp.eq.s32.totalorder %s19, 1
    %p121 = scmp.ne.s32.totalorder %s116, %s118
    %p122 = scmp.eq.s32.totalorder %s19, 0
    %p123 = por %p121, %p122
    %p124 = scmp.ne.s32.totalorder %s116, %s118
    %p125 = scmp.eq.s32.totalorder %s24, 1
    %p126 = por %p124, %p125
    %p127 = scmp.ne.s32.totalorder %s118, %s119
    %p128 = scmp.eq.s32.totalorder %s24, 0
    %p129 = por %p127, %p128
    %p130 = scmp.ne.s32.totalorder %s118, %s119
    %p131 = scmp.eq.s32.totalorder %s25, 1
    %p132 = por %p130, %p131
    %p134 = scmp.ne.s32.totalorder %s119, %s133
    %p135 = scmp.eq.s32.totalorder %s25, 0
    %p136 = por %p134, %p135
    %s138 = sadd.s32 %s137, 1
    %p141 = scmp.eq.s32.totalorder %s19, 1
    %p142 = scmp.ne.s32.totalorder %s137, %s139
    %p143 = scmp.eq.s32.totalorder %s19, 0
    %p144 = por %p142, %p143
    %p145 = scmp.ne.s32.totalorder %s137, %s139
    %p146 = scmp.eq.s32.totalorder %s24, 1
    %p147 = por %p145, %p146
    %p148 = scmp.ne.s32.totalorder %s139, %s140
    %p149 = scmp.eq.s32.totalorder %s24, 0
    %p150 = por %p148, %p149
    %p151 = scmp.ne.s32.totalorder %s139, %s140
    %p152 = scmp.eq.s32.totalorder %s25, 1
    %p153 = por %p151, %p152
    %p155 = scmp.ne.s32.totalorder %s140, %s154
    %p156 = scmp.eq.s32.totalorder %s25, 0
    %p157 = por %p155, %p156
    %s159 = sadd.s32 %s158, 1
    %p162 = scmp.eq.s32.totalorder %s19, 1
    %p163 = scmp.ne.s32.totalorder %s158, %s160
    %p164 = scmp.eq.s32.totalorder %s19, 0
    %p165 = por %p163, %p164
    %p166 = scmp.ne.s32.totalorder %s158, %s160
    %p167 = scmp.eq.s32.totalorder %s24, 1
    %p168 = por %p166, %p167
    %p169 = scmp.ne.s32.totalorder %s160, %s161
    %p170 = scmp.eq.s32.totalorder %s24, 0
    %p171 = por %p169, %p170
    %p172 = scmp.ne.s32.totalorder %s160, %s161
    %p173 = scmp.eq.s32.totalorder %s25, 1
    %p174 = por %p172, %p173
    %p176 = scmp.ne.s32.totalorder %s161, %s175
    %p177 = scmp.eq.s32.totalorder %s25, 0
    %p178 = por %p176, %p177
    %s180 = sadd.s32 %s179, 1
    %p183 = scmp.eq.s32.totalorder %s19, 1
    %p184 = scmp.ne.s32.totalorder %s179, %s181
    %p185 = scmp.eq.s32.totalorder %s19, 0
    %p186 = por %p184, %p185
    %p187 = scmp.ne.s32.totalorder %s179, %s181
    %p188 = scmp.eq.s32.totalorder %s24, 1
    %p189 = por %p187, %p188
    %p190 = scmp.ne.s32.totalorder %s181, %s182
    %p191 = scmp.eq.s32.totalorder %s24, 0
    %p192 = por %p190, %p191
    %p193 = scmp.ne.s32.totalorder %s181, %s182
    %p194 = scmp.eq.s32.totalorder %s25, 1
    %p195 = por %p193, %p194
    %p197 = scmp.ne.s32.totalorder %s182, %s196
    %p198 = scmp.eq.s32.totalorder %s25, 0
    %p199 = por %p197, %p198
    %s201 = sadd.s32 %s200, 1
    %p204 = scmp.eq.s32.totalorder %s19, 1
    %p205 = scmp.ne.s32.totalorder %s200, %s202
    %p206 = scmp.eq.s32.totalorder %s19, 0
    %p207 = por %p205, %p206
    %p208 = scmp.ne.s32.totalorder %s200, %s202
    %p209 = scmp.eq.s32.totalorder %s24, 1
    %p210 = por %p208, %p209
    %p211 = scmp.ne.s32.totalorder %s202, %s203
    %p212 = scmp.eq.s32.totalorder %s24, 0
    %p213 = por %p211, %p212
    %p214 = scmp.ne.s32.totalorder %s202, %s203
    %p215 = scmp.eq.s32.totalorder %s25, 1
    %p216 = por %p214, %p215
    %p218 = scmp.ne.s32.totalorder %s203, %s217
    %p219 = scmp.eq.s32.totalorder %s25, 0
    %p220 = por %p218, %p219
    %s222 = sadd.s32 %s221, 1
    %p225 = scmp.eq.s32.totalorder %s19, 1
    %p226 = scmp.ne.s32.totalorder %s221, %s223
    %p227 = scmp.eq.s32.totalorder %s19, 0
    %p228 = por %p226, %p227
    %p229 = scmp.ne.s32.totalorder %s221, %s223
    %p230 = scmp.eq.s32.totalorder %s24, 1
    %p231 = por %p229, %p230
    %p232 = scmp.ne.s32.totalorder %s223, %s224
    %p233 = scmp.eq.s32.totalorder %s24, 0
    %p234 = por %p232, %p233
    %p235 = scmp.ne.s32.totalorder %s223, %s224
    %p236 = scmp.eq.s32.totalorder %s25, 1
    %p237 = por %p235, %p236
    %p239 = scmp.ne.s32.totalorder %s224, %s238
    %p240 = scmp.eq.s32.totalorder %s25, 0
    %p241 = por %p239, %p240
    %s243 = sadd.s32 %s242, 1
    %p246 = scmp.eq.s32.totalorder %s19, 1
    %p247 = scmp.ne.s32.totalorder %s242, %s244
    %p248 = scmp.eq.s32.totalorder %s19, 0
    %p249 = por %p247, %p248
    %p250 = scmp.ne.s32.totalorder %s242, %s244
    %p251 = scmp.eq.s32.totalorder %s24, 1
    %p252 = por %p250, %p251
    %p253 = scmp.ne.s32.totalorder %s244, %s245
    %p254 = scmp.eq.s32.totalorder %s24, 0
    %p255 = por %p253, %p254
    %p256 = scmp.ne.s32.totalorder %s244, %s245
    %p257 = scmp.eq.s32.totalorder %s25, 1
    %p258 = por %p256, %p257
    %p260 = scmp.ne.s32.totalorder %s245, %s259
    %p261 = scmp.eq.s32.totalorder %s25, 0
    %p262 = por %p260, %p261
    %s264 = sadd.s32 %s263, 1
    %p267 = scmp.eq.s32.totalorder %s19, 1
    %p268 = scmp.ne.s32.totalorder %s263, %s265
    %p269 = scmp.eq.s32.totalorder %s19, 0
    %p270 = por %p268, %p269
    %p271 = scmp.ne.s32.totalorder %s263, %s265
    %p272 = scmp.eq.s32.totalorder %s24, 1
    %p273 = por %p271, %p272
    %p274 = scmp.ne.s32.totalorder %s265, %s266
    %p275 = scmp.eq.s32.totalorder %s24, 0
    %p276 = por %p274, %p275
    %p277 = scmp.ne.s32.totalorder %s265, %s266
    %p278 = scmp.eq.s32.totalorder %s25, 1
    %p279 = por %p277, %p278
    %p281 = scmp.ne.s32.totalorder %s266, %s280
    %p282 = scmp.eq.s32.totalorder %s25, 0
    %p283 = por %p281, %p282
    %s285 = sadd.s32 %s284, 1
    %p288 = scmp.eq.s32.totalorder %s19, 1
    %p289 = scmp.ne.s32.totalorder %s284, %s286
    %p290 = scmp.eq.s32.totalorder %s19, 0
    %p291 = por %p289, %p290
    %p292 = scmp.ne.s32.totalorder %s284, %s286
    %p293 = scmp.eq.s32.totalorder %s24, 1
    %p294 = por %p292, %p293
    %p295 = scmp.ne.s32.totalorder %s286, %s287
    %p296 = scmp.eq.s32.totalorder %s24, 0
    %p297 = por %p295, %p296
    %p298 = scmp.ne.s32.totalorder %s286, %s287
    %p299 = scmp.eq.s32.totalorder %s25, 1
    %p300 = por %p298, %p299
    %p302 = scmp.ne.s32.totalorder %s287, %s301
    %p303 = scmp.eq.s32.totalorder %s25, 0
    %p304 = por %p302, %p303
    %s305 = ssub.s32 %s19, %s26
    %p306 = scmp.eq.s32.totalorder %s305, 0
    %s308 = sadd.s32 %s307, 1
    %s309 = scalar_select %p306, %s307, %s308
    %p312 = pneg %p306
    %p313 = scmp.eq.s32.totalorder %s19, 1
    %p314 = por %p312, %p313
    %p315 = scmp.ne.s32.totalorder %s307, %s310
    %p316 = scmp.eq.s32.totalorder %s19, 0
    %p317 = por %p315, %p316
    %p318 = scmp.ne.s32.totalorder %s307, %s310
    %p319 = scmp.eq.s32.totalorder %s24, 1
    %p320 = por %p318, %p319
    %p321 = scmp.ne.s32.totalorder %s310, %s311
    %p322 = scmp.eq.s32.totalorder %s24, 0
    %p323 = por %p321, %p322
    %p324 = scmp.ne.s32.totalorder %s310, %s311
    %p325 = scmp.eq.s32.totalorder %s25, 1
    %p326 = por %p324, %p325
    %p328 = scmp.ne.s32.totalorder %s311, %s327
    %p329 = scmp.eq.s32.totalorder %s25, 0
    %p330 = por %p328, %p329
    %p331 = scmp.le.s32.totalorder 1, %s19
    %p332 = scmp.lt.s32.totalorder %s19, 3
    %p333 = pnand %p331, %p332
    %p334 = pneg %p333
    // Predicated region
    $region9: #{_lambda_.1} parent=5 // pred_check
      _
    $region10: #{_lambda_.1} parent=5 // pred_check_branch
      %336 = sbr.rel (%p333) target = $region12
    $region11: #{_lambda_.1} parent=5 // pred_region
      %s337 = ssub.s32 %s19, 1
      // Predicated region
      $region13: #{_lambda_.1} parent=11 // pred_check
        %p338 = pneg %p66
      $region14: #{_lambda_.1} parent=11 // pred_check_branch
        %340 = sbr.rel (%p338) target = $region16
      $region15: #{_lambda_.1} parent=11 // pred_region
        _
      $region16: #{_lambda_.1} parent=11 // pred_fallthru
        _
      // Predicated region
      $region17: #{_lambda_.1} parent=11 // pred_check
        %p341 = pneg %p87
      $region18: #{_lambda_.1} parent=11 // pred_check_branch
        %343 = sbr.rel (%p341) target = $region20
      $region19: #{_lambda_.1} parent=11 // pred_region
        _
      $region20: #{_lambda_.1} parent=11 // pred_fallthru
        _
      // Predicated region
      $region21: #{_lambda_.1} parent=11 // pred_check
        %p344 = pneg %p108
      $region22: #{_lambda_.1} parent=11 // pred_check_branch
        %346 = sbr.rel (%p344) target = $region24
      $region23: #{_lambda_.1} parent=11 // pred_region
        _
      $region24: #{_lambda_.1} parent=11 // pred_fallthru
        _
      // Predicated region
      $region25: #{_lambda_.1} parent=11 // pred_check
        %p347 = pneg %p129
      $region26: #{_lambda_.1} parent=11 // pred_check_branch
        %349 = sbr.rel (%p347) target = $region28
      $region27: #{_lambda_.1} parent=11 // pred_region
        _
      $region28: #{_lambda_.1} parent=11 // pred_fallthru
        _
      // Predicated region
      $region29: #{_lambda_.1} parent=11 // pred_check
        %p350 = pneg %p150
      $region30: #{_lambda_.1} parent=11 // pred_check_branch
        %352 = sbr.rel (%p350) target = $region32
      $region31: #{_lambda_.1} parent=11 // pred_region
        _
      $region32: #{_lambda_.1} parent=11 // pred_fallthru
        _
      // Predicated region
      $region33: #{_lambda_.1} parent=11 // pred_check
        %p353 = pneg %p171
      $region34: #{_lambda_.1} parent=11 // pred_check_branch
        %355 = sbr.rel (%p353) target = $region36
      $region35: #{_lambda_.1} parent=11 // pred_region
        _
      $region36: #{_lambda_.1} parent=11 // pred_fallthru
        _
      // Predicated region
      $region37: #{_lambda_.1} parent=11 // pred_check
        %p356 = pneg %p192
      $region38: #{_lambda_.1} parent=11 // pred_check_branch
        %358 = sbr.rel (%p356) target = $region40
      $region39: #{_lambda_.1} parent=11 // pred_region
        _
      $region40: #{_lambda_.1} parent=11 // pred_fallthru
        _
      // Predicated region
      $region41: #{_lambda_.1} parent=11 // pred_check
        %p359 = pneg %p213
      $region42: #{_lambda_.1} parent=11 // pred_check_branch
        %361 = sbr.rel (%p359) target = $region44
      $region43: #{_lambda_.1} parent=11 // pred_region
        _
      $region44: #{_lambda_.1} parent=11 // pred_fallthru
        _
      // Predicated region
      $region45: #{_lambda_.1} parent=11 // pred_check
        %p362 = pneg %p234
      $region46: #{_lambda_.1} parent=11 // pred_check_branch
        %364 = sbr.rel (%p362) target = $region48
      $region47: #{_lambda_.1} parent=11 // pred_region
        _
      $region48: #{_lambda_.1} parent=11 // pred_fallthru
        _
      // Predicated region
      $region49: #{_lambda_.1} parent=11 // pred_check
        %p365 = pneg %p255
      $region50: #{_lambda_.1} parent=11 // pred_check_branch
        %367 = sbr.rel (%p365) target = $region52
      $region51: #{_lambda_.1} parent=11 // pred_region
        _
      $region52: #{_lambda_.1} parent=11 // pred_fallthru
        _
      // Predicated region
      $region53: #{_lambda_.1} parent=11 // pred_check
        %p368 = pneg %p276
      $region54: #{_lambda_.1} parent=11 // pred_check_branch
        %370 = sbr.rel (%p368) target = $region56
      $region55: #{_lambda_.1} parent=11 // pred_region
        _
      $region56: #{_lambda_.1} parent=11 // pred_fallthru
        _
      // Predicated region
      $region57: #{_lambda_.1} parent=11 // pred_check
        %p371 = pneg %p297
      $region58: #{_lambda_.1} parent=11 // pred_check_branch
        %373 = sbr.rel (%p371) target = $region60
      $region59: #{_lambda_.1} parent=11 // pred_region
        _
      $region60: #{_lambda_.1} parent=11 // pred_fallthru
        _
    $region12: #{_lambda_.1} parent=5 // pred_fallthru
      _
    %p374 = scmp.lt.s32.totalorder %s19, 2
    // Predicated region
    $region61: #{_lambda_.1} parent=5 // pred_check
      %p375 = pneg %p374
    $region62: #{_lambda_.1} parent=5 // pred_check_branch
      %377 = sbr.rel (%p375) target = $region64
    $region63: #{_lambda_.1} parent=5 // pred_region
      // Predicated region
      $region65: #{_lambda_.1} parent=63 // pred_check
        %p378 = pneg %p39
      $region66: #{_lambda_.1} parent=63 // pred_check_branch
        %380 = sbr.rel (%p378) target = $region68
      $region67: #{_lambda_.1} parent=63 // pred_region
        %s381 = smul.u32 8, %s19
        %p382 = scmp.lt.s32.totalorder %s381, 15
        %s383 = scalar_select %p382, %s381, 15
        %s384 = smul.addr %s383, 8
        %s385 = scalar_lea.vmem %s0, %s384
        %s386 = smul.u32 8, %s19
      $region68: #{_lambda_.1} parent=63 // pred_fallthru
        _
    $region64: #{_lambda_.1} parent=5 // pred_fallthru
      _
    %p387 = scmp.le.s32.totalorder 1, %s19
    %p388 = scmp.lt.s32.totalorder %s19, 3
    %p389 = pnand %p387, %p388
    %p390 = pneg %p389
    // Predicated region
    $region69: #{_lambda_.1} parent=5 // pred_check
      _
    $region70: #{_lambda_.1} parent=5 // pred_check_branch
      %392 = sbr.rel (%p389) target = $region72
    $region71: #{_lambda_.1} parent=5 // pred_region
      %s393 = ssub.s32 %s19, 1
      %s394 = smul.u32 8, %s24
      %p395 = scmp.lt.s32.totalorder %s394, 15
      %s396 = scalar_select %p395, %s394, 15
      %s397 = smul.addr %s396, 8
      %s398 = scalar_lea.vmem %s0, %s397
      %p399 = pneg %p45
      %p400 = pneg %p42
      %p401 = pneg %p66
      %p402 = pneg %p63
      %p403 = pneg %p87
      %p404 = pneg %p84
      %p405 = pneg %p108
      %p406 = pneg %p105
      %p407 = pneg %p129
      %p408 = pneg %p126
      %p409 = pneg %p150
      %p410 = pneg %p147
      %p411 = pneg %p171
      %p412 = pneg %p168
      %p413 = pneg %p192
      %p414 = pneg %p189
      %p415 = pneg %p213
      %p416 = pneg %p210
      %p417 = pneg %p234
      %p418 = pneg %p231
      %p419 = pneg %p255
      %p420 = pneg %p252
      %p421 = pneg %p276
      %p422 = pneg %p273
      %p423 = pneg %p297
      %p424 = pneg %p294
      %p425 = pneg %p323
      %p426 = pneg %p320
      %s427 = smul.u32 8, %s24
      %p428 = scmp.lt.s32.totalorder %s427, 15
      %s429 = scalar_select %p428, %s427, 15
      %s430 = smul.addr %s429, 8
      %s431 = scalar_lea.vmem %s13, %s430
      %s432 = smul.u32 8, %s24
      %p433 = scmp.lt.s32.totalorder %s432, 15
      %s434 = scalar_select %p433, %s432, 15
      %s435 = smul.addr %s434, 8
      %s436 = scalar_lea.vmem %s0, %s435
      %s437 = smul.u32 8, %s24
      %s438 = smul.u32 8, %s24
      %p439 = scmp.lt.s32.totalorder %s438, 15
      %s440 = scalar_select %p439, %s438, 15
      %s441 = smul.addr %s440, 8
      %s442 = scalar_lea.vmem %s13, %s441
      %s443 = smul.u32 8, %s24
      %v444 = vld [vmem:[%s436] sm:$0xff]
      %v445 = vld [vmem:[%s436 + $0x8] sm:$0xff]
      %v446 = vld [vmem:[%s436 + $0x10] sm:$0xff]
      %v447 = vld [vmem:[%s436 + $0x18] sm:$0xff]
      %v448 = vld [vmem:[%s436 + $0x20] sm:$0xff]
      %v449 = vld [vmem:[%s436 + $0x28] sm:$0xff]
      %v450 = vld [vmem:[%s436 + $0x30] sm:$0xff]
      %v451 = vld [vmem:[%s436 + $0x38] sm:$0xff]
      %v452 = vld [vmem:[%s1] sm:$0xff]
      %v453 = vld [vmem:[%s1 + $0x8] sm:$0xff]
      %v454 = vld [vmem:[%s1 + $0x10] sm:$0xff]
      %v455 = vld [vmem:[%s1 + $0x18] sm:$0xff]
      %v456 = vld [vmem:[%s1 + $0x20] sm:$0xff]
      %v457 = vld [vmem:[%s1 + $0x28] sm:$0xff]
      %v458 = vld [vmem:[%s1 + $0x30] sm:$0xff]
      %v459 = vld [vmem:[%s1 + $0x38] sm:$0xff]
      %v460 = vld [vmem:[%s1 + $0x40] sm:$0xff]
      %v461 = vld [vmem:[%s1 + $0x48] sm:$0xff]
      %v462 = vld [vmem:[%s1 + $0x50] sm:$0xff]
      %v463 = vld [vmem:[%s1 + $0x58] sm:$0xff]
      %v464 = vld [vmem:[%s1 + $0x60] sm:$0xff]
      %v465 = vld [vmem:[%s1 + $0x68] sm:$0xff]
      %v466 = vld [vmem:[%s1 + $0x70] sm:$0xff]
      %v467 = vld [vmem:[%s1 + $0x78] sm:$0xff]
      %v468 = vld [vmem:[%s1 + $0x80] sm:$0xff]
      %v469 = vld [vmem:[%s1 + $0x88] sm:$0xff]
      %v470 = vld [vmem:[%s2] sm:$0x1]
      %v471 = vlaneseq
      %v472 = vshrl.u32 %v471, 7
      %v473 = vadd.s32 %v472, 8
      %v474 = vadd.s32 %v472, 16
      %v475 = vadd.s32 %v472, 24
      %v476 = vadd.s32 %v472, 32
      %v477 = vadd.s32 %v472, 40
      %v478 = vadd.s32 %v472, 48
      %v479 = vadd.s32 %v472, 56
      %v480 = vand.u32 %v472, 15
      %v481 = vand.u32 %v473, 15
      %v482 = vand.u32 %v474, 15
      %v483 = vand.u32 %v475, 15
      %v484 = vand.u32 %v476, 15
      %v485 = vand.u32 %v477, 15
      %v486 = vand.u32 %v478, 15
      %v487 = vand.u32 %v479, 15
      %vm496 = vcmask 1040384
      %v497 = vrot.slane %v444, 7
      %v498 = vrot.slane %v445, 7
      %v499 = vsel %vm496, %v497, %v498
      %v500 = vrot.slane %v446, 7
      %v501 = vsel %vm496, %v498, %v500
      %v502 = vrot.slane %v447, 7
      %v503 = vsel %vm496, %v500, %v502
      %v504 = vrot.slane %v448, 7
      %v505 = vsel %vm496, %v502, %v504
      %v506 = vrot.slane %v449, 7
      %v507 = vsel %vm496, %v504, %v506
      %v508 = vrot.slane %v450, 7
      %v509 = vsel %vm496, %v506, %v508
      %v510 = vrot.slane %v451, 7
      %v511 = vsel %vm496, %v508, %v510
      %v520 = vsel %vm496, 0.0, %v497
      %vm521 = vcmp.ge.s32.totalorder %v480, 1
      %vm522 = vcmp.ge.s32.totalorder %v481, 1
      %vm523 = vcmp.ge.s32.totalorder %v482, 1
      %vm524 = vcmp.ge.s32.totalorder %v483, 1
      %vm525 = vcmp.ge.s32.totalorder %v484, 1
      %vm526 = vcmp.ge.s32.totalorder %v485, 1
      %vm527 = vcmp.ge.s32.totalorder %v486, 1
      %vm528 = vcmp.ge.s32.totalorder %v487, 1
      %v529 = vsel %vm521, 1, 0
      %v530 = vsel %vm522, 1, 0
      %v531 = vsel %vm523, 1, 0
      %v532 = vsel %vm524, 1, 0
      %v533 = vsel %vm525, 1, 0
      %v534 = vsel %vm526, 1, 0
      %v535 = vsel %vm527, 1, 0
      %v536 = vsel %vm528, 1, 0
      %vm537 = vcmp.eq.s32.totalorder %v529, 1
      %vm538 = vcmp.eq.s32.totalorder %v530, 1
      %vm539 = vcmp.eq.s32.totalorder %v531, 1
      %vm540 = vcmp.eq.s32.totalorder %v532, 1
      %vm541 = vcmp.eq.s32.totalorder %v533, 1
      %vm542 = vcmp.eq.s32.totalorder %v534, 1
      %vm543 = vcmp.eq.s32.totalorder %v535, 1
      %vm544 = vcmp.eq.s32.totalorder %v536, 1
      %v545 = vsel %vm537, %v520, 0.0
      %v546 = vsel %vm538, %v499, 0.0
      %v547 = vsel %vm539, %v501, 0.0
      %v548 = vsel %vm540, %v503, 0.0
      %v549 = vsel %vm541, %v505, 0.0
      %v550 = vsel %vm542, %v507, 0.0
      %v551 = vsel %vm543, %v509, 0.0
      %v552 = vsel %vm544, %v511, 0.0
      %vm553 = vcmask 392192
      %v554 = vsel %vm553, %v444, 0
      %v556 = vsel %vm553, %v445, 0
      %v558 = vsel %vm553, %v446, 0
      %v560 = vsel %vm553, %v447, 0
      %v562 = vsel %vm553, %v448, 0
      %v564 = vsel %vm553, %v449, 0
      %v566 = vsel %vm553, %v450, 0
      %v568 = vsel %vm553, %v451, 0
      %570 = vmatpush.msra.mxu0 0.0
      %571 = vmatpush.msra.mxu0 0.0
      %572 = vmatpush.msra.mxu0 0.0
      %573 = vmatpush.msra.mxu0 0.0
      %574 = vmatpush.msra.mxu0 0.0
      %575 = vmatpush.msra.mxu0 0.0
      %576 = vmatpush.msra.mxu0 0.0
      %577 = vmatpush.msra.mxu0 0.0
      %578 = vmatpush.msra.mxu0 0.0
      %579 = vmatpush.msra.mxu0 0.0
      %580 = vmatpush.msra.mxu0 %v463
      %581 = vmatpush.msra.mxu0 %v462
      %582 = vmatpush.msra.mxu0 %v461
      %583 = vmatpush.msra.mxu0 %v460
      %584 = vmatpush.msra.mxu0 %v459
      %585 = vmatpush.msra.mxu0 %v458
      %586 = vmatmul.f32.gmra.mxu0 %v554
      %v587 = vpop.f32.mrf.mxu0
      %v588 = vadd.f32 0.0, %v587
      %589 = vmatmul.f32.gmra.mxu0 %v556
      %v590 = vpop.f32.mrf.mxu0
      %v591 = vadd.f32 0.0, %v590
      %592 = vmatmul.f32.gmra.mxu0 %v558
      %v593 = vpop.f32.mrf.mxu0
      %v594 = vadd.f32 0.0, %v593
      %595 = vmatmul.f32.gmra.mxu0 %v560
      %v596 = vpop.f32.mrf.mxu0
      %v597 = vadd.f32 0.0, %v596
      %598 = vmatmul.f32.gmra.mxu0 %v562
      %v599 = vpop.f32.mrf.mxu0
      %v600 = vadd.f32 0.0, %v599
      %601 = vmatmul.f32.gmra.mxu0 %v564
      %v602 = vpop.f32.mrf.mxu0
      %v603 = vadd.f32 0.0, %v602
      %604 = vmatmul.f32.gmra.mxu0 %v566
      %v605 = vpop.f32.mrf.mxu0
      %v606 = vadd.f32 0.0, %v605
      %607 = vmatmul.f32.gmra.mxu0 %v568
      %v608 = vpop.f32.mrf.mxu0
      %v609 = vadd.f32 0.0, %v608
      %610 = vdwg.mxu0
      %v612 = vsel %vm553, %v545, 0
      %v615 = vsel %vm553, %v546, 0
      %v618 = vsel %vm553, %v547, 0
      %v621 = vsel %vm553, %v548, 0
      %v624 = vsel %vm553, %v549, 0
      %v627 = vsel %vm553, %v550, 0
      %v630 = vsel %vm553, %v551, 0
      %v633 = vsel %vm553, %v552, 0
      %635 = vmatpush.msra.mxu0 0.0
      %636 = vmatpush.msra.mxu0 0.0
      %637 = vmatpush.msra.mxu0 0.0
      %638 = vmatpush.msra.mxu0 0.0
      %639 = vmatpush.msra.mxu0 0.0
      %640 = vmatpush.msra.mxu0 0.0
      %641 = vmatpush.msra.mxu0 0.0
      %642 = vmatpush.msra.mxu0 0.0
      %643 = vmatpush.msra.mxu0 0.0
      %644 = vmatpush.msra.mxu0 0.0
      %645 = vmatpush.msra.mxu0 %v457
      %646 = vmatpush.msra.mxu0 %v456
      %647 = vmatpush.msra.mxu0 %v455
      %648 = vmatpush.msra.mxu0 %v454
      %649 = vmatpush.msra.mxu0 %v453
      %650 = vmatpush.msra.mxu0 %v452
      %651 = vmatmul.f32.gmra.mxu0 %v612
      %v652 = vpop.f32.mrf.mxu0
      %v653 = vadd.f32 %v588, %v652
      %654 = vmatmul.f32.gmra.mxu0 %v615
      %v655 = vpop.f32.mrf.mxu0
      %v656 = vadd.f32 %v591, %v655
      %657 = vmatmul.f32.gmra.mxu0 %v618
      %v658 = vpop.f32.mrf.mxu0
      %v659 = vadd.f32 %v594, %v658
      %660 = vmatmul.f32.gmra.mxu0 %v621
      %v661 = vpop.f32.mrf.mxu0
      %v662 = vadd.f32 %v597, %v661
      %663 = vmatmul.f32.gmra.mxu0 %v624
      %v664 = vpop.f32.mrf.mxu0
      %v665 = vadd.f32 %v600, %v664
      %666 = vmatmul.f32.gmra.mxu0 %v627
      %v667 = vpop.f32.mrf.mxu0
      %v668 = vadd.f32 %v603, %v667
      %669 = vmatmul.f32.gmra.mxu0 %v630
      %v670 = vpop.f32.mrf.mxu0
      %v671 = vadd.f32 %v606, %v670
      %672 = vmatmul.f32.gmra.mxu0 %v633
      %v673 = vpop.f32.mrf.mxu0
      %v674 = vadd.f32 %v609, %v673
      %675 = vdwg.mxu0
      %vm676 = vcmask 1046528
      %v677 = vrot.slane %v444, 1
      %v678 = vrot.slane %v445, 1
      %v679 = vsel %vm676, %v677, %v678
      %v680 = vrot.slane %v446, 1
      %v681 = vsel %vm676, %v678, %v680
      %v682 = vrot.slane %v447, 1
      %v683 = vsel %vm676, %v680, %v682
      %v684 = vrot.slane %v448, 1
      %v685 = vsel %vm676, %v682, %v684
      %v686 = vrot.slane %v449, 1
      %v687 = vsel %vm676, %v684, %v686
      %v688 = vrot.slane %v450, 1
      %v689 = vsel %vm676, %v686, %v688
      %v690 = vrot.slane %v451, 1
      %v691 = vsel %vm676, %v688, %v690
      %v700 = vsel %vm676, %v690, 0.0
      %vm701 = vcmp.le.s32.totalorder %v480, 14
      %vm702 = vcmp.le.s32.totalorder %v481, 14
      %vm703 = vcmp.le.s32.totalorder %v482, 14
      %vm704 = vcmp.le.s32.totalorder %v483, 14
      %vm705 = vcmp.le.s32.totalorder %v484, 14
      %vm706 = vcmp.le.s32.totalorder %v485, 14
      %vm707 = vcmp.le.s32.totalorder %v486, 14
      %vm708 = vcmp.le.s32.totalorder %v487, 14
      %v709 = vsel %vm701, 1, 0
      %v710 = vsel %vm702, 1, 0
      %v711 = vsel %vm703, 1, 0
      %v712 = vsel %vm704, 1, 0
      %v713 = vsel %vm705, 1, 0
      %v714 = vsel %vm706, 1, 0
      %v715 = vsel %vm707, 1, 0
      %v716 = vsel %vm708, 1, 0
      %vm717 = vcmp.eq.s32.totalorder %v709, 1
      %vm718 = vcmp.eq.s32.totalorder %v710, 1
      %vm719 = vcmp.eq.s32.totalorder %v711, 1
      %vm720 = vcmp.eq.s32.totalorder %v712, 1
      %vm721 = vcmp.eq.s32.totalorder %v713, 1
      %vm722 = vcmp.eq.s32.totalorder %v714, 1
      %vm723 = vcmp.eq.s32.totalorder %v715, 1
      %vm724 = vcmp.eq.s32.totalorder %v716, 1
      %v725 = vsel %vm717, %v679, 0.0
      %v726 = vsel %vm718, %v681, 0.0
      %v727 = vsel %vm719, %v683, 0.0
      %v728 = vsel %vm720, %v685, 0.0
      %v729 = vsel %vm721, %v687, 0.0
      %v730 = vsel %vm722, %v689, 0.0
      %v731 = vsel %vm723, %v691, 0.0
      %v732 = vsel %vm724, %v700, 0.0
      %v734 = vsel %vm553, %v725, 0
      %v737 = vsel %vm553, %v726, 0
      %v740 = vsel %vm553, %v727, 0
      %v743 = vsel %vm553, %v728, 0
      %v746 = vsel %vm553, %v729, 0
      %v749 = vsel %vm553, %v730, 0
      %v752 = vsel %vm553, %v731, 0
      %v755 = vsel %vm553, %v732, 0
      %757 = vmatpush.msra.mxu0 0.0
      %758 = vmatpush.msra.mxu0 0.0
      %759 = vmatpush.msra.mxu0 0.0
      %760 = vmatpush.msra.mxu0 0.0
      %761 = vmatpush.msra.mxu0 0.0
      %762 = vmatpush.msra.mxu0 0.0
      %763 = vmatpush.msra.mxu0 0.0
      %764 = vmatpush.msra.mxu0 0.0
      %765 = vmatpush.msra.mxu0 0.0
      %766 = vmatpush.msra.mxu0 0.0
      %767 = vmatpush.msra.mxu0 %v469
      %768 = vmatpush.msra.mxu0 %v468
      %769 = vmatpush.msra.mxu0 %v467
      %770 = vmatpush.msra.mxu0 %v466
      %771 = vmatpush.msra.mxu0 %v465
      %772 = vmatpush.msra.mxu0 %v464
      %773 = vmatmul.f32.gmra.mxu0 %v734
      %v774 = vpop.f32.mrf.mxu0
      %v775 = vadd.f32 0.0, %v774
      %776 = vmatmul.f32.gmra.mxu0 %v737
      %v777 = vpop.f32.mrf.mxu0
      %v778 = vadd.f32 0.0, %v777
      %779 = vmatmul.f32.gmra.mxu0 %v740
      %v780 = vpop.f32.mrf.mxu0
      %v781 = vadd.f32 0.0, %v780
      %782 = vmatmul.f32.gmra.mxu0 %v743
      %v783 = vpop.f32.mrf.mxu0
      %v784 = vadd.f32 0.0, %v783
      %785 = vmatmul.f32.gmra.mxu0 %v746
      %v786 = vpop.f32.mrf.mxu0
      %v787 = vadd.f32 0.0, %v786
      %788 = vmatmul.f32.gmra.mxu0 %v749
      %v789 = vpop.f32.mrf.mxu0
      %v790 = vadd.f32 0.0, %v789
      %791 = vmatmul.f32.gmra.mxu0 %v752
      %v792 = vpop.f32.mrf.mxu0
      %v793 = vadd.f32 0.0, %v792
      %794 = vmatmul.f32.gmra.mxu0 %v755
      %v795 = vpop.f32.mrf.mxu0
      %v796 = vadd.f32 0.0, %v795
      %797 = vdwg.mxu0
      %v798 = vadd.f32 %v653, %v775
      %v799 = vadd.f32 %v656, %v778
      %v800 = vadd.f32 %v659, %v781
      %v801 = vadd.f32 %v662, %v784
      %v802 = vadd.f32 %v665, %v787
      %v803 = vadd.f32 %v668, %v790
      %v804 = vadd.f32 %v671, %v793
      %v805 = vadd.f32 %v674, %v796
      %v807 = vperm.slane %v470, 0
      %v809 = vadd.f32 %v798, %v807
      %v810 = vadd.f32 %v799, %v807
      %v811 = vadd.f32 %v800, %v807
      %v812 = vadd.f32 %v801, %v807
      %v813 = vadd.f32 %v802, %v807
      %v814 = vadd.f32 %v803, %v807
      %v815 = vadd.f32 %v804, %v807
      %v816 = vadd.f32 %v805, %v807
      %v825 = vrot.slane %v809, 2
      %v826 = vrot.slane %v809, 4
      %v827 = vrot.slane %v809, 6
      %v828 = vrot.slane %v810, 2
      %v829 = vrot.slane %v810, 4
      %v830 = vrot.slane %v810, 6
      %v831 = vrot.slane %v811, 2
      %v832 = vrot.slane %v811, 4
      %v833 = vrot.slane %v811, 6
      %v834 = vrot.slane %v812, 2
      %v835 = vrot.slane %v812, 4
      %v836 = vrot.slane %v812, 6
      %v837 = vrot.slane %v813, 2
      %v838 = vrot.slane %v813, 4
      %v839 = vrot.slane %v813, 6
      %v840 = vrot.slane %v814, 2
      %v841 = vrot.slane %v814, 4
      %v842 = vrot.slane %v814, 6
      %v843 = vrot.slane %v815, 2
      %v844 = vrot.slane %v815, 4
      %v845 = vrot.slane %v815, 6
      %v846 = vrot.slane %v816, 2
      %v847 = vrot.slane %v816, 4
      %v848 = vrot.slane %v816, 6
      %v873 = vrot.slane %v809, 7
      %v874 = vrot.slane %v873, 2
      %v875 = vrot.slane %v825, 7
      %v876 = vrot.slane %v875, 2
      %v877 = vrot.slane %v826, 7
      %v878 = vrot.slane %v877, 2
      %v879 = vrot.slane %v827, 7
      %v880 = vrot.slane %v879, 2
      %v881 = vrot.slane %v810, 7
      %v882 = vrot.slane %v881, 2
      %v883 = vrot.slane %v828, 7
      %v884 = vrot.slane %v883, 2
      %v885 = vrot.slane %v829, 7
      %v886 = vrot.slane %v885, 2
      %v887 = vrot.slane %v830, 7
      %v888 = vrot.slane %v887, 2
      %v889 = vrot.slane %v811, 7
      %v890 = vrot.slane %v889, 2
      %v891 = vrot.slane %v831, 7
      %v892 = vrot.slane %v891, 2
      %v893 = vrot.slane %v832, 7
      %v894 = vrot.slane %v893, 2
      %v895 = vrot.slane %v833, 7
      %v896 = vrot.slane %v895, 2
      %v897 = vrot.slane %v812, 7
      %v898 = vrot.slane %v897, 2
      %v899 = vrot.slane %v834, 7
      %v900 = vrot.slane %v899, 2
      %v901 = vrot.slane %v835, 7
      %v902 = vrot.slane %v901, 2
      %v903 = vrot.slane %v836, 7
      %v904 = vrot.slane %v903, 2
      %v905 = vrot.slane %v813, 7
      %v906 = vrot.slane %v905, 2
      %v907 = vrot.slane %v837, 7
      %v908 = vrot.slane %v907, 2
      %v909 = vrot.slane %v838, 7
      %v910 = vrot.slane %v909, 2
      %v911 = vrot.slane %v839, 7
      %v912 = vrot.slane %v911, 2
      %v913 = vrot.slane %v814, 7
      %v914 = vrot.slane %v913, 2
      %v915 = vrot.slane %v840, 7
      %v916 = vrot.slane %v915, 2
      %v917 = vrot.slane %v841, 7
      %v918 = vrot.slane %v917, 2
      %v919 = vrot.slane %v842, 7
      %v920 = vrot.slane %v919, 2
      %v921 = vrot.slane %v815, 7
      %v922 = vrot.slane %v921, 2
      %v923 = vrot.slane %v843, 7
      %v924 = vrot.slane %v923, 2
      %v925 = vrot.slane %v844, 7
      %v926 = vrot.slane %v925, 2
      %v927 = vrot.slane %v845, 7
      %v928 = vrot.slane %v927, 2
      %v929 = vrot.slane %v816, 7
      %v930 = vrot.slane %v929, 2
      %v931 = vrot.slane %v846, 7
      %v932 = vrot.slane %v931, 2
      %v933 = vrot.slane %v847, 7
      %v934 = vrot.slane %v933, 2
      %v935 = vrot.slane %v848, 7
      %v936 = vrot.slane %v935, 2
      %v969 = vmax.f32 %v809, %v874
      %v970 = vmax.f32 %v825, %v876
      %v971 = vmax.f32 %v826, %v878
      %v972 = vmax.f32 %v827, %v880
      %v973 = vmax.f32 %v810, %v882
      %v974 = vmax.f32 %v828, %v884
      %v975 = vmax.f32 %v829, %v886
      %v976 = vmax.f32 %v830, %v888
      %v977 = vmax.f32 %v811, %v890
      %v978 = vmax.f32 %v831, %v892
      %v979 = vmax.f32 %v832, %v894
      %v980 = vmax.f32 %v833, %v896
      %v981 = vmax.f32 %v812, %v898
      %v982 = vmax.f32 %v834, %v900
      %v983 = vmax.f32 %v835, %v902
      %v984 = vmax.f32 %v836, %v904
      %v985 = vmax.f32 %v813, %v906
      %v986 = vmax.f32 %v837, %v908
      %v987 = vmax.f32 %v838, %v910
      %v988 = vmax.f32 %v839, %v912
      %v989 = vmax.f32 %v814, %v914
      %v990 = vmax.f32 %v840, %v916
      %v991 = vmax.f32 %v841, %v918
      %v992 = vmax.f32 %v842, %v920
      %v993 = vmax.f32 %v815, %v922
      %v994 = vmax.f32 %v843, %v924
      %v995 = vmax.f32 %v844, %v926
      %v996 = vmax.f32 %v845, %v928
      %v997 = vmax.f32 %v816, %v930
      %v998 = vmax.f32 %v846, %v932
      %v999 = vmax.f32 %v847, %v934
      %v1000 = vmax.f32 %v848, %v936
      %v1033 = vperm.slane %v969, 0
      %v1034 = vperm.slane %v970, 0
      %v1035 = vperm.slane %v971, 0
      %v1036 = vperm.slane %v972, 0
      %v1037 = vperm.slane %v973, 0
      %v1038 = vperm.slane %v974, 0
      %v1039 = vperm.slane %v975, 0
      %v1040 = vperm.slane %v976, 0
      %v1041 = vperm.slane %v977, 0
      %v1042 = vperm.slane %v978, 0
      %v1043 = vperm.slane %v979, 0
      %v1044 = vperm.slane %v980, 0
      %v1045 = vperm.slane %v981, 0
      %v1046 = vperm.slane %v982, 0
      %v1047 = vperm.slane %v983, 0
      %v1048 = vperm.slane %v984, 0
      %v1049 = vperm.slane %v985, 0
      %v1050 = vperm.slane %v986, 0
      %v1051 = vperm.slane %v987, 0
      %v1052 = vperm.slane %v988, 0
      %v1053 = vperm.slane %v989, 0
      %v1054 = vperm.slane %v990, 0
      %v1055 = vperm.slane %v991, 0
      %v1056 = vperm.slane %v992, 0
      %v1057 = vperm.slane %v993, 0
      %v1058 = vperm.slane %v994, 0
      %v1059 = vperm.slane %v995, 0
      %v1060 = vperm.slane %v996, 0
      %v1061 = vperm.slane %v997, 0
      %v1062 = vperm.slane %v998, 0
      %v1063 = vperm.slane %v999, 0
      %v1064 = vperm.slane %v1000, 0
      %vm1065 = vcmask 1041409
      %v1066 = vsel %vm1065, %v1034, %v1033
      %vm1067 = vcmask 1042434
      %v1068 = vsel %vm1067, %v1035, %v1066
      %vm1069 = vcmask 1043459
      %v1070 = vsel %vm1069, %v1036, %v1068
      %vm1071 = vcmask 1044484
      %v1072 = vsel %vm1071, %v1037, %v1070
      %vm1073 = vcmask 1045509
      %v1074 = vsel %vm1073, %v1038, %v1072
      %vm1075 = vcmask 1046534
      %v1076 = vsel %vm1075, %v1039, %v1074
      %vm1077 = vcmask 1047559
      %v1078 = vsel %vm1077, %v1040, %v1076
      %v1079 = vsel %vm1065, %v1042, %v1041
      %v1080 = vsel %vm1067, %v1043, %v1079
      %v1081 = vsel %vm1069, %v1044, %v1080
      %v1082 = vsel %vm1071, %v1045, %v1081
      %v1083 = vsel %vm1073, %v1046, %v1082
      %v1084 = vsel %vm1075, %v1047, %v1083
      %v1085 = vsel %vm1077, %v1048, %v1084
      %v1086 = vsel %vm1065, %v1050, %v1049
      %v1087 = vsel %vm1067, %v1051, %v1086
      %v1088 = vsel %vm1069, %v1052, %v1087
      %v1089 = vsel %vm1071, %v1053, %v1088
      %v1090 = vsel %vm1073, %v1054, %v1089
      %v1091 = vsel %vm1075, %v1055, %v1090
      %v1092 = vsel %vm1077, %v1056, %v1091
      %v1093 = vsel %vm1065, %v1058, %v1057
      %v1094 = vsel %vm1067, %v1059, %v1093
      %v1095 = vsel %vm1069, %v1060, %v1094
      %v1096 = vsel %vm1071, %v1061, %v1095
      %v1097 = vsel %vm1073, %v1062, %v1096
      %v1098 = vsel %vm1075, %v1063, %v1097
      %v1099 = vsel %vm1077, %v1064, %v1098
      %1100 = vrot.lane.b32.xlu0 %v1078, 120
      %v1101 = vpop.permute.xlu0 %1100
      %1102 = vrot.lane.b32.xlu0 %v1085, 120
      %v1103 = vpop.permute.xlu0 %1102
      %1104 = vrot.lane.b32.xlu0 %v1092, 120
      %v1105 = vpop.permute.xlu0 %1104
      %1106 = vrot.lane.b32.xlu0 %v1099, 120
      %v1107 = vpop.permute.xlu0 %1106
      %vm1112 = vcmask 982016
      %v1113 = vsel %vm1112, %v1101, 0.0
      %v1114 = vsel %vm1112, %v1103, 0.0
      %v1115 = vsel %vm1112, %v1105, 0.0
      %v1116 = vsel %vm1112, %v1107, 0.0
      %v1121 = vrot.slane %v1113, 2
      %v1122 = vrot.slane %v1113, 4
      %v1123 = vrot.slane %v1113, 6
      %v1124 = vrot.slane %v1114, 2
      %v1125 = vrot.slane %v1114, 4
      %v1126 = vrot.slane %v1114, 6
      %v1127 = vrot.slane %v1115, 2
      %v1128 = vrot.slane %v1115, 4
      %v1129 = vrot.slane %v1115, 6
      %v1130 = vrot.slane %v1116, 2
      %v1131 = vrot.slane %v1116, 4
      %v1132 = vrot.slane %v1116, 6
      %v1133 = vrot.slane %v1113, 1
      %v1134 = vrot.slane %v1121, 1
      %v1135 = vrot.slane %v1122, 1
      %v1136 = vrot.slane %v1123, 1
      %v1137 = vrot.slane %v1114, 1
      %v1138 = vrot.slane %v1124, 1
      %v1139 = vrot.slane %v1125, 1
      %v1140 = vrot.slane %v1126, 1
      %v1141 = vrot.slane %v1115, 1
      %v1142 = vrot.slane %v1127, 1
      %v1143 = vrot.slane %v1128, 1
      %v1144 = vrot.slane %v1129, 1
      %v1145 = vrot.slane %v1116, 1
      %v1146 = vrot.slane %v1130, 1
      %v1147 = vrot.slane %v1131, 1
      %v1148 = vrot.slane %v1132, 1
      %v1181 = vmax.f32 %v969, %v1113
      %v1182 = vmax.f32 %v970, %v1133
      %v1183 = vmax.f32 %v971, %v1121
      %v1184 = vmax.f32 %v972, %v1134
      %v1185 = vmax.f32 %v973, %v1122
      %v1186 = vmax.f32 %v974, %v1135
      %v1187 = vmax.f32 %v975, %v1123
      %v1188 = vmax.f32 %v976, %v1136
      %v1189 = vmax.f32 %v977, %v1114
      %v1190 = vmax.f32 %v978, %v1137
      %v1191 = vmax.f32 %v979, %v1124
      %v1192 = vmax.f32 %v980, %v1138
      %v1193 = vmax.f32 %v981, %v1125
      %v1194 = vmax.f32 %v982, %v1139
      %v1195 = vmax.f32 %v983, %v1126
      %v1196 = vmax.f32 %v984, %v1140
      %v1197 = vmax.f32 %v985, %v1115
      %v1198 = vmax.f32 %v986, %v1141
      %v1199 = vmax.f32 %v987, %v1127
      %v1200 = vmax.f32 %v988, %v1142
      %v1201 = vmax.f32 %v989, %v1128
      %v1202 = vmax.f32 %v990, %v1143
      %v1203 = vmax.f32 %v991, %v1129
      %v1204 = vmax.f32 %v992, %v1144
      %v1205 = vmax.f32 %v993, %v1116
      %v1206 = vmax.f32 %v994, %v1145
      %v1207 = vmax.f32 %v995, %v1130
      %v1208 = vmax.f32 %v996, %v1146
      %v1209 = vmax.f32 %v997, %v1131
      %v1210 = vmax.f32 %v998, %v1147
      %v1211 = vmax.f32 %v999, %v1132
      %v1212 = vmax.f32 %v1000, %v1148
      %v1213 = vld [vmem:[%s3] sm:$0xff]
      %v1214 = vld [vmem:[%s3 + $0x8] sm:$0xff]
      %v1215 = vld [vmem:[%s3 + $0x10] sm:$0xff]
      %v1216 = vld [vmem:[%s3 + $0x18] sm:$0xff]
      %v1217 = vld [vmem:[%s3 + $0x20] sm:$0xff]
      %v1218 = vld [vmem:[%s3 + $0x28] sm:$0xff]
      %v1219 = vld [vmem:[%s3 + $0x30] sm:$0xff]
      %v1220 = vld [vmem:[%s3 + $0x38] sm:$0xff]
      %v1221 = vld [vmem:[%s3 + $0x40] sm:$0xff]
      %v1222 = vld [vmem:[%s3 + $0x48] sm:$0xff]
      %v1223 = vld [vmem:[%s3 + $0x50] sm:$0xff]
      %v1224 = vld [vmem:[%s3 + $0x58] sm:$0xff]
      %v1225 = vld [vmem:[%s3 + $0x60] sm:$0xff]
      %v1226 = vld [vmem:[%s3 + $0x68] sm:$0xff]
      %v1227 = vld [vmem:[%s3 + $0x70] sm:$0xff]
      %v1228 = vld [vmem:[%s3 + $0x78] sm:$0xff]
      %v1229 = vld [vmem:[%s3 + $0x80] sm:$0xff]
      %v1230 = vld [vmem:[%s3 + $0x88] sm:$0xff]
      %v1231 = vld [vmem:[%s3 + $0x90] sm:$0xff]
      %v1232 = vld [vmem:[%s3 + $0x98] sm:$0xff]
      %v1233 = vld [vmem:[%s3 + $0xa0] sm:$0xff]
      %v1234 = vld [vmem:[%s3 + $0xa8] sm:$0xff]
      %v1235 = vld [vmem:[%s3 + $0xb0] sm:$0xff]
      %v1236 = vld [vmem:[%s3 + $0xb8] sm:$0xff]
      %v1237 = vld [vmem:[%s3 + $0xc0] sm:$0xff]
      %v1238 = vld [vmem:[%s3 + $0xc8] sm:$0xff]
      %v1239 = vld [vmem:[%s3 + $0xd0] sm:$0xff]
      %v1240 = vld [vmem:[%s3 + $0xd8] sm:$0xff]
      %v1241 = vld [vmem:[%s3 + $0xe0] sm:$0xff]
      %v1242 = vld [vmem:[%s3 + $0xe8] sm:$0xff]
      %v1243 = vld [vmem:[%s3 + $0xf0] sm:$0xff]
      %v1244 = vld [vmem:[%s3 + $0xf8] sm:$0xff]
      %v1245 = vld [vmem:[%s3 + $0x100] sm:$0xff]
      %v1246 = vld [vmem:[%s3 + $0x108] sm:$0xff]
      %v1247 = vld [vmem:[%s3 + $0x110] sm:$0xff]
      %v1248 = vld [vmem:[%s3 + $0x118] sm:$0xff]
      %v1249 = vld [vmem:[%s3 + $0x120] sm:$0xff]
      %v1250 = vld [vmem:[%s3 + $0x128] sm:$0xff]
      %v1251 = vld [vmem:[%s3 + $0x130] sm:$0xff]
      %v1252 = vld [vmem:[%s3 + $0x138] sm:$0xff]
      %v1253 = vld [vmem:[%s3 + $0x140] sm:$0xff]
      %v1254 = vld [vmem:[%s3 + $0x148] sm:$0xff]
      %v1255 = vld [vmem:[%s3 + $0x150] sm:$0xff]
      %v1256 = vld [vmem:[%s3 + $0x158] sm:$0xff]
      %v1257 = vld [vmem:[%s3 + $0x160] sm:$0xff]
      %v1258 = vld [vmem:[%s3 + $0x168] sm:$0xff]
      %v1259 = vld [vmem:[%s3 + $0x170] sm:$0xff]
      %v1260 = vld [vmem:[%s3 + $0x178] sm:$0xff]
      %v1261 = vld [vmem:[%s4] sm:$0x1]
      %v1262 = vand.u32 %v472, 7
      %v1263 = vand.u32 %v473, 7
      %v1264 = vand.u32 %v474, 7
      %v1265 = vand.u32 %v475, 7
      %v1297 = vperm.slane %v1181, 0
      %v1298 = vperm.slane %v1182, 0
      %v1299 = vperm.slane %v1183, 0
      %v1300 = vperm.slane %v1184, 0
      %v1301 = vperm.slane %v1185, 0
      %v1302 = vperm.slane %v1186, 0
      %v1303 = vperm.slane %v1187, 0
      %v1304 = vperm.slane %v1188, 0
      %v1305 = vperm.slane %v1189, 0
      %v1306 = vperm.slane %v1190, 0
      %v1307 = vperm.slane %v1191, 0
      %v1308 = vperm.slane %v1192, 0
      %v1309 = vperm.slane %v1193, 0
      %v1310 = vperm.slane %v1194, 0
      %v1311 = vperm.slane %v1195, 0
      %v1312 = vperm.slane %v1196, 0
      %v1313 = vperm.slane %v1197, 0
      %v1314 = vperm.slane %v1198, 0
      %v1315 = vperm.slane %v1199, 0
      %v1316 = vperm.slane %v1200, 0
      %v1317 = vperm.slane %v1201, 0
      %v1318 = vperm.slane %v1202, 0
      %v1319 = vperm.slane %v1203, 0
      %v1320 = vperm.slane %v1204, 0
      %v1321 = vperm.slane %v1205, 0
      %v1322 = vperm.slane %v1206, 0
      %v1323 = vperm.slane %v1207, 0
      %v1324 = vperm.slane %v1208, 0
      %v1325 = vperm.slane %v1209, 0
      %v1326 = vperm.slane %v1210, 0
      %v1327 = vperm.slane %v1211, 0
      %v1328 = vsel %vm1067, %v1298, %v1297
      %v1329 = vsel %vm1069, %v1299, %v1328
      %v1330 = vsel %vm1071, %v1300, %v1329
      %v1331 = vsel %vm1073, %v1301, %v1330
      %v1332 = vsel %vm1075, %v1302, %v1331
      %v1333 = vsel %vm1077, %v1303, %v1332
      %v1334 = vsel %vm1065, %v1305, %v1304
      %v1335 = vsel %vm1067, %v1306, %v1334
      %v1336 = vsel %vm1069, %v1307, %v1335
      %v1337 = vsel %vm1071, %v1308, %v1336
      %v1338 = vsel %vm1073, %v1309, %v1337
      %v1339 = vsel %vm1075, %v1310, %v1338
      %v1340 = vsel %vm1077, %v1311, %v1339
      %v1341 = vsel %vm1065, %v1313, %v1312
      %v1342 = vsel %vm1067, %v1314, %v1341
      %v1343 = vsel %vm1069, %v1315, %v1342
      %v1344 = vsel %vm1071, %v1316, %v1343
      %v1345 = vsel %vm1073, %v1317, %v1344
      %v1346 = vsel %vm1075, %v1318, %v1345
      %v1347 = vsel %vm1077, %v1319, %v1346
      %v1348 = vsel %vm1065, %v1321, %v1320
      %v1349 = vsel %vm1067, %v1322, %v1348
      %v1350 = vsel %vm1069, %v1323, %v1349
      %v1351 = vsel %vm1071, %v1324, %v1350
      %v1352 = vsel %vm1073, %v1325, %v1351
      %v1353 = vsel %vm1075, %v1326, %v1352
      %v1354 = vsel %vm1077, %v1327, %v1353
      %v1359 = vsel %vm496, 0.0, %v1333
      %vm1360 = vcmp.ge.s32.totalorder %v1262, 1
      %vm1361 = vcmp.ge.s32.totalorder %v1263, 1
      %vm1362 = vcmp.ge.s32.totalorder %v1264, 1
      %vm1363 = vcmp.ge.s32.totalorder %v1265, 1
      %v1364 = vsel %vm1360, 1, 0
      %v1365 = vsel %vm1361, 1, 0
      %v1366 = vsel %vm1362, 1, 0
      %v1367 = vsel %vm1363, 1, 0
      %vm1368 = vcmp.eq.s32.totalorder %v1364, 1
      %vm1369 = vcmp.eq.s32.totalorder %v1365, 1
      %vm1370 = vcmp.eq.s32.totalorder %v1366, 1
      %vm1371 = vcmp.eq.s32.totalorder %v1367, 1
      %v1372 = vsel %vm1368, %v1359, 0.0
      %v1373 = vsel %vm1369, %v1340, 0.0
      %v1374 = vsel %vm1370, %v1347, 0.0
      %v1375 = vsel %vm1371, %v1354, 0.0
      %v1377 = vperm.slane %v1212, 0
      %v1378 = vsel %vm1065, %v1298, %v1297
      %v1379 = vsel %vm1067, %v1299, %v1378
      %v1380 = vsel %vm1069, %v1300, %v1379
      %v1381 = vsel %vm1071, %v1301, %v1380
      %v1382 = vsel %vm1073, %v1302, %v1381
      %v1383 = vsel %vm1075, %v1303, %v1382
      %v1384 = vsel %vm1077, %v1304, %v1383
      %v1385 = vsel %vm1065, %v1306, %v1305
      %v1386 = vsel %vm1067, %v1307, %v1385
      %v1387 = vsel %vm1069, %v1308, %v1386
      %v1388 = vsel %vm1071, %v1309, %v1387
      %v1389 = vsel %vm1073, %v1310, %v1388
      %v1390 = vsel %vm1075, %v1311, %v1389
      %v1391 = vsel %vm1077, %v1312, %v1390
      %v1392 = vsel %vm1065, %v1314, %v1313
      %v1393 = vsel %vm1067, %v1315, %v1392
      %v1394 = vsel %vm1069, %v1316, %v1393
      %v1395 = vsel %vm1071, %v1317, %v1394
      %v1396 = vsel %vm1073, %v1318, %v1395
      %v1397 = vsel %vm1075, %v1319, %v1396
      %v1398 = vsel %vm1077, %v1320, %v1397
      %v1399 = vsel %vm1065, %v1322, %v1321
      %v1400 = vsel %vm1067, %v1323, %v1399
      %v1401 = vsel %vm1069, %v1324, %v1400
      %v1402 = vsel %vm1071, %v1325, %v1401
      %v1403 = vsel %vm1073, %v1326, %v1402
      %v1404 = vsel %vm1075, %v1327, %v1403
      %v1405 = vsel %vm1077, %v1377, %v1404
      %1410 = vmatpush.msra.mxu0 %v1244
      %1411 = vmatpush.msra.mxu0 %v1243
      %1412 = vmatpush.msra.mxu0 %v1242
      %1413 = vmatpush.msra.mxu0 %v1241
      %1414 = vmatpush.msra.mxu0 %v1240
      %1415 = vmatpush.msra.mxu0 %v1239
      %1416 = vmatpush.msra.mxu0 %v1238
      %1417 = vmatpush.msra.mxu0 %v1237
      %1418 = vmatpush.msra.mxu0 %v1236
      %1419 = vmatpush.msra.mxu0 %v1235
      %1420 = vmatpush.msra.mxu0 %v1234
      %1421 = vmatpush.msra.mxu0 %v1233
      %1422 = vmatpush.msra.mxu0 %v1232
      %1423 = vmatpush.msra.mxu0 %v1231
      %1424 = vmatpush.msra.mxu0 %v1230
      %1425 = vmatpush.msra.mxu0 %v1229
      %1426 = vmatmul.f32.gmra.mxu0 %v1384
      %v1427 = vpop.f32.mrf.mxu0
      %v1428 = vadd.f32 0.0, %v1427
      %1429 = vmatmul.f32.gmra.mxu0 %v1391
      %v1430 = vpop.f32.mrf.mxu0
      %v1431 = vadd.f32 0.0, %v1430
      %1432 = vmatmul.f32.gmra.mxu0 %v1398
      %v1433 = vpop.f32.mrf.mxu0
      %v1434 = vadd.f32 0.0, %v1433
      %1435 = vmatmul.f32.gmra.mxu0 %v1405
      %v1436 = vpop.f32.mrf.mxu0
      %v1437 = vadd.f32 0.0, %v1436
      %1438 = vdwg.mxu0
      %1439 = vmatpush.msra.mxu0 %v1228
      %1440 = vmatpush.msra.mxu0 %v1227
      %1441 = vmatpush.msra.mxu0 %v1226
      %1442 = vmatpush.msra.mxu0 %v1225
      %1443 = vmatpush.msra.mxu0 %v1224
      %1444 = vmatpush.msra.mxu0 %v1223
      %1445 = vmatpush.msra.mxu0 %v1222
      %1446 = vmatpush.msra.mxu0 %v1221
      %1447 = vmatpush.msra.mxu0 %v1220
      %1448 = vmatpush.msra.mxu0 %v1219
      %1449 = vmatpush.msra.mxu0 %v1218
      %1450 = vmatpush.msra.mxu0 %v1217
      %1451 = vmatpush.msra.mxu0 %v1216
      %1452 = vmatpush.msra.mxu0 %v1215
      %1453 = vmatpush.msra.mxu0 %v1214
      %1454 = vmatpush.msra.mxu0 %v1213
      %1455 = vmatmul.f32.gmra.mxu0 %v1372
      %v1456 = vpop.f32.mrf.mxu0
      %v1457 = vadd.f32 %v1428, %v1456
      %1458 = vmatmul.f32.gmra.mxu0 %v1373
      %v1459 = vpop.f32.mrf.mxu0
      %v1460 = vadd.f32 %v1431, %v1459
      %1461 = vmatmul.f32.gmra.mxu0 %v1374
      %v1462 = vpop.f32.mrf.mxu0
      %v1463 = vadd.f32 %v1434, %v1462
      %1464 = vmatmul.f32.gmra.mxu0 %v1375
      %v1465 = vpop.f32.mrf.mxu0
      %v1466 = vadd.f32 %v1437, %v1465
      %1467 = vdwg.mxu0
      %v1468 = vsel %vm1065, %v1299, %v1298
      %v1469 = vsel %vm1067, %v1300, %v1468
      %v1470 = vsel %vm1069, %v1301, %v1469
      %v1471 = vsel %vm1071, %v1302, %v1470
      %v1472 = vsel %vm1073, %v1303, %v1471
      %v1473 = vsel %vm1075, %v1304, %v1472
      %v1474 = vsel %vm1077, %v1305, %v1473
      %v1475 = vsel %vm1065, %v1307, %v1306
      %v1476 = vsel %vm1067, %v1308, %v1475
      %v1477 = vsel %vm1069, %v1309, %v1476
      %v1478 = vsel %vm1071, %v1310, %v1477
      %v1479 = vsel %vm1073, %v1311, %v1478
      %v1480 = vsel %vm1075, %v1312, %v1479
      %v1481 = vsel %vm1077, %v1313, %v1480
      %v1482 = vsel %vm1065, %v1315, %v1314
      %v1483 = vsel %vm1067, %v1316, %v1482
      %v1484 = vsel %vm1069, %v1317, %v1483
      %v1485 = vsel %vm1071, %v1318, %v1484
      %v1486 = vsel %vm1073, %v1319, %v1485
      %v1487 = vsel %vm1075, %v1320, %v1486
      %v1488 = vsel %vm1077, %v1321, %v1487
      %v1489 = vsel %vm1065, %v1323, %v1322
      %v1490 = vsel %vm1067, %v1324, %v1489
      %v1491 = vsel %vm1069, %v1325, %v1490
      %v1492 = vsel %vm1071, %v1326, %v1491
      %v1493 = vsel %vm1073, %v1327, %v1492
      %v1494 = vsel %vm1075, %v1377, %v1493
      %v1499 = vsel %vm676, %v1494, 0.0
      %vm1500 = vcmp.le.s32.totalorder %v1262, 6
      %vm1501 = vcmp.le.s32.totalorder %v1263, 6
      %vm1502 = vcmp.le.s32.totalorder %v1264, 6
      %vm1503 = vcmp.le.s32.totalorder %v1265, 6
      %v1504 = vsel %vm1500, 1, 0
      %v1505 = vsel %vm1501, 1, 0
      %v1506 = vsel %vm1502, 1, 0
      %v1507 = vsel %vm1503, 1, 0
      %vm1508 = vcmp.eq.s32.totalorder %v1504, 1
      %vm1509 = vcmp.eq.s32.totalorder %v1505, 1
      %vm1510 = vcmp.eq.s32.totalorder %v1506, 1
      %vm1511 = vcmp.eq.s32.totalorder %v1507, 1
      %v1512 = vsel %vm1508, %v1474, 0.0
      %v1513 = vsel %vm1509, %v1481, 0.0
      %v1514 = vsel %vm1510, %v1488, 0.0
      %v1515 = vsel %vm1511, %v1499, 0.0
      %1516 = vmatpush.msra.mxu0 %v1260
      %1517 = vmatpush.msra.mxu0 %v1259
      %1518 = vmatpush.msra.mxu0 %v1258
      %1519 = vmatpush.msra.mxu0 %v1257
      %1520 = vmatpush.msra.mxu0 %v1256
      %1521 = vmatpush.msra.mxu0 %v1255
      %1522 = vmatpush.msra.mxu0 %v1254
      %1523 = vmatpush.msra.mxu0 %v1253
      %1524 = vmatpush.msra.mxu0 %v1252
      %1525 = vmatpush.msra.mxu0 %v1251
      %1526 = vmatpush.msra.mxu0 %v1250
      %1527 = vmatpush.msra.mxu0 %v1249
      %1528 = vmatpush.msra.mxu0 %v1248
      %1529 = vmatpush.msra.mxu0 %v1247
      %1530 = vmatpush.msra.mxu0 %v1246
      %1531 = vmatpush.msra.mxu0 %v1245
      %1532 = vmatmul.f32.gmra.mxu0 %v1512
      %v1533 = vpop.f32.mrf.mxu0
      %v1534 = vadd.f32 0.0, %v1533
      %1535 = vmatmul.f32.gmra.mxu0 %v1513
      %v1536 = vpop.f32.mrf.mxu0
      %v1537 = vadd.f32 0.0, %v1536
      %1538 = vmatmul.f32.gmra.mxu0 %v1514
      %v1539 = vpop.f32.mrf.mxu0
      %v1540 = vadd.f32 0.0, %v1539
      %1541 = vmatmul.f32.gmra.mxu0 %v1515
      %v1542 = vpop.f32.mrf.mxu0
      %v1543 = vadd.f32 0.0, %v1542
      %1544 = vdwg.mxu0
      %v1545 = vadd.f32 %v1457, %v1534
      %v1546 = vadd.f32 %v1460, %v1537
      %v1547 = vadd.f32 %v1463, %v1540
      %v1548 = vadd.f32 %v1466, %v1543
      %v1550 = vperm.slane %v1261, 0
      %v1552 = vadd.f32 %v1545, %v1550
      %v1553 = vadd.f32 %v1546, %v1550
      %v1554 = vadd.f32 %v1547, %v1550
      %v1555 = vadd.f32 %v1548, %v1550
      %v1560 = vrot.slane %v1552, 2
      %v1561 = vrot.slane %v1552, 4
      %v1562 = vrot.slane %v1552, 6
      %v1563 = vrot.slane %v1553, 2
      %v1564 = vrot.slane %v1553, 4
      %v1565 = vrot.slane %v1553, 6
      %v1566 = vrot.slane %v1554, 2
      %v1567 = vrot.slane %v1554, 4
      %v1568 = vrot.slane %v1554, 6
      %v1569 = vrot.slane %v1555, 2
      %v1570 = vrot.slane %v1555, 4
      %v1571 = vrot.slane %v1555, 6
      %v1584 = vrot.slane %v1552, 7
      %v1585 = vrot.slane %v1584, 2
      %v1586 = vrot.slane %v1560, 7
      %v1587 = vrot.slane %v1586, 2
      %v1588 = vrot.slane %v1561, 7
      %v1589 = vrot.slane %v1588, 2
      %v1590 = vrot.slane %v1562, 7
      %v1591 = vrot.slane %v1590, 2
      %v1592 = vrot.slane %v1553, 7
      %v1593 = vrot.slane %v1592, 2
      %v1594 = vrot.slane %v1563, 7
      %v1595 = vrot.slane %v1594, 2
      %v1596 = vrot.slane %v1564, 7
      %v1597 = vrot.slane %v1596, 2
      %v1598 = vrot.slane %v1565, 7
      %v1599 = vrot.slane %v1598, 2
      %v1600 = vrot.slane %v1554, 7
      %v1601 = vrot.slane %v1600, 2
      %v1602 = vrot.slane %v1566, 7
      %v1603 = vrot.slane %v1602, 2
      %v1604 = vrot.slane %v1567, 7
      %v1605 = vrot.slane %v1604, 2
      %v1606 = vrot.slane %v1568, 7
      %v1607 = vrot.slane %v1606, 2
      %v1608 = vrot.slane %v1555, 7
      %v1609 = vrot.slane %v1608, 2
      %v1610 = vrot.slane %v1569, 7
      %v1611 = vrot.slane %v1610, 2
      %v1612 = vrot.slane %v1570, 7
      %v1613 = vrot.slane %v1612, 2
      %v1614 = vrot.slane %v1571, 7
      %v1615 = vrot.slane %v1614, 2
      %v1632 = vmax.f32 %v1552, %v1585
      %v1633 = vmax.f32 %v1560, %v1587
      %v1634 = vmax.f32 %v1561, %v1589
      %v1635 = vmax.f32 %v1562, %v1591
      %v1636 = vmax.f32 %v1553, %v1593
      %v1637 = vmax.f32 %v1563, %v1595
      %v1638 = vmax.f32 %v1564, %v1597
      %v1639 = vmax.f32 %v1565, %v1599
      %v1640 = vmax.f32 %v1554, %v1601
      %v1641 = vmax.f32 %v1566, %v1603
      %v1642 = vmax.f32 %v1567, %v1605
      %v1643 = vmax.f32 %v1568, %v1607
      %v1644 = vmax.f32 %v1555, %v1609
      %v1645 = vmax.f32 %v1569, %v1611
      %v1646 = vmax.f32 %v1570, %v1613
      %v1647 = vmax.f32 %v1571, %v1615
      %v1664 = vperm.slane %v1632, 0
      %v1665 = vperm.slane %v1633, 0
      %v1666 = vperm.slane %v1634, 0
      %v1667 = vperm.slane %v1635, 0
      %v1668 = vperm.slane %v1636, 0
      %v1669 = vperm.slane %v1637, 0
      %v1670 = vperm.slane %v1638, 0
      %v1671 = vperm.slane %v1639, 0
      %v1672 = vperm.slane %v1640, 0
      %v1673 = vperm.slane %v1641, 0
      %v1674 = vperm.slane %v1642, 0
      %v1675 = vperm.slane %v1643, 0
      %v1676 = vperm.slane %v1644, 0
      %v1677 = vperm.slane %v1645, 0
      %v1678 = vperm.slane %v1646, 0
      %v1679 = vperm.slane %v1647, 0
      %v1680 = vsel %vm1065, %v1665, %v1664
      %v1681 = vsel %vm1067, %v1666, %v1680
      %v1682 = vsel %vm1069, %v1667, %v1681
      %v1683 = vsel %vm1071, %v1668, %v1682
      %v1684 = vsel %vm1073, %v1669, %v1683
      %v1685 = vsel %vm1075, %v1670, %v1684
      %v1686 = vsel %vm1077, %v1671, %v1685
      %v1687 = vsel %vm1065, %v1673, %v1672
      %v1688 = vsel %vm1067, %v1674, %v1687
      %v1689 = vsel %vm1069, %v1675, %v1688
      %v1690 = vsel %vm1071, %v1676, %v1689
      %v1691 = vsel %vm1073, %v1677, %v1690
      %v1692 = vsel %vm1075, %v1678, %v1691
      %v1693 = vsel %vm1077, %v1679, %v1692
      %1694 = vrot.lane.b32.xlu0 %v1686, 120
      %v1695 = vpop.permute.xlu0 %1694
      %1696 = vrot.lane.b32.xlu0 %v1693, 120
      %v1697 = vpop.permute.xlu0 %1696
      %vm1700 = vcmask 457728
      %v1701 = vsel %vm1700, %v1695, 0.0
      %v1702 = vsel %vm1700, %v1697, 0.0
      %v1705 = vrot.slane %v1701, 2
      %v1706 = vrot.slane %v1701, 4
      %v1707 = vrot.slane %v1701, 6
      %v1708 = vrot.slane %v1702, 2
      %v1709 = vrot.slane %v1702, 4
      %v1710 = vrot.slane %v1702, 6
      %v1711 = vrot.slane %v1701, 1
      %v1712 = vrot.slane %v1705, 1
      %v1713 = vrot.slane %v1706, 1
      %v1714 = vrot.slane %v1707, 1
      %v1715 = vrot.slane %v1702, 1
      %v1716 = vrot.slane %v1708, 1
      %v1717 = vrot.slane %v1709, 1
      %v1718 = vrot.slane %v1710, 1
      %v1735 = vmax.f32 %v1632, %v1701
      %v1736 = vmax.f32 %v1633, %v1711
      %v1737 = vmax.f32 %v1634, %v1705
      %v1738 = vmax.f32 %v1635, %v1712
      %v1739 = vmax.f32 %v1636, %v1706
      %v1740 = vmax.f32 %v1637, %v1713
      %v1741 = vmax.f32 %v1638, %v1707
      %v1742 = vmax.f32 %v1639, %v1714
      %v1743 = vmax.f32 %v1640, %v1702
      %v1744 = vmax.f32 %v1641, %v1715
      %v1745 = vmax.f32 %v1642, %v1708
      %v1746 = vmax.f32 %v1643, %v1716
      %v1747 = vmax.f32 %v1644, %v1709
      %v1748 = vmax.f32 %v1645, %v1717
      %v1749 = vmax.f32 %v1646, %v1710
      %v1750 = vmax.f32 %v1647, %v1718
      %v1751 = vld [vmem:[%s5] sm:$0xff]
      %v1752 = vld [vmem:[%s5 + $0x8] sm:$0xff]
      %v1753 = vld [vmem:[%s5 + $0x10] sm:$0xff]
      %v1754 = vld [vmem:[%s5 + $0x18] sm:$0xff]
      %v1755 = vld [vmem:[%s5 + $0x20] sm:$0xff]
      %v1756 = vld [vmem:[%s5 + $0x28] sm:$0xff]
      %v1757 = vld [vmem:[%s5 + $0x30] sm:$0xff]
      %v1758 = vld [vmem:[%s5 + $0x38] sm:$0xff]
      %v1759 = vld [vmem:[%s5 + $0x40] sm:$0xff]
      %v1760 = vld [vmem:[%s5 + $0x48] sm:$0xff]
      %v1761 = vld [vmem:[%s5 + $0x50] sm:$0xff]
      %v1762 = vld [vmem:[%s5 + $0x58] sm:$0xff]
      %v1763 = vld [vmem:[%s5 + $0x60] sm:$0xff]
      %v1764 = vld [vmem:[%s5 + $0x68] sm:$0xff]
      %v1765 = vld [vmem:[%s5 + $0x70] sm:$0xff]
      %v1766 = vld [vmem:[%s5 + $0x78] sm:$0xff]
      %v1767 = vld [vmem:[%s5 + $0x80] sm:$0xff]
      %v1768 = vld [vmem:[%s5 + $0x88] sm:$0xff]
      %v1769 = vld [vmem:[%s5 + $0x90] sm:$0xff]
      %v1770 = vld [vmem:[%s5 + $0x98] sm:$0xff]
      %v1771 = vld [vmem:[%s5 + $0xa0] sm:$0xff]
      %v1772 = vld [vmem:[%s5 + $0xa8] sm:$0xff]
      %v1773 = vld [vmem:[%s5 + $0xb0] sm:$0xff]
      %v1774 = vld [vmem:[%s5 + $0xb8] sm:$0xff]
      %v1775 = vld [vmem:[%s6] sm:$0x1]
      %v1776 = vand.u32 %v472, 3
      %v1777 = vand.u32 %v473, 3
      %v1793 = vperm.slane %v1735, 0
      %v1794 = vperm.slane %v1736, 0
      %v1795 = vperm.slane %v1737, 0
      %v1796 = vperm.slane %v1738, 0
      %v1797 = vperm.slane %v1739, 0
      %v1798 = vperm.slane %v1740, 0
      %v1799 = vperm.slane %v1741, 0
      %v1800 = vperm.slane %v1742, 0
      %v1801 = vperm.slane %v1743, 0
      %v1802 = vperm.slane %v1744, 0
      %v1803 = vperm.slane %v1745, 0
      %v1804 = vperm.slane %v1746, 0
      %v1805 = vperm.slane %v1747, 0
      %v1806 = vperm.slane %v1748, 0
      %v1807 = vperm.slane %v1749, 0
      %v1808 = vsel %vm1067, %v1794, %v1793
      %v1809 = vsel %vm1069, %v1795, %v1808
      %v1810 = vsel %vm1071, %v1796, %v1809
      %v1811 = vsel %vm1073, %v1797, %v1810
      %v1812 = vsel %vm1075, %v1798, %v1811
      %v1813 = vsel %vm1077, %v1799, %v1812
      %v1814 = vsel %vm1065, %v1801, %v1800
      %v1815 = vsel %vm1067, %v1802, %v1814
      %v1816 = vsel %vm1069, %v1803, %v1815
      %v1817 = vsel %vm1071, %v1804, %v1816
      %v1818 = vsel %vm1073, %v1805, %v1817
      %v1819 = vsel %vm1075, %v1806, %v1818
      %v1820 = vsel %vm1077, %v1807, %v1819
      %v1823 = vsel %vm496, 0.0, %v1813
      %vm1824 = vcmp.ge.s32.totalorder %v1776, 1
      %vm1825 = vcmp.ge.s32.totalorder %v1777, 1
      %v1826 = vsel %vm1824, 1, 0
      %v1827 = vsel %vm1825, 1, 0
      %vm1828 = vcmp.eq.s32.totalorder %v1826, 1
      %vm1829 = vcmp.eq.s32.totalorder %v1827, 1
      %v1830 = vsel %vm1828, %v1823, 0.0
      %v1831 = vsel %vm1829, %v1820, 0.0
      %v1833 = vperm.slane %v1750, 0
      %v1834 = vsel %vm1065, %v1794, %v1793
      %v1835 = vsel %vm1067, %v1795, %v1834
      %v1836 = vsel %vm1069, %v1796, %v1835
      %v1837 = vsel %vm1071, %v1797, %v1836
      %v1838 = vsel %vm1073, %v1798, %v1837
      %v1839 = vsel %vm1075, %v1799, %v1838
      %v1840 = vsel %vm1077, %v1800, %v1839
      %v1841 = vsel %vm1065, %v1802, %v1801
      %v1842 = vsel %vm1067, %v1803, %v1841
      %v1843 = vsel %vm1069, %v1804, %v1842
      %v1844 = vsel %vm1071, %v1805, %v1843
      %v1845 = vsel %vm1073, %v1806, %v1844
      %v1846 = vsel %vm1075, %v1807, %v1845
      %v1847 = vsel %vm1077, %v1833, %v1846
      %vm1848 = vcmask 523264
      %v1849 = vsel %vm1848, %v1840, 0
      %v1851 = vsel %vm1848, %v1847, 0
      %1853 = vmatpush.msra.mxu0 0.0
      %1854 = vmatpush.msra.mxu0 0.0
      %1855 = vmatpush.msra.mxu0 0.0
      %1856 = vmatpush.msra.mxu0 0.0
      %1857 = vmatpush.msra.mxu0 0.0
      %1858 = vmatpush.msra.mxu0 0.0
      %1859 = vmatpush.msra.mxu0 0.0
      %1860 = vmatpush.msra.mxu0 0.0
      %1861 = vmatpush.msra.mxu0 %v1766
      %1862 = vmatpush.msra.mxu0 %v1765
      %1863 = vmatpush.msra.mxu0 %v1764
      %1864 = vmatpush.msra.mxu0 %v1763
      %1865 = vmatpush.msra.mxu0 %v1762
      %1866 = vmatpush.msra.mxu0 %v1761
      %1867 = vmatpush.msra.mxu0 %v1760
      %1868 = vmatpush.msra.mxu0 %v1759
      %1869 = vmatmul.f32.gmra.mxu0 %v1849
      %v1870 = vpop.f32.mrf.mxu0
      %v1871 = vadd.f32 0.0, %v1870
      %1872 = vmatmul.f32.gmra.mxu0 %v1851
      %v1873 = vpop.f32.mrf.mxu0
      %v1874 = vadd.f32 0.0, %v1873
      %1875 = vdwg.mxu0
      %v1877 = vsel %vm1848, %v1830, 0
      %v1880 = vsel %vm1848, %v1831, 0
      %1882 = vmatpush.msra.mxu0 0.0
      %1883 = vmatpush.msra.mxu0 0.0
      %1884 = vmatpush.msra.mxu0 0.0
      %1885 = vmatpush.msra.mxu0 0.0
      %1886 = vmatpush.msra.mxu0 0.0
      %1887 = vmatpush.msra.mxu0 0.0
      %1888 = vmatpush.msra.mxu0 0.0
      %1889 = vmatpush.msra.mxu0 0.0
      %1890 = vmatpush.msra.mxu0 %v1758
      %1891 = vmatpush.msra.mxu0 %v1757
      %1892 = vmatpush.msra.mxu0 %v1756
      %1893 = vmatpush.msra.mxu0 %v1755
      %1894 = vmatpush.msra.mxu0 %v1754
      %1895 = vmatpush.msra.mxu0 %v1753
      %1896 = vmatpush.msra.mxu0 %v1752
      %1897 = vmatpush.msra.mxu0 %v1751
      %1898 = vmatmul.f32.gmra.mxu0 %v1877
      %v1899 = vpop.f32.mrf.mxu0
      %v1900 = vadd.f32 %v1871, %v1899
      %1901 = vmatmul.f32.gmra.mxu0 %v1880
      %v1902 = vpop.f32.mrf.mxu0
      %v1903 = vadd.f32 %v1874, %v1902
      %1904 = vdwg.mxu0
      %v1905 = vsel %vm1065, %v1795, %v1794
      %v1906 = vsel %vm1067, %v1796, %v1905
      %v1907 = vsel %vm1069, %v1797, %v1906
      %v1908 = vsel %vm1071, %v1798, %v1907
      %v1909 = vsel %vm1073, %v1799, %v1908
      %v1910 = vsel %vm1075, %v1800, %v1909
      %v1911 = vsel %vm1077, %v1801, %v1910
      %v1912 = vsel %vm1065, %v1803, %v1802
      %v1913 = vsel %vm1067, %v1804, %v1912
      %v1914 = vsel %vm1069, %v1805, %v1913
      %v1915 = vsel %vm1071, %v1806, %v1914
      %v1916 = vsel %vm1073, %v1807, %v1915
      %v1917 = vsel %vm1075, %v1833, %v1916
      %v1920 = vsel %vm676, %v1917, 0.0
      %vm1921 = vcmp.le.s32.totalorder %v1776, 2
      %vm1922 = vcmp.le.s32.totalorder %v1777, 2
      %v1923 = vsel %vm1921, 1, 0
      %v1924 = vsel %vm1922, 1, 0
      %vm1925 = vcmp.eq.s32.totalorder %v1923, 1
      %vm1926 = vcmp.eq.s32.totalorder %v1924, 1
      %v1927 = vsel %vm1925, %v1911, 0.0
      %v1928 = vsel %vm1926, %v1920, 0.0
      %v1930 = vsel %vm1848, %v1927, 0
      %v1933 = vsel %vm1848, %v1928, 0
      %1935 = vmatpush.msra.mxu0 0.0
      %1936 = vmatpush.msra.mxu0 0.0
      %1937 = vmatpush.msra.mxu0 0.0
      %1938 = vmatpush.msra.mxu0 0.0
      %1939 = vmatpush.msra.mxu0 0.0
      %1940 = vmatpush.msra.mxu0 0.0
      %1941 = vmatpush.msra.mxu0 0.0
      %1942 = vmatpush.msra.mxu0 0.0
      %1943 = vmatpush.msra.mxu0 %v1774
      %1944 = vmatpush.msra.mxu0 %v1773
      %1945 = vmatpush.msra.mxu0 %v1772
      %1946 = vmatpush.msra.mxu0 %v1771
      %1947 = vmatpush.msra.mxu0 %v1770
      %1948 = vmatpush.msra.mxu0 %v1769
      %1949 = vmatpush.msra.mxu0 %v1768
      %1950 = vmatpush.msra.mxu0 %v1767
      %1951 = vmatmul.f32.gmra.mxu0 %v1930
      %v1952 = vpop.f32.mrf.mxu0
      %v1953 = vadd.f32 0.0, %v1952
      %1954 = vmatmul.f32.gmra.mxu0 %v1933
      %v1955 = vpop.f32.mrf.mxu0
      %v1956 = vadd.f32 0.0, %v1955
      %1957 = vdwg.mxu0
      %v1958 = vadd.f32 %v1900, %v1953
      %v1959 = vadd.f32 %v1903, %v1956
      %v1961 = vperm.slane %v1775, 0
      %v1963 = vadd.f32 %v1958, %v1961
      %v1964 = vadd.f32 %v1959, %v1961
      %v1965 = vld [vmem:[%s7] sm:$0xff]
      %v1966 = vld [vmem:[%s7 + $0x8] sm:$0xff]
      %v1967 = vld [vmem:[%s7 + $0x10] sm:$0xff]
      %v1968 = vld [vmem:[%s7 + $0x18] sm:$0xff]
      %v1969 = vld [vmem:[%s7 + $0x20] sm:$0xff]
      %v1970 = vld [vmem:[%s7 + $0x28] sm:$0xff]
      %v1971 = vld [vmem:[%s8] sm:$0x1]
      %v1974 = vrot.slane %v1963, 7
      %v1975 = vrot.slane %v1964, 7
      %v1976 = vsel %vm496, %v1974, %v1975
      %v1979 = vsel %vm496, 0.0, %v1974
      %v1980 = vsel %vm1828, %v1979, 0.0
      %v1981 = vsel %vm1829, %v1976, 0.0
      %vm1982 = vcmask 130048
      %v1983 = vsel %vm1982, %v1963, 0
      %v1985 = vsel %vm1982, %v1964, 0
      %1987 = vmatpush.msra.mxu0 0.0
      %1988 = vmatpush.msra.mxu0 0.0
      %1989 = vmatpush.msra.mxu0 0.0
      %1990 = vmatpush.msra.mxu0 0.0
      %1991 = vmatpush.msra.mxu0 0.0
      %1992 = vmatpush.msra.mxu0 0.0
      %1993 = vmatpush.msra.mxu0 0.0
      %1994 = vmatpush.msra.mxu0 0.0
      %1995 = vmatpush.msra.mxu0 0.0
      %1996 = vmatpush.msra.mxu0 0.0
      %1997 = vmatpush.msra.mxu0 0.0
      %1998 = vmatpush.msra.mxu0 0.0
      %1999 = vmatpush.msra.mxu0 0.0
      %2000 = vmatpush.msra.mxu0 0.0
      %2001 = vmatpush.msra.mxu0 %v1968
      %2002 = vmatpush.msra.mxu0 %v1967
      %2003 = vmatmul.f32.gmra.mxu0 %v1983
      %v2004 = vpop.f32.mrf.mxu0
      %v2005 = vadd.f32 0.0, %v2004
      %2006 = vmatmul.f32.gmra.mxu0 %v1985
      %v2007 = vpop.f32.mrf.mxu0
      %v2008 = vadd.f32 0.0, %v2007
      %2009 = vdwg.mxu0
      %v2011 = vsel %vm1982, %v1980, 0
      %v2014 = vsel %vm1982, %v1981, 0
      %2016 = vmatpush.msra.mxu0 0.0
      %2017 = vmatpush.msra.mxu0 0.0
      %2018 = vmatpush.msra.mxu0 0.0
      %2019 = vmatpush.msra.mxu0 0.0
      %2020 = vmatpush.msra.mxu0 0.0
      %2021 = vmatpush.msra.mxu0 0.0
      %2022 = vmatpush.msra.mxu0 0.0
      %2023 = vmatpush.msra.mxu0 0.0
      %2024 = vmatpush.msra.mxu0 0.0
      %2025 = vmatpush.msra.mxu0 0.0
      %2026 = vmatpush.msra.mxu0 0.0
      %2027 = vmatpush.msra.mxu0 0.0
      %2028 = vmatpush.msra.mxu0 0.0
      %2029 = vmatpush.msra.mxu0 0.0
      %2030 = vmatpush.msra.mxu0 %v1966
      %2031 = vmatpush.msra.mxu0 %v1965
      %2032 = vmatmul.f32.gmra.mxu0 %v2011
      %v2033 = vpop.f32.mrf.mxu0
      %v2034 = vadd.f32 %v2005, %v2033
      %2035 = vmatmul.f32.gmra.mxu0 %v2014
      %v2036 = vpop.f32.mrf.mxu0
      %v2037 = vadd.f32 %v2008, %v2036
      %2038 = vdwg.mxu0
      %v2039 = vrot.slane %v1963, 1
      %v2040 = vrot.slane %v1964, 1
      %v2041 = vsel %vm676, %v2039, %v2040
      %v2044 = vsel %vm676, %v2040, 0.0
      %v2045 = vsel %vm1925, %v2041, 0.0
      %v2046 = vsel %vm1926, %v2044, 0.0
      %v2048 = vsel %vm1982, %v2045, 0
      %v2051 = vsel %vm1982, %v2046, 0
      %2053 = vmatpush.msra.mxu0 0.0
      %2054 = vmatpush.msra.mxu0 0.0
      %2055 = vmatpush.msra.mxu0 0.0
      %2056 = vmatpush.msra.mxu0 0.0
      %2057 = vmatpush.msra.mxu0 0.0
      %2058 = vmatpush.msra.mxu0 0.0
      %2059 = vmatpush.msra.mxu0 0.0
      %2060 = vmatpush.msra.mxu0 0.0
      %2061 = vmatpush.msra.mxu0 0.0
      %2062 = vmatpush.msra.mxu0 0.0
      %2063 = vmatpush.msra.mxu0 0.0
      %2064 = vmatpush.msra.mxu0 0.0
      %2065 = vmatpush.msra.mxu0 0.0
      %2066 = vmatpush.msra.mxu0 0.0
      %2067 = vmatpush.msra.mxu0 %v1970
      %2068 = vmatpush.msra.mxu0 %v1969
      %2069 = vmatmul.f32.gmra.mxu0 %v2048
      %v2070 = vpop.f32.mrf.mxu0
      %v2071 = vadd.f32 0.0, %v2070
      %2072 = vmatmul.f32.gmra.mxu0 %v2051
      %v2073 = vpop.f32.mrf.mxu0
      %v2074 = vadd.f32 0.0, %v2073
      %2075 = vdwg.mxu0
      %v2076 = vadd.f32 %v2034, %v2071
      %v2077 = vadd.f32 %v2037, %v2074
      %v2079 = vperm.slane %v1971, 0
      %v2081 = vadd.f32 %v2076, %v2079
      %v2082 = vadd.f32 %v2077, %v2079
      %v2085 = vrot.slane %v2081, 1
      %v2086 = vrot.slane %v2081, 2
      %v2087 = vrot.slane %v2081, 3
      %v2088 = vrot.slane %v2081, 4
      %v2089 = vrot.slane %v2081, 5
      %v2090 = vrot.slane %v2081, 6
      %v2091 = vrot.slane %v2081, 7
      %v2092 = vrot.slane %v2082, 1
      %v2093 = vrot.slane %v2082, 2
      %v2094 = vrot.slane %v2082, 3
      %v2095 = vrot.slane %v2082, 4
      %v2096 = vrot.slane %v2082, 5
      %v2097 = vrot.slane %v2082, 6
      %v2098 = vrot.slane %v2082, 7
      %v2099 = vperm.slane %v2081, 0
      %v2100 = vperm.slane %v2085, 0
      %v2101 = vperm.slane %v2086, 0
      %v2102 = vperm.slane %v2087, 0
      %v2103 = vperm.slane %v2088, 0
      %v2104 = vperm.slane %v2089, 0
      %v2105 = vperm.slane %v2090, 0
      %v2106 = vperm.slane %v2091, 0
      %v2107 = vperm.slane %v2082, 0
      %v2108 = vperm.slane %v2092, 0
      %v2109 = vperm.slane %v2093, 0
      %v2110 = vperm.slane %v2094, 0
      %v2111 = vperm.slane %v2095, 0
      %v2112 = vperm.slane %v2096, 0
      %v2113 = vperm.slane %v2097, 0
      %v2114 = vperm.slane %v2098, 0
      %v2115 = vld [vmem:[%s9] sm:$0xff]
      %v2116 = vld [vmem:[%s9 + $0x8] sm:$0xff]
      %v2117 = vld [vmem:[%s9 + $0x10] sm:$0xff]
      %v2118 = vld [vmem:[%s9 + $0x18] sm:$0xff]
      %v2119 = vld [vmem:[%s9 + $0x20] sm:$0xff]
      %v2120 = vld [vmem:[%s9 + $0x28] sm:$0xff]
      %v2121 = vld [vmem:[%s9 + $0x30] sm:$0xff]
      %v2122 = vld [vmem:[%s9 + $0x38] sm:$0xff]
      %v2123 = vld [vmem:[%s9 + $0x40] sm:$0xff]
      %v2124 = vld [vmem:[%s9 + $0x48] sm:$0xff]
      %v2125 = vld [vmem:[%s9 + $0x50] sm:$0xff]
      %v2126 = vld [vmem:[%s9 + $0x58] sm:$0xff]
      %v2127 = vld [vmem:[%s10] sm:$0x1]
      %2128 = vst [vmem:[#allocation1] ss:$4 sm:$0xff] %v2099
      %s2129 = scalar_lea.vmem [#allocation1], 1
      %2130 = vst [vmem:[%s2129] ss:$4 sm:$0xff] %v2100
      %s2131 = scalar_lea.vmem [#allocation1], 2
      %2132 = vst [vmem:[%s2131] ss:$4 sm:$0xff] %v2101
      %s2133 = scalar_lea.vmem [#allocation1], 3
      %2134 = vst [vmem:[%s2133] ss:$4 sm:$0xff] %v2102
      %s2135 = scalar_lea.vmem [#allocation1], 32
      %2136 = vst [vmem:[%s2135] ss:$4 sm:$0xff] %v2103
      %s2137 = scalar_lea.vmem [#allocation1], 33
      %2138 = vst [vmem:[%s2137] ss:$4 sm:$0xff] %v2104
      %s2139 = scalar_lea.vmem [#allocation1], 34
      %2140 = vst [vmem:[%s2139] ss:$4 sm:$0xff] %v2105
      %s2141 = scalar_lea.vmem [#allocation1], 35
      %2142 = vst [vmem:[%s2141] ss:$4 sm:$0xff] %v2106
      %v2143 = vld.sshfl [vmem:[#allocation1] sm:$0xff pattern:$0x73625140]
      %v2144 = vld.sshfl [vmem:[#allocation1 + $0x20] sm:$0xff pattern:$0x73625140]
      %2145 = vst [vmem:[#allocation1] ss:$4 sm:$0xff] %v2107
      %2146 = vst [vmem:[%s2129] ss:$4 sm:$0xff] %v2108
      %2147 = vst [vmem:[%s2131] ss:$4 sm:$0xff] %v2109
      %2148 = vst [vmem:[%s2133] ss:$4 sm:$0xff] %v2110
      %2149 = vst [vmem:[%s2135] ss:$4 sm:$0xff] %v2111
      %2150 = vst [vmem:[%s2137] ss:$4 sm:$0xff] %v2112
      %2151 = vst [vmem:[%s2139] ss:$4 sm:$0xff] %v2113
      %2152 = vst [vmem:[%s2141] ss:$4 sm:$0xff] %v2114
      %v2153 = vld.sshfl [vmem:[#allocation1] sm:$0xff pattern:$0x73625140]
      %v2154 = vld.sshfl [vmem:[#allocation1 + $0x20] sm:$0xff pattern:$0x73625140]
      %v2155 = vrot.slane %v2143, 7
      %v2156 = vrot.slane %v2144, 7
      %v2157 = vsel %vm496, %v2155, %v2156
      %v2158 = vrot.slane %v2153, 7
      %v2159 = vsel %vm496, %v2156, %v2158
      %v2160 = vrot.slane %v2154, 7
      %v2161 = vsel %vm496, %v2158, %v2160
      %v2166 = vsel %vm496, 0.0, %v2155
      %v2167 = vsel %vm1368, %v2166, 0.0
      %v2168 = vsel %vm1369, %v2157, 0.0
      %v2169 = vsel %vm1370, %v2159, 0.0
      %v2170 = vsel %vm1371, %v2161, 0.0
      %2171 = vst [vmem:[#allocation1] ss:$4 sm:$0xff] %v2099
      %s2172 = scalar_lea.vmem [#allocation1], 1
      %2173 = vst [vmem:[%s2172] ss:$4 sm:$0xff] %v2100
      %s2174 = scalar_lea.vmem [#allocation1], 2
      %2175 = vst [vmem:[%s2174] ss:$4 sm:$0xff] %v2101
      %s2176 = scalar_lea.vmem [#allocation1], 3
      %2177 = vst [vmem:[%s2176] ss:$4 sm:$0xff] %v2102
      %s2178 = scalar_lea.vmem [#allocation1], 32
      %2179 = vst [vmem:[%s2178] ss:$4 sm:$0xff] %v2103
      %s2180 = scalar_lea.vmem [#allocation1], 33
      %2181 = vst [vmem:[%s2180] ss:$4 sm:$0xff] %v2104
      %s2182 = scalar_lea.vmem [#allocation1], 34
      %2183 = vst [vmem:[%s2182] ss:$4 sm:$0xff] %v2105
      %s2184 = scalar_lea.vmem [#allocation1], 35
      %2185 = vst [vmem:[%s2184] ss:$4 sm:$0xff] %v2106
      %v2186 = vld.sshfl [vmem:[#allocation1] sm:$0xff pattern:$0x73625140]
      %v2187 = vld.sshfl [vmem:[#allocation1 + $0x20] sm:$0xff pattern:$0x73625140]
      %2188 = vst [vmem:[#allocation1] ss:$4 sm:$0xff] %v2107
      %2189 = vst [vmem:[%s2172] ss:$4 sm:$0xff] %v2108
      %2190 = vst [vmem:[%s2174] ss:$4 sm:$0xff] %v2109
      %2191 = vst [vmem:[%s2176] ss:$4 sm:$0xff] %v2110
      %2192 = vst [vmem:[%s2178] ss:$4 sm:$0xff] %v2111
      %2193 = vst [vmem:[%s2180] ss:$4 sm:$0xff] %v2112
      %2194 = vst [vmem:[%s2182] ss:$4 sm:$0xff] %v2113
      %2195 = vst [vmem:[%s2184] ss:$4 sm:$0xff] %v2114
      %v2196 = vld.sshfl [vmem:[#allocation1] sm:$0xff pattern:$0x73625140]
      %v2197 = vld.sshfl [vmem:[#allocation1 + $0x20] sm:$0xff pattern:$0x73625140]
      %vm2198 = vcmask 261120
      %v2199 = vsel %vm2198, %v2186, 0
      %v2201 = vsel %vm2198, %v2187, 0
      %v2203 = vsel %vm2198, %v2196, 0
      %v2205 = vsel %vm2198, %v2197, 0
      %2207 = vmatpush.msra.mxu0 0.0
      %2208 = vmatpush.msra.mxu0 0.0
      %2209 = vmatpush.msra.mxu0 0.0
      %2210 = vmatpush.msra.mxu0 0.0
      %2211 = vmatpush.msra.mxu0 0.0
      %2212 = vmatpush.msra.mxu0 0.0
      %2213 = vmatpush.msra.mxu0 0.0
      %2214 = vmatpush.msra.mxu0 0.0
      %2215 = vmatpush.msra.mxu0 0.0
      %2216 = vmatpush.msra.mxu0 0.0
      %2217 = vmatpush.msra.mxu0 0.0
      %2218 = vmatpush.msra.mxu0 0.0
      %2219 = vmatpush.msra.mxu0 %v2122
      %2220 = vmatpush.msra.mxu0 %v2121
      %2221 = vmatpush.msra.mxu0 %v2120
      %2222 = vmatpush.msra.mxu0 %v2119
      %2223 = vmatmul.f32.gmra.mxu0 %v2199
      %v2224 = vpop.f32.mrf.mxu0
      %v2225 = vadd.f32 0.0, %v2224
      %2226 = vmatmul.f32.gmra.mxu0 %v2201
      %v2227 = vpop.f32.mrf.mxu0
      %v2228 = vadd.f32 0.0, %v2227
      %2229 = vmatmul.f32.gmra.mxu0 %v2203
      %v2230 = vpop.f32.mrf.mxu0
      %v2231 = vadd.f32 0.0, %v2230
      %2232 = vmatmul.f32.gmra.mxu0 %v2205
      %v2233 = vpop.f32.mrf.mxu0
      %v2234 = vadd.f32 0.0, %v2233
      %2235 = vdwg.mxu0
      %v2237 = vsel %vm2198, %v2167, 0
      %v2240 = vsel %vm2198, %v2168, 0
      %v2243 = vsel %vm2198, %v2169, 0
      %v2246 = vsel %vm2198, %v2170, 0
      %2248 = vmatpush.msra.mxu0 0.0
      %2249 = vmatpush.msra.mxu0 0.0
      %2250 = vmatpush.msra.mxu0 0.0
      %2251 = vmatpush.msra.mxu0 0.0
      %2252 = vmatpush.msra.mxu0 0.0
      %2253 = vmatpush.msra.mxu0 0.0
      %2254 = vmatpush.msra.mxu0 0.0
      %2255 = vmatpush.msra.mxu0 0.0
      %2256 = vmatpush.msra.mxu0 0.0
      %2257 = vmatpush.msra.mxu0 0.0
      %2258 = vmatpush.msra.mxu0 0.0
      %2259 = vmatpush.msra.mxu0 0.0
      %2260 = vmatpush.msra.mxu0 %v2118
      %2261 = vmatpush.msra.mxu0 %v2117
      %2262 = vmatpush.msra.mxu0 %v2116
      %2263 = vmatpush.msra.mxu0 %v2115
      %2264 = vmatmul.f32.gmra.mxu0 %v2237
      %v2265 = vpop.f32.mrf.mxu0
      %v2266 = vadd.f32 %v2225, %v2265
      %2267 = vmatmul.f32.gmra.mxu0 %v2240
      %v2268 = vpop.f32.mrf.mxu0
      %v2269 = vadd.f32 %v2228, %v2268
      %2270 = vmatmul.f32.gmra.mxu0 %v2243
      %v2271 = vpop.f32.mrf.mxu0
      %v2272 = vadd.f32 %v2231, %v2271
      %2273 = vmatmul.f32.gmra.mxu0 %v2246
      %v2274 = vpop.f32.mrf.mxu0
      %v2275 = vadd.f32 %v2234, %v2274
      %2276 = vdwg.mxu0
      %2277 = vst [vmem:[#allocation1] ss:$4 sm:$0xff] %v2099
      %s2278 = scalar_lea.vmem [#allocation1], 1
      %2279 = vst [vmem:[%s2278] ss:$4 sm:$0xff] %v2100
      %s2280 = scalar_lea.vmem [#allocation1], 2
      %2281 = vst [vmem:[%s2280] ss:$4 sm:$0xff] %v2101
      %s2282 = scalar_lea.vmem [#allocation1], 3
      %2283 = vst [vmem:[%s2282] ss:$4 sm:$0xff] %v2102
      %s2284 = scalar_lea.vmem [#allocation1], 32
      %2285 = vst [vmem:[%s2284] ss:$4 sm:$0xff] %v2103
      %s2286 = scalar_lea.vmem [#allocation1], 33
      %2287 = vst [vmem:[%s2286] ss:$4 sm:$0xff] %v2104
      %s2288 = scalar_lea.vmem [#allocation1], 34
      %2289 = vst [vmem:[%s2288] ss:$4 sm:$0xff] %v2105
      %s2290 = scalar_lea.vmem [#allocation1], 35
      %2291 = vst [vmem:[%s2290] ss:$4 sm:$0xff] %v2106
      %v2292 = vld.sshfl [vmem:[#allocation1] sm:$0xff pattern:$0x73625140]
      %v2293 = vld.sshfl [vmem:[#allocation1 + $0x20] sm:$0xff pattern:$0x73625140]
      %2294 = vst [vmem:[#allocation1] ss:$4 sm:$0xff] %v2107
      %2295 = vst [vmem:[%s2278] ss:$4 sm:$0xff] %v2108
      %2296 = vst [vmem:[%s2280] ss:$4 sm:$0xff] %v2109
      %2297 = vst [vmem:[%s2282] ss:$4 sm:$0xff] %v2110
      %2298 = vst [vmem:[%s2284] ss:$4 sm:$0xff] %v2111
      %2299 = vst [vmem:[%s2286] ss:$4 sm:$0xff] %v2112
      %2300 = vst [vmem:[%s2288] ss:$4 sm:$0xff] %v2113
      %2301 = vst [vmem:[%s2290] ss:$4 sm:$0xff] %v2114
      %v2302 = vld.sshfl [vmem:[#allocation1] sm:$0xff pattern:$0x73625140]
      %v2303 = vld.sshfl [vmem:[#allocation1 + $0x20] sm:$0xff pattern:$0x73625140]
      %v2304 = vrot.slane %v2292, 1
      %v2305 = vrot.slane %v2293, 1
      %v2306 = vsel %vm676, %v2304, %v2305
      %v2307 = vrot.slane %v2302, 1
      %v2308 = vsel %vm676, %v2305, %v2307
      %v2309 = vrot.slane %v2303, 1
      %v2310 = vsel %vm676, %v2307, %v2309
      %v2315 = vsel %vm676, %v2309, 0.0
      %v2316 = vsel %vm1508, %v2306, 0.0
      %v2317 = vsel %vm1509, %v2308, 0.0
      %v2318 = vsel %vm1510, %v2310, 0.0
      %v2319 = vsel %vm1511, %v2315, 0.0
      %v2321 = vsel %vm2198, %v2316, 0
      %v2324 = vsel %vm2198, %v2317, 0
      %v2327 = vsel %vm2198, %v2318, 0
      %v2330 = vsel %vm2198, %v2319, 0
      %2332 = vmatpush.msra.mxu0 0.0
      %2333 = vmatpush.msra.mxu0 0.0
      %2334 = vmatpush.msra.mxu0 0.0
      %2335 = vmatpush.msra.mxu0 0.0
      %2336 = vmatpush.msra.mxu0 0.0
      %2337 = vmatpush.msra.mxu0 0.0
      %2338 = vmatpush.msra.mxu0 0.0
      %2339 = vmatpush.msra.mxu0 0.0
      %2340 = vmatpush.msra.mxu0 0.0
      %2341 = vmatpush.msra.mxu0 0.0
      %2342 = vmatpush.msra.mxu0 0.0
      %2343 = vmatpush.msra.mxu0 0.0
      %2344 = vmatpush.msra.mxu0 %v2126
      %2345 = vmatpush.msra.mxu0 %v2125
      %2346 = vmatpush.msra.mxu0 %v2124
      %2347 = vmatpush.msra.mxu0 %v2123
      %2348 = vmatmul.f32.gmra.mxu0 %v2321
      %v2349 = vpop.f32.mrf.mxu0
      %v2350 = vadd.f32 0.0, %v2349
      %2351 = vmatmul.f32.gmra.mxu0 %v2324
      %v2352 = vpop.f32.mrf.mxu0
      %v2353 = vadd.f32 0.0, %v2352
      %2354 = vmatmul.f32.gmra.mxu0 %v2327
      %v2355 = vpop.f32.mrf.mxu0
      %v2356 = vadd.f32 0.0, %v2355
      %2357 = vmatmul.f32.gmra.mxu0 %v2330
      %v2358 = vpop.f32.mrf.mxu0
      %v2359 = vadd.f32 0.0, %v2358
      %2360 = vdwg.mxu0
      %v2361 = vadd.f32 %v2266, %v2350
      %v2362 = vadd.f32 %v2269, %v2353
      %v2363 = vadd.f32 %v2272, %v2356
      %v2364 = vadd.f32 %v2275, %v2359
      %v2366 = vperm.slane %v2127, 0
      %v2368 = vadd.f32 %v2361, %v2366
      %v2369 = vadd.f32 %v2362, %v2366
      %v2370 = vadd.f32 %v2363, %v2366
      %v2371 = vadd.f32 %v2364, %v2366
      %v2376 = vrot.slane %v2368, 1
      %v2377 = vrot.slane %v2368, 2
      %v2378 = vrot.slane %v2368, 3
      %v2379 = vrot.slane %v2368, 4
      %v2380 = vrot.slane %v2368, 5
      %v2381 = vrot.slane %v2368, 6
      %v2382 = vrot.slane %v2368, 7
      %v2383 = vrot.slane %v2369, 1
      %v2384 = vrot.slane %v2369, 2
      %v2385 = vrot.slane %v2369, 3
      %v2386 = vrot.slane %v2369, 4
      %v2387 = vrot.slane %v2369, 5
      %v2388 = vrot.slane %v2369, 6
      %v2389 = vrot.slane %v2369, 7
      %v2390 = vrot.slane %v2370, 1
      %v2391 = vrot.slane %v2370, 2
      %v2392 = vrot.slane %v2370, 3
      %v2393 = vrot.slane %v2370, 4
      %v2394 = vrot.slane %v2370, 5
      %v2395 = vrot.slane %v2370, 6
      %v2396 = vrot.slane %v2370, 7
      %v2397 = vrot.slane %v2371, 1
      %v2398 = vrot.slane %v2371, 2
      %v2399 = vrot.slane %v2371, 3
      %v2400 = vrot.slane %v2371, 4
      %v2401 = vrot.slane %v2371, 5
      %v2402 = vrot.slane %v2371, 6
      %v2403 = vrot.slane %v2371, 7
      %v2404 = vperm.slane %v2368, 0
      %v2405 = vperm.slane %v2376, 0
      %v2406 = vperm.slane %v2377, 0
      %v2407 = vperm.slane %v2378, 0
      %v2408 = vperm.slane %v2379, 0
      %v2409 = vperm.slane %v2380, 0
      %v2410 = vperm.slane %v2381, 0
      %v2411 = vperm.slane %v2382, 0
      %v2412 = vperm.slane %v2369, 0
      %v2413 = vperm.slane %v2383, 0
      %v2414 = vperm.slane %v2384, 0
      %v2415 = vperm.slane %v2385, 0
      %v2416 = vperm.slane %v2386, 0
      %v2417 = vperm.slane %v2387, 0
      %v2418 = vperm.slane %v2388, 0
      %v2419 = vperm.slane %v2389, 0
      %v2420 = vperm.slane %v2370, 0
      %v2421 = vperm.slane %v2390, 0
      %v2422 = vperm.slane %v2391, 0
      %v2423 = vperm.slane %v2392, 0
      %v2424 = vperm.slane %v2393, 0
      %v2425 = vperm.slane %v2394, 0
      %v2426 = vperm.slane %v2395, 0
      %v2427 = vperm.slane %v2396, 0
      %v2428 = vperm.slane %v2371, 0
      %v2429 = vperm.slane %v2397, 0
      %v2430 = vperm.slane %v2398, 0
      %v2431 = vperm.slane %v2399, 0
      %v2432 = vperm.slane %v2400, 0
      %v2433 = vperm.slane %v2401, 0
      %v2434 = vperm.slane %v2402, 0
      %v2435 = vperm.slane %v2403, 0
      %v2436 = vld [vmem:[%s11] sm:$0xff]
      %v2437 = vld [vmem:[%s11 + $0x8] sm:$0xff]
      %v2438 = vld [vmem:[%s11 + $0x10] sm:$0xff]
      %v2439 = vld [vmem:[%s11 + $0x18] sm:$0xff]
      %v2440 = vld [vmem:[%s11 + $0x20] sm:$0xff]
      %v2441 = vld [vmem:[%s11 + $0x28] sm:$0xff]
      %v2442 = vld [vmem:[%s11 + $0x30] sm:$0xff]
      %v2443 = vld [vmem:[%s11 + $0x38] sm:$0xff]
      %v2444 = vld [vmem:[%s11 + $0x40] sm:$0xff]
      %v2445 = vld [vmem:[%s11 + $0x48] sm:$0xff]
      %v2446 = vld [vmem:[%s11 + $0x50] sm:$0xff]
      %v2447 = vld [vmem:[%s11 + $0x58] sm:$0xff]
      %v2448 = vld [vmem:[%s11 + $0x60] sm:$0xff]
      %v2449 = vld [vmem:[%s11 + $0x68] sm:$0xff]
      %v2450 = vld [vmem:[%s11 + $0x70] sm:$0xff]
      %v2451 = vld [vmem:[%s11 + $0x78] sm:$0xff]
      %v2452 = vld [vmem:[%s11 + $0x80] sm:$0xff]
      %v2453 = vld [vmem:[%s11 + $0x88] sm:$0xff]
      %v2454 = vld [vmem:[%s11 + $0x90] sm:$0xff]
      %v2455 = vld [vmem:[%s11 + $0x98] sm:$0xff]
      %v2456 = vld [vmem:[%s11 + $0xa0] sm:$0xff]
      %v2457 = vld [vmem:[%s11 + $0xa8] sm:$0xff]
      %v2458 = vld [vmem:[%s11 + $0xb0] sm:$0xff]
      %v2459 = vld [vmem:[%s11 + $0xb8] sm:$0xff]
      %v2460 = vld [vmem:[%s12] sm:$0x1]
      %2461 = vst [vmem:[#allocation1] ss:$4 sm:$0xff] %v2404
      %s2462 = scalar_lea.vmem [#allocation1], 1
      %2463 = vst [vmem:[%s2462] ss:$4 sm:$0xff] %v2405
      %s2464 = scalar_lea.vmem [#allocation1], 2
      %2465 = vst [vmem:[%s2464] ss:$4 sm:$0xff] %v2406
      %s2466 = scalar_lea.vmem [#allocation1], 3
      %2467 = vst [vmem:[%s2466] ss:$4 sm:$0xff] %v2407
      %s2468 = scalar_lea.vmem [#allocation1], 32
      %2469 = vst [vmem:[%s2468] ss:$4 sm:$0xff] %v2408
      %s2470 = scalar_lea.vmem [#allocation1], 33
      %2471 = vst [vmem:[%s2470] ss:$4 sm:$0xff] %v2409
      %s2472 = scalar_lea.vmem [#allocation1], 34
      %2473 = vst [vmem:[%s2472] ss:$4 sm:$0xff] %v2410
      %s2474 = scalar_lea.vmem [#allocation1], 35
      %2475 = vst [vmem:[%s2474] ss:$4 sm:$0xff] %v2411
      %v2476 = vld.sshfl [vmem:[#allocation1] sm:$0xff pattern:$0x73625140]
      %v2477 = vld.sshfl [vmem:[#allocation1 + $0x20] sm:$0xff pattern:$0x73625140]
      %2478 = vst [vmem:[#allocation1] ss:$4 sm:$0xff] %v2412
      %2479 = vst [vmem:[%s2462] ss:$4 sm:$0xff] %v2413
      %2480 = vst [vmem:[%s2464] ss:$4 sm:$0xff] %v2414
      %2481 = vst [vmem:[%s2466] ss:$4 sm:$0xff] %v2415
      %2482 = vst [vmem:[%s2468] ss:$4 sm:$0xff] %v2416
      %2483 = vst [vmem:[%s2470] ss:$4 sm:$0xff] %v2417
      %2484 = vst [vmem:[%s2472] ss:$4 sm:$0xff] %v2418
      %2485 = vst [vmem:[%s2474] ss:$4 sm:$0xff] %v2419
      %v2486 = vld.sshfl [vmem:[#allocation1] sm:$0xff pattern:$0x73625140]
      %v2487 = vld.sshfl [vmem:[#allocation1 + $0x20] sm:$0xff pattern:$0x73625140]
      %2488 = vst [vmem:[#allocation1] ss:$4 sm:$0xff] %v2420
      %2489 = vst [vmem:[%s2462] ss:$4 sm:$0xff] %v2421
      %2490 = vst [vmem:[%s2464] ss:$4 sm:$0xff] %v2422
      %2491 = vst [vmem:[%s2466] ss:$4 sm:$0xff] %v2423
      %2492 = vst [vmem:[%s2468] ss:$4 sm:$0xff] %v2424
      %2493 = vst [vmem:[%s2470] ss:$4 sm:$0xff] %v2425
      %2494 = vst [vmem:[%s2472] ss:$4 sm:$0xff] %v2426
      %2495 = vst [vmem:[%s2474] ss:$4 sm:$0xff] %v2427
      %v2496 = vld.sshfl [vmem:[#allocation1] sm:$0xff pattern:$0x73625140]
      %v2497 = vld.sshfl [vmem:[#allocation1 + $0x20] sm:$0xff pattern:$0x73625140]
      %2498 = vst [vmem:[#allocation1] ss:$4 sm:$0xff] %v2428
      %2499 = vst [vmem:[%s2462] ss:$4 sm:$0xff] %v2429
      %2500 = vst [vmem:[%s2464] ss:$4 sm:$0xff] %v2430
      %2501 = vst [vmem:[%s2466] ss:$4 sm:$0xff] %v2431
      %2502 = vst [vmem:[%s2468] ss:$4 sm:$0xff] %v2432
      %2503 = vst [vmem:[%s2470] ss:$4 sm:$0xff] %v2433
      %2504 = vst [vmem:[%s2472] ss:$4 sm:$0xff] %v2434
      %2505 = vst [vmem:[%s2474] ss:$4 sm:$0xff] %v2435
      %v2506 = vld.sshfl [vmem:[#allocation1] sm:$0xff pattern:$0x73625140]
      %v2507 = vld.sshfl [vmem:[#allocation1 + $0x20] sm:$0xff pattern:$0x73625140]
      %v2508 = vrot.slane %v2476, 7
      %v2509 = vrot.slane %v2477, 7
      %v2510 = vsel %vm496, %v2508, %v2509
      %v2511 = vrot.slane %v2486, 7
      %v2512 = vsel %vm496, %v2509, %v2511
      %v2513 = vrot.slane %v2487, 7
      %v2514 = vsel %vm496, %v2511, %v2513
      %v2515 = vrot.slane %v2496, 7
      %v2516 = vsel %vm496, %v2513, %v2515
      %v2517 = vrot.slane %v2497, 7
      %v2518 = vsel %vm496, %v2515, %v2517
      %v2519 = vrot.slane %v2506, 7
      %v2520 = vsel %vm496, %v2517, %v2519
      %v2521 = vrot.slane %v2507, 7
      %v2522 = vsel %vm496, %v2519, %v2521
      %v2531 = vsel %vm496, 0.0, %v2508
      %v2532 = vsel %vm537, %v2531, 0.0
      %v2533 = vsel %vm538, %v2510, 0.0
      %v2534 = vsel %vm539, %v2512, 0.0
      %v2535 = vsel %vm540, %v2514, 0.0
      %v2536 = vsel %vm541, %v2516, 0.0
      %v2537 = vsel %vm542, %v2518, 0.0
      %v2538 = vsel %vm543, %v2520, 0.0
      %v2539 = vsel %vm544, %v2522, 0.0
      %2540 = vst [vmem:[#allocation1] ss:$4 sm:$0xff] %v2404
      %s2541 = scalar_lea.vmem [#allocation1], 1
      %2542 = vst [vmem:[%s2541] ss:$4 sm:$0xff] %v2405
      %s2543 = scalar_lea.vmem [#allocation1], 2
      %2544 = vst [vmem:[%s2543] ss:$4 sm:$0xff] %v2406
      %s2545 = scalar_lea.vmem [#allocation1], 3
      %2546 = vst [vmem:[%s2545] ss:$4 sm:$0xff] %v2407
      %s2547 = scalar_lea.vmem [#allocation1], 32
      %2548 = vst [vmem:[%s2547] ss:$4 sm:$0xff] %v2408
      %s2549 = scalar_lea.vmem [#allocation1], 33
      %2550 = vst [vmem:[%s2549] ss:$4 sm:$0xff] %v2409
      %s2551 = scalar_lea.vmem [#allocation1], 34
      %2552 = vst [vmem:[%s2551] ss:$4 sm:$0xff] %v2410
      %s2553 = scalar_lea.vmem [#allocation1], 35
      %2554 = vst [vmem:[%s2553] ss:$4 sm:$0xff] %v2411
      %v2555 = vld.sshfl [vmem:[#allocation1] sm:$0xff pattern:$0x73625140]
      %v2556 = vld.sshfl [vmem:[#allocation1 + $0x20] sm:$0xff pattern:$0x73625140]
      %2557 = vst [vmem:[#allocation1] ss:$4 sm:$0xff] %v2412
      %2558 = vst [vmem:[%s2541] ss:$4 sm:$0xff] %v2413
      %2559 = vst [vmem:[%s2543] ss:$4 sm:$0xff] %v2414
      %2560 = vst [vmem:[%s2545] ss:$4 sm:$0xff] %v2415
      %2561 = vst [vmem:[%s2547] ss:$4 sm:$0xff] %v2416
      %2562 = vst [vmem:[%s2549] ss:$4 sm:$0xff] %v2417
      %2563 = vst [vmem:[%s2551] ss:$4 sm:$0xff] %v2418
      %2564 = vst [vmem:[%s2553] ss:$4 sm:$0xff] %v2419
      %v2565 = vld.sshfl [vmem:[#allocation1] sm:$0xff pattern:$0x73625140]
      %v2566 = vld.sshfl [vmem:[#allocation1 + $0x20] sm:$0xff pattern:$0x73625140]
      %2567 = vst [vmem:[#allocation1] ss:$4 sm:$0xff] %v2420
      %2568 = vst [vmem:[%s2541] ss:$4 sm:$0xff] %v2421
      %2569 = vst [vmem:[%s2543] ss:$4 sm:$0xff] %v2422
      %2570 = vst [vmem:[%s2545] ss:$4 sm:$0xff] %v2423
      %2571 = vst [vmem:[%s2547] ss:$4 sm:$0xff] %v2424
      %2572 = vst [vmem:[%s2549] ss:$4 sm:$0xff] %v2425
      %2573 = vst [vmem:[%s2551] ss:$4 sm:$0xff] %v2426
      %2574 = vst [vmem:[%s2553] ss:$4 sm:$0xff] %v2427
      %v2575 = vld.sshfl [vmem:[#allocation1] sm:$0xff pattern:$0x73625140]
      %v2576 = vld.sshfl [vmem:[#allocation1 + $0x20] sm:$0xff pattern:$0x73625140]
      %2577 = vst [vmem:[#allocation1] ss:$4 sm:$0xff] %v2428
      %2578 = vst [vmem:[%s2541] ss:$4 sm:$0xff] %v2429
      %2579 = vst [vmem:[%s2543] ss:$4 sm:$0xff] %v2430
      %2580 = vst [vmem:[%s2545] ss:$4 sm:$0xff] %v2431
      %2581 = vst [vmem:[%s2547] ss:$4 sm:$0xff] %v2432
      %2582 = vst [vmem:[%s2549] ss:$4 sm:$0xff] %v2433
      %2583 = vst [vmem:[%s2551] ss:$4 sm:$0xff] %v2434
      %2584 = vst [vmem:[%s2553] ss:$4 sm:$0xff] %v2435
      %v2585 = vld.sshfl [vmem:[#allocation1] sm:$0xff pattern:$0x73625140]
      %v2586 = vld.sshfl [vmem:[#allocation1 + $0x20] sm:$0xff pattern:$0x73625140]
      %v2587 = vsel %vm1848, %v2555, 0
      %v2589 = vsel %vm1848, %v2556, 0
      %v2591 = vsel %vm1848, %v2565, 0
      %v2593 = vsel %vm1848, %v2566, 0
      %v2595 = vsel %vm1848, %v2575, 0
      %v2597 = vsel %vm1848, %v2576, 0
      %v2599 = vsel %vm1848, %v2585, 0
      %v2601 = vsel %vm1848, %v2586, 0
      %2603 = vmatpush.msra.mxu0 0.0
      %2604 = vmatpush.msra.mxu0 0.0
      %2605 = vmatpush.msra.mxu0 0.0
      %2606 = vmatpush.msra.mxu0 0.0
      %2607 = vmatpush.msra.mxu0 0.0
      %2608 = vmatpush.msra.mxu0 0.0
      %2609 = vmatpush.msra.mxu0 0.0
      %2610 = vmatpush.msra.mxu0 0.0
      %2611 = vmatpush.msra.mxu0 %v2451
      %2612 = vmatpush.msra.mxu0 %v2450
      %2613 = vmatpush.msra.mxu0 %v2449
      %2614 = vmatpush.msra.mxu0 %v2448
      %2615 = vmatpush.msra.mxu0 %v2447
      %2616 = vmatpush.msra.mxu0 %v2446
      %2617 = vmatpush.msra.mxu0 %v2445
      %2618 = vmatpush.msra.mxu0 %v2444
      %2619 = vmatmul.f32.gmra.mxu0 %v2587
      %v2620 = vpop.f32.mrf.mxu0
      %v2621 = vadd.f32 0.0, %v2620
      %2622 = vmatmul.f32.gmra.mxu0 %v2589
      %v2623 = vpop.f32.mrf.mxu0
      %v2624 = vadd.f32 0.0, %v2623
      %2625 = vmatmul.f32.gmra.mxu0 %v2591
      %v2626 = vpop.f32.mrf.mxu0
      %v2627 = vadd.f32 0.0, %v2626
      %2628 = vmatmul.f32.gmra.mxu0 %v2593
      %v2629 = vpop.f32.mrf.mxu0
      %v2630 = vadd.f32 0.0, %v2629
      %2631 = vmatmul.f32.gmra.mxu0 %v2595
      %v2632 = vpop.f32.mrf.mxu0
      %v2633 = vadd.f32 0.0, %v2632
      %2634 = vmatmul.f32.gmra.mxu0 %v2597
      %v2635 = vpop.f32.mrf.mxu0
      %v2636 = vadd.f32 0.0, %v2635
      %2637 = vmatmul.f32.gmra.mxu0 %v2599
      %v2638 = vpop.f32.mrf.mxu0
      %v2639 = vadd.f32 0.0, %v2638
      %2640 = vmatmul.f32.gmra.mxu0 %v2601
      %v2641 = vpop.f32.mrf.mxu0
      %v2642 = vadd.f32 0.0, %v2641
      %2643 = vdwg.mxu0
      %v2645 = vsel %vm1848, %v2532, 0
      %v2648 = vsel %vm1848, %v2533, 0
      %v2651 = vsel %vm1848, %v2534, 0
      %v2654 = vsel %vm1848, %v2535, 0
      %v2657 = vsel %vm1848, %v2536, 0
      %v2660 = vsel %vm1848, %v2537, 0
      %v2663 = vsel %vm1848, %v2538, 0
      %v2666 = vsel %vm1848, %v2539, 0
      %2668 = vmatpush.msra.mxu0 0.0
      %2669 = vmatpush.msra.mxu0 0.0
      %2670 = vmatpush.msra.mxu0 0.0
      %2671 = vmatpush.msra.mxu0 0.0
      %2672 = vmatpush.msra.mxu0 0.0
      %2673 = vmatpush.msra.mxu0 0.0
      %2674 = vmatpush.msra.mxu0 0.0
      %2675 = vmatpush.msra.mxu0 0.0
      %2676 = vmatpush.msra.mxu0 %v2443
      %2677 = vmatpush.msra.mxu0 %v2442
      %2678 = vmatpush.msra.mxu0 %v2441
      %2679 = vmatpush.msra.mxu0 %v2440
      %2680 = vmatpush.msra.mxu0 %v2439
      %2681 = vmatpush.msra.mxu0 %v2438
      %2682 = vmatpush.msra.mxu0 %v2437
      %2683 = vmatpush.msra.mxu0 %v2436
      %2684 = vmatmul.f32.gmra.mxu0 %v2645
      %v2685 = vpop.f32.mrf.mxu0
      %v2686 = vadd.f32 %v2621, %v2685
      %2687 = vmatmul.f32.gmra.mxu0 %v2648
      %v2688 = vpop.f32.mrf.mxu0
      %v2689 = vadd.f32 %v2624, %v2688
      %2690 = vmatmul.f32.gmra.mxu0 %v2651
      %v2691 = vpop.f32.mrf.mxu0
      %v2692 = vadd.f32 %v2627, %v2691
      %2693 = vmatmul.f32.gmra.mxu0 %v2654
      %v2694 = vpop.f32.mrf.mxu0
      %v2695 = vadd.f32 %v2630, %v2694
      %2696 = vmatmul.f32.gmra.mxu0 %v2657
      %v2697 = vpop.f32.mrf.mxu0
      %v2698 = vadd.f32 %v2633, %v2697
      %2699 = vmatmul.f32.gmra.mxu0 %v2660
      %v2700 = vpop.f32.mrf.mxu0
      %v2701 = vadd.f32 %v2636, %v2700
      %2702 = vmatmul.f32.gmra.mxu0 %v2663
      %v2703 = vpop.f32.mrf.mxu0
      %v2704 = vadd.f32 %v2639, %v2703
      %2705 = vmatmul.f32.gmra.mxu0 %v2666
      %v2706 = vpop.f32.mrf.mxu0
      %v2707 = vadd.f32 %v2642, %v2706
      %2708 = vdwg.mxu0
      %2709 = vst [vmem:[#allocation1] ss:$4 sm:$0xff] %v2404
      %s2710 = scalar_lea.vmem [#allocation1], 1
      %2711 = vst [vmem:[%s2710] ss:$4 sm:$0xff] %v2405
      %s2712 = scalar_lea.vmem [#allocation1], 2
      %2713 = vst [vmem:[%s2712] ss:$4 sm:$0xff] %v2406
      %s2714 = scalar_lea.vmem [#allocation1], 3
      %2715 = vst [vmem:[%s2714] ss:$4 sm:$0xff] %v2407
      %s2716 = scalar_lea.vmem [#allocation1], 32
      %2717 = vst [vmem:[%s2716] ss:$4 sm:$0xff] %v2408
      %s2718 = scalar_lea.vmem [#allocation1], 33
      %2719 = vst [vmem:[%s2718] ss:$4 sm:$0xff] %v2409
      %s2720 = scalar_lea.vmem [#allocation1], 34
      %2721 = vst [vmem:[%s2720] ss:$4 sm:$0xff] %v2410
      %s2722 = scalar_lea.vmem [#allocation1], 35
      %2723 = vst [vmem:[%s2722] ss:$4 sm:$0xff] %v2411
      %v2724 = vld.sshfl [vmem:[#allocation1] sm:$0xff pattern:$0x73625140]
      %v2725 = vld.sshfl [vmem:[#allocation1 + $0x20] sm:$0xff pattern:$0x73625140]
      %2726 = vst [vmem:[#allocation1] ss:$4 sm:$0xff] %v2412
      %2727 = vst [vmem:[%s2710] ss:$4 sm:$0xff] %v2413
      %2728 = vst [vmem:[%s2712] ss:$4 sm:$0xff] %v2414
      %2729 = vst [vmem:[%s2714] ss:$4 sm:$0xff] %v2415
      %2730 = vst [vmem:[%s2716] ss:$4 sm:$0xff] %v2416
      %2731 = vst [vmem:[%s2718] ss:$4 sm:$0xff] %v2417
      %2732 = vst [vmem:[%s2720] ss:$4 sm:$0xff] %v2418
      %2733 = vst [vmem:[%s2722] ss:$4 sm:$0xff] %v2419
      %v2734 = vld.sshfl [vmem:[#allocation1] sm:$0xff pattern:$0x73625140]
      %v2735 = vld.sshfl [vmem:[#allocation1 + $0x20] sm:$0xff pattern:$0x73625140]
      %2736 = vst [vmem:[#allocation1] ss:$4 sm:$0xff] %v2420
      %2737 = vst [vmem:[%s2710] ss:$4 sm:$0xff] %v2421
      %2738 = vst [vmem:[%s2712] ss:$4 sm:$0xff] %v2422
      %2739 = vst [vmem:[%s2714] ss:$4 sm:$0xff] %v2423
      %2740 = vst [vmem:[%s2716] ss:$4 sm:$0xff] %v2424
      %2741 = vst [vmem:[%s2718] ss:$4 sm:$0xff] %v2425
      %2742 = vst [vmem:[%s2720] ss:$4 sm:$0xff] %v2426
      %2743 = vst [vmem:[%s2722] ss:$4 sm:$0xff] %v2427
      %v2744 = vld.sshfl [vmem:[#allocation1] sm:$0xff pattern:$0x73625140]
      %v2745 = vld.sshfl [vmem:[#allocation1 + $0x20] sm:$0xff pattern:$0x73625140]
      %2746 = vst [vmem:[#allocation1] ss:$4 sm:$0xff] %v2428
      %2747 = vst [vmem:[%s2710] ss:$4 sm:$0xff] %v2429
      %2748 = vst [vmem:[%s2712] ss:$4 sm:$0xff] %v2430
      %2749 = vst [vmem:[%s2714] ss:$4 sm:$0xff] %v2431
      %2750 = vst [vmem:[%s2716] ss:$4 sm:$0xff] %v2432
      %2751 = vst [vmem:[%s2718] ss:$4 sm:$0xff] %v2433
      %2752 = vst [vmem:[%s2720] ss:$4 sm:$0xff] %v2434
      %2753 = vst [vmem:[%s2722] ss:$4 sm:$0xff] %v2435
      %v2754 = vld.sshfl [vmem:[#allocation1] sm:$0xff pattern:$0x73625140]
      %v2755 = vld.sshfl [vmem:[#allocation1 + $0x20] sm:$0xff pattern:$0x73625140]
      %v2756 = vrot.slane %v2724, 1
      %v2757 = vrot.slane %v2725, 1
      %v2758 = vsel %vm676, %v2756, %v2757
      %v2759 = vrot.slane %v2734, 1
      %v2760 = vsel %vm676, %v2757, %v2759
      %v2761 = vrot.slane %v2735, 1
      %v2762 = vsel %vm676, %v2759, %v2761
      %v2763 = vrot.slane %v2744, 1
      %v2764 = vsel %vm676, %v2761, %v2763
      %v2765 = vrot.slane %v2745, 1
      %v2766 = vsel %vm676, %v2763, %v2765
      %v2767 = vrot.slane %v2754, 1
      %v2768 = vsel %vm676, %v2765, %v2767
      %v2769 = vrot.slane %v2755, 1
      %v2770 = vsel %vm676, %v2767, %v2769
      %v2779 = vsel %vm676, %v2769, 0.0
      %v2780 = vsel %vm717, %v2758, 0.0
      %v2781 = vsel %vm718, %v2760, 0.0
      %v2782 = vsel %vm719, %v2762, 0.0
      %v2783 = vsel %vm720, %v2764, 0.0
      %v2784 = vsel %vm721, %v2766, 0.0
      %v2785 = vsel %vm722, %v2768, 0.0
      %v2786 = vsel %vm723, %v2770, 0.0
      %v2787 = vsel %vm724, %v2779, 0.0
      %v2789 = vsel %vm1848, %v2780, 0
      %v2792 = vsel %vm1848, %v2781, 0
      %v2795 = vsel %vm1848, %v2782, 0
      %v2798 = vsel %vm1848, %v2783, 0
      %v2801 = vsel %vm1848, %v2784, 0
      %v2804 = vsel %vm1848, %v2785, 0
      %v2807 = vsel %vm1848, %v2786, 0
      %v2810 = vsel %vm1848, %v2787, 0
      %2812 = vmatpush.msra.mxu0 0.0
      %2813 = vmatpush.msra.mxu0 0.0
      %2814 = vmatpush.msra.mxu0 0.0
      %2815 = vmatpush.msra.mxu0 0.0
      %2816 = vmatpush.msra.mxu0 0.0
      %2817 = vmatpush.msra.mxu0 0.0
      %2818 = vmatpush.msra.mxu0 0.0
      %2819 = vmatpush.msra.mxu0 0.0
      %2820 = vmatpush.msra.mxu0 %v2459
      %2821 = vmatpush.msra.mxu0 %v2458
      %2822 = vmatpush.msra.mxu0 %v2457
      %2823 = vmatpush.msra.mxu0 %v2456
      %2824 = vmatpush.msra.mxu0 %v2455
      %2825 = vmatpush.msra.mxu0 %v2454
      %2826 = vmatpush.msra.mxu0 %v2453
      %2827 = vmatpush.msra.mxu0 %v2452
      %2828 = vmatmul.f32.gmra.mxu0 %v2789
      %v2829 = vpop.f32.mrf.mxu0
      %v2830 = vadd.f32 0.0, %v2829
      %2831 = vmatmul.f32.gmra.mxu0 %v2792
      %v2832 = vpop.f32.mrf.mxu0
      %v2833 = vadd.f32 0.0, %v2832
      %2834 = vmatmul.f32.gmra.mxu0 %v2795
      %v2835 = vpop.f32.mrf.mxu0
      %v2836 = vadd.f32 0.0, %v2835
      %2837 = vmatmul.f32.gmra.mxu0 %v2798
      %v2838 = vpop.f32.mrf.mxu0
      %v2839 = vadd.f32 0.0, %v2838
      %2840 = vmatmul.f32.gmra.mxu0 %v2801
      %v2841 = vpop.f32.mrf.mxu0
      %v2842 = vadd.f32 0.0, %v2841
      %2843 = vmatmul.f32.gmra.mxu0 %v2804
      %v2844 = vpop.f32.mrf.mxu0
      %v2845 = vadd.f32 0.0, %v2844
      %2846 = vmatmul.f32.gmra.mxu0 %v2807
      %v2847 = vpop.f32.mrf.mxu0
      %v2848 = vadd.f32 0.0, %v2847
      %2849 = vmatmul.f32.gmra.mxu0 %v2810
      %v2850 = vpop.f32.mrf.mxu0
      %v2851 = vadd.f32 0.0, %v2850
      %2852 = vdwg.mxu0
      %v2853 = vadd.f32 %v2686, %v2830
      %v2854 = vadd.f32 %v2689, %v2833
      %v2855 = vadd.f32 %v2692, %v2836
      %v2856 = vadd.f32 %v2695, %v2839
      %v2857 = vadd.f32 %v2698, %v2842
      %v2858 = vadd.f32 %v2701, %v2845
      %v2859 = vadd.f32 %v2704, %v2848
      %v2860 = vadd.f32 %v2707, %v2851
      %v2862 = vperm.slane %v2460, 0
      %v2864 = vadd.f32 %v2853, %v2862
      %v2865 = vadd.f32 %v2854, %v2862
      %v2866 = vadd.f32 %v2855, %v2862
      %v2867 = vadd.f32 %v2856, %v2862
      %v2868 = vadd.f32 %v2857, %v2862
      %v2869 = vadd.f32 %v2858, %v2862
      %v2870 = vadd.f32 %v2859, %v2862
      %v2871 = vadd.f32 %v2860, %v2862
      %2872 = vst.msk [vmem:[%s442] sm:$0xff] %vm553, %v2864
      %2873 = vst.msk [vmem:[%s442 + $0x8] sm:$0xff] %vm553, %v2865
      %2874 = vst.msk [vmem:[%s442 + $0x10] sm:$0xff] %vm553, %v2866
      %2875 = vst.msk [vmem:[%s442 + $0x18] sm:$0xff] %vm553, %v2867
      %2876 = vst.msk [vmem:[%s442 + $0x20] sm:$0xff] %vm553, %v2868
      %2877 = vst.msk [vmem:[%s442 + $0x28] sm:$0xff] %vm553, %v2869
      %2878 = vst.msk [vmem:[%s442 + $0x30] sm:$0xff] %vm553, %v2870
      %2879 = vst.msk [vmem:[%s442 + $0x38] sm:$0xff] %vm553, %v2871
      %s2880 = smul.u32 8, %s24
      %p2881 = scmp.lt.s32.totalorder %s2880, 15
      %s2882 = scalar_select %p2881, %s2880, 15
      %s2883 = smul.addr %s2882, 8
      %s2884 = scalar_lea.vmem %s13, %s2883
      // Predicated region
      $region73: #{_lambda_.1} parent=71 // pred_check
        %p2885 = pneg %p320
      $region74: #{_lambda_.1} parent=71 // pred_check_branch
        %2887 = sbr.rel (%p2885) target = $region76
      $region75: #{_lambda_.1} parent=71 // pred_region
        %s2888 = smul.u32 8, %s24
      $region76: #{_lambda_.1} parent=71 // pred_fallthru
        _
    $region72: #{_lambda_.1} parent=5 // pred_fallthru
      _
    %p2889 = scmp.le.s32.totalorder 2, %s19
    // Predicated region
    $region77: #{_lambda_.1} parent=5 // pred_check
      %p2890 = pneg %p2889
    $region78: #{_lambda_.1} parent=5 // pred_check_branch
      %2892 = sbr.rel (%p2890) target = $region80
    $region79: #{_lambda_.1} parent=5 // pred_region
      %s2893 = ssub.s32 %s19, 2
      // Predicated region
      $region81: #{_lambda_.1} parent=79 // pred_check
        %p2894 = pneg %p326
      $region82: #{_lambda_.1} parent=79 // pred_check_branch
        %2896 = sbr.rel (%p2894) target = $region84
      $region83: #{_lambda_.1} parent=79 // pred_region
        %s2897 = smul.u32 8, %s25
        %p2898 = scmp.lt.s32.totalorder %s2897, 15
        %s2899 = scalar_select %p2898, %s2897, 15
        %s2900 = smul.addr %s2899, 8
        %s2901 = scalar_lea.vmem %s13, %s2900
      $region84: #{_lambda_.1} parent=79 // pred_fallthru
        _
    $region80: #{_lambda_.1} parent=5 // pred_fallthru
      _
  $region6: #{_lambda_.1} parent=0 // loop_footer
    %s23 = sadd.s32 1, %s19
  $region7: #{_lambda_.1} parent=0 // loop_footer_branch
    %18 = sbr.rel target = $region3
  $region8: #{_lambda_.1} parent=0 // loop_exit
    _

</llo_original>
